<compile_context>
chip_gen: v7x
topology: tpu7x:2x2x1
jax: 0.10.0
libtpu: 0.0.40
codegen_flags: <defaults>
</compile_context>

<pallas_src>
import functools
import math

import jax
import jax.numpy as jnp
from jax import lax
from jax.experimental import pallas as pl
from jax.experimental.pallas import tpu as pltpu

_VMEM = functools.partial(pl.BlockSpec, memory_space=pltpu.MemorySpace.VMEM)
_EPS = 1e-5
_BIG = 1e30
_PAD_LANES = 128  # lane-dense output slab width


def _vmem_limit_bytes():
    """Generation-aware scoped-VMEM limit with headroom for compiler scratch."""
    cap = 0
    try:
        info = pltpu.get_tpu_info()
        cap = int(getattr(info, "vmem_capacity_bytes", 0) or 0)
    except Exception:
        cap = 0
    if cap <= 0:
        cap = 64 * 1024 * 1024  # conservative default (v7x per-core VMEM)
    return min(3 * cap // 4, 100 * 1024 * 1024)


def _elu(y):
    # F.elu, alpha=1 (exp argument clamped so the dead branch cannot overflow)
    return jnp.where(y > 0.0, y, jnp.exp(jnp.minimum(y, 0.0)) - 1.0)


def _mm(a, b):
    return jnp.dot(a, b, preferred_element_type=jnp.float32)


def _mm_bf16(a, b):
    # FLOP-heavy matmuls ride the MXU in bf16 with f32 accumulation.
    return jnp.dot(a.astype(jnp.bfloat16), b.astype(jnp.bfloat16),
                   preferred_element_type=jnp.float32)


def _batchnorm(x, gamma, beta, ones_row, inv_n):
    # training-mode BatchNorm1d (biased variance); centered two-pass moments via
    # ones-row MXU matmuls, all f32 (cancellation-safe form kept on purpose).
    mu = _mm(ones_row, x) * inv_n
    xc = x - mu
    var = _mm(ones_row, xc * xc) * inv_n
    return xc * lax.rsqrt(var + jnp.float32(_EPS)) * gamma + beta


def _gravnet(x, bid_c, bid_r, wsh, bsh, wo, bo, sdim, k):
    """GravNetConv: k-NN in learned space, exp(-10*d2) edge weights, mean+max aggregation."""
    n, d1 = x.shape
    # stacked [s | h] projection: one matmul, f32 (s feeds d2 / neighbour selection)
    sh = _mm(x, wsh) + bsh
    s = sh[:, :sdim]
    h = sh[:, sdim:]
    p = h.shape[1]
    h_b = h.astype(jnp.bfloat16)

    # pairwise squared distances (f32), same-graph mask via int batch-id broadcast compare
    tdims = (((1,), (1,)), ((), ()))
    ss = s * s
    r_col = jnp.sum(ss, axis=1, keepdims=True)                                      # (N,1)
    r_row = lax.dot_general(jnp.ones((1, sdim), jnp.float32), ss, tdims,
                            preferred_element_type=jnp.float32)                      # (1,N)
    gram = lax.dot_general(s, s, tdims, preferred_element_type=jnp.float32)          # (N,N)
    d2 = jnp.maximum(r_col + r_row - 2.0 * gram, 0.0)
    same = bid_c == bid_r                                                            # bool
    dwork = jnp.where(same, d2, jnp.float32(_BIG))

    # Pack (distance, column) into one sortable f32 key: shift distances by +1.0 so the
    # bit pattern is never denormal, zero the low `nbits` mantissa bits and OR the column
    # index in.  Positive floats order like their int bits, so ONE lane-min per neighbour
    # recovers both the (slightly truncated) distance and its column; ties break toward
    # the lower column index.
    nbits = max((n - 1).bit_length(), 1)
    idx_mask = jnp.int32((1 << nbits) - 1)
    hi_mask = jnp.int32(~((1 << nbits) - 1))
    cols = lax.broadcasted_iota(jnp.int32, (n, n), 1)
    key = pltpu.bitcast(
        lax.bitwise_or(lax.bitwise_and(pltpu.bitcast(dwork + 1.0, jnp.int32), hi_mask),
                       cols),
        jnp.float32)

    wsum = jnp.zeros((n, n), jnp.float32)
    max_msg = jnp.full((n, p), -_BIG, jnp.float32)
    for _ in range(k):
        kmin = jnp.min(key, axis=1, keepdims=True)                                   # (N,1)
        kbits = pltpu.bitcast(kmin, jnp.int32)
        idx = lax.bitwise_and(kbits, idx_mask)                                       # (N,1)
        d2_sel = pltpu.bitcast(lax.bitwise_and(kbits, hi_mask), jnp.float32) - 1.0
        w_t = jnp.exp(-10.0 * d2_sel)                                                # (N,1)
        pick = cols == idx                                                           # one-hot
        w_row = jnp.where(pick, w_t, 0.0)                                            # (N,N)
        wsum = wsum + w_row
        max_msg = jnp.maximum(
            max_msg, jnp.dot(w_row.astype(jnp.bfloat16), h_b,
                             preferred_element_type=jnp.float32))
        key = jnp.where(pick, jnp.float32(3.0e38), key)                              # exhaust
    mean_msg = jnp.dot(wsum.astype(jnp.bfloat16), h_b,
                       preferred_element_type=jnp.float32) * jnp.float32(1.0 / k)

    # stacked output projection [wo1 ; wo2_mean ; wo2_max]
    return (_mm_bf16(x, wo[:d1]) + _mm_bf16(mean_msg, wo[d1:d1 + p])
            + _mm_bf16(max_msg, wo[d1 + p:]) + bo)


def _cdcnet_kernel(*refs, nblocks, k, sdim, dim2, out_dim):
    # inputs: x, bid_col, bid_row, inv_cnt, onehot, onehot_t, bn0_g, bn0_b,
    #         per block [w0,b0, w1,b1, g2,b2, w3,b3, w_sh,b_sh, w_out,b_out, g5,b5, w6,b6],
    #         dense_w, dense_b, heads_w(pad), heads_b(pad)
    # output: (N, 128) padded prediction slab
    (x_ref, bidc_ref, bidr_ref, invc_ref, oh_ref, oht_ref, g0_ref, be0_ref) = refs[:8]
    per = 16
    blk_refs = refs[8:8 + nblocks * per]
    wd_ref, bd_ref, whd_ref, bhd_ref = refs[8 + nblocks * per:12 + nblocks * per]
    out_ref = refs[-1]

    n = x_ref.shape[0]
    ones_row = jnp.ones((1, n), jnp.float32)
    inv_n = jnp.float32(1.0 / n)
    bid_c = bidc_ref[...]
    bid_r = bidr_ref[...]
    inv_cnt = invc_ref[...]
    oh = oh_ref[...]
    oht = oht_ref[...]

    x = _batchnorm(x_ref[...], g0_ref[...], be0_ref[...], ones_row, inv_n)

    feats = []
    for b in range(nblocks):
        (w0, b0, w1, b1, g2, be2, w3, b3, wsh, bsh, wo, bo, g5, be5, w6, b6) = (
            r[...] for r in blk_refs[b * per:(b + 1) * per])
        # global_mean_pool + concat fused into lin0 (weight rows split: x part / pooled part)
        pooled = _mm(oh, _mm(oht, x)) * inv_cnt
        d = x.shape[1]
        x = _elu(_mm_bf16(x, w0[:d]) + _mm_bf16(pooled, w0[d:]) + b0)
        x = _elu(_mm_bf16(x, w1) + b1)
        x = _batchnorm(x, g2, be2, ones_row, inv_n)
        x = _elu(_mm_bf16(x, w3) + b3)
        x = _gravnet(x, bid_c, bid_r, wsh, bsh, wo, bo, sdim, k)
        x = _batchnorm(x, g5, be5, ones_row, inv_n)
        feats.append(_elu(_mm_bf16(x, w6) + b6))

    # dense_cat over concat(feats) without the concat copy
    wd = wd_ref[...]
    y = bd_ref[...]
    for i in range(nblocks):
        y = y + _mm_bf16(feats[i], wd[i * dim2:(i + 1) * dim2])
    y = _elu(y)

    # fused [beta | ccoords | p | vertex | charge] heads, lane-dense (128-wide) output,
    # sigmoid on the beta (col 0) and charge (col out_dim-1) columns
    z = _mm_bf16(y, whd_ref[...]) + bhd_ref[...]
    col = lax.broadcasted_iota(jnp.int32, z.shape, 1)
    sig = 1.0 / (1.0 + jnp.exp(-z))
    out_ref[...] = jnp.where((col == 0) | (col == out_dim - 1), sig, z)


# ----------------------------------------------------------------------------- params / forward

def _init_linear(key, fan_in, fan_out, bias=True):
    kw, kb = jax.random.split(key)
    bound = 1.0 / math.sqrt(fan_in)
    w = jax.random.uniform(kw, (fan_in, fan_out), jnp.float32, -bound, bound)
    b = jax.random.uniform(kb, (1, fan_out), jnp.float32, -bound, bound) if bias else None
    return w, b


def _init_bn(dim):
    return jnp.ones((1, dim), jnp.float32), jnp.zeros((1, dim), jnp.float32)


def init_cdcnet_params(key, input_dim, dim1, dim2, nblocks, coord_dim, space_dims):
    keys = iter(jax.random.split(key, 16 * nblocks + 16))
    params = {"bn0": _init_bn(input_dim), "blocks": []}
    for i in range(nblocks):
        in0 = 2 * input_dim if i == 0 else 4 * dim1
        w0, b0 = _init_linear(next(keys), in0, dim1)
        w1, b1 = _init_linear(next(keys), dim1, dim1)
        g2, be2 = _init_bn(dim1)
        w3, b3 = _init_linear(next(keys), dim1, dim1)
        ws, bs = _init_linear(next(keys), dim1, space_dims)
        wh, bh = _init_linear(next(keys), dim1, dim1)            # propagate_dimensions = dim1
        wo1, _ = _init_linear(next(keys), dim1, 2 * dim1, bias=False)
        wo2, bo2 = _init_linear(next(keys), 2 * dim1, 2 * dim1)
        g5, be5 = _init_bn(2 * dim1)
        w6, b6 = _init_linear(next(keys), 2 * dim1, dim2)
        params["blocks"].append({
            "w0": w0, "b0": b0, "w1": w1, "b1": b1, "g2": g2, "b2": be2,
            "w3": w3, "b3": b3,
            "w_sh": jnp.concatenate([ws, wh], axis=1),           # stacked [s | h] projection
            "b_sh": jnp.concatenate([bs, bh], axis=1),
            "w_out": jnp.concatenate([wo1, wo2], axis=0),        # stacked [wo1; wo2_mean; wo2_max]
            "b_out": bo2, "g5": g5, "b5": be5, "w6": w6, "b6": b6})
    wd, bd = _init_linear(next(keys), dim2 * nblocks, dim1)
    params["dense_w"], params["dense_b"] = wd, bd
    heads = [_init_linear(next(keys), dim1, o) for o in (1, coord_dim, 3, 3, 1)]
    hw = jnp.concatenate([w for w, _ in heads], axis=1)
    hb = jnp.concatenate([b for _, b in heads], axis=1)
    out_dim = hw.shape[1]
    # lane-dense (128-wide) head weights: padded columns are zero, sliced off in the wrapper
    params["heads_w"] = jnp.pad(hw, ((0, 0), (0, _PAD_LANES - out_dim)))
    params["heads_b"] = jnp.pad(hb, ((0, 0), (0, _PAD_LANES - out_dim)))
    return params, out_dim


def cdcnet_forward(params, x, batch_aux, *, k, out_dim):
    bidc, bidr, invc, oh, oht = batch_aux
    n, din = x.shape
    blocks = params["blocks"]
    nblocks = len(blocks)
    dim1 = blocks[0]["w1"].shape[0]
    dim2 = blocks[0]["w6"].shape[1]
    sdim = blocks[0]["w_sh"].shape[1] - dim1     # stacked [s | h]; propagate dims == dim1

    args = [x, bidc, bidr, invc, oh, oht, params["bn0"][0], params["bn0"][1]]
    for blk in blocks:
        args += [blk[name] for name in ("w0", "b0", "w1", "b1", "g2", "b2", "w3", "b3",
                                        "w_sh", "b_sh", "w_out", "b_out", "g5", "b5",
                                        "w6", "b6")]
    args += [params["dense_w"], params["dense_b"], params["heads_w"], params["heads_b"]]

    # rough advisory cost hint for the XLA scheduler
    flops = 0
    for i in range(nblocks):
        in0 = 2 * din if i == 0 else 4 * dim1
        flops += 2 * n * (in0 * dim1 + 2 * dim1 * dim1 + dim1 * (sdim + dim1)
                          + 3 * dim1 * 2 * dim1 + 2 * dim1 * dim2)
        flops += 2 * n * n * sdim + 2 * (k + 1) * n * n * dim1
    flops += 2 * n * (nblocks * dim2 * dim1 + dim1 * _PAD_LANES)
    trans = n * nblocks * (4 * dim1 + dim2 + k) + 2 * n * _PAD_LANES
    bytes_acc = 4 * (sum(int(a.size) for a in args) + n * _PAD_LANES)

    out = pl.pallas_call(
        functools.partial(_cdcnet_kernel, nblocks=nblocks, k=k, sdim=sdim,
                          dim2=dim2, out_dim=out_dim),
        out_shape=jax.ShapeDtypeStruct((n, _PAD_LANES), jnp.float32),
        in_specs=[_VMEM()] * len(args),
        out_specs=_VMEM(),
        compiler_params=pltpu.CompilerParams(vmem_limit_bytes=_vmem_limit_bytes()),
        cost_estimate=pl.CostEstimate(flops=int(flops), transcendentals=int(trans),
                                      bytes_accessed=int(bytes_acc)),
    )(*args)
    return out[:, :out_dim]


# ----------------------------------------------------------------------------- main

if __name__ == "__main__":
    # small, module-consistent config
    input_dim, k, dim1, dim2, nblocks = 8, 4, 32, 16, 2
    coord_dim, space_dims = 2, 4
    N, B = 32, 2                                   # 2 graphs x 16 nodes (>= k each)

    key = jax.random.PRNGKey(0)
    kx, kp = jax.random.split(key)
    x = jax.random.normal(kx, (N, input_dim), jnp.float32)
    batch = jnp.repeat(jnp.arange(B, dtype=jnp.int32), N // B)

    # precomputed batch helpers (glue): one-hot assignment, per-node 1/count, batch-id row/col
    onehot = (batch[:, None] == jnp.arange(B, dtype=jnp.int32)[None, :]).astype(jnp.float32)
    onehot_t = jnp.transpose(onehot)
    counts = jnp.sum(onehot, axis=0)
    inv_cnt = (1.0 / counts)[batch][:, None]                   # (N, 1) f32
    bid_col = batch[:, None]                                   # (N, 1) int32
    bid_row = batch[None, :]                                   # (1, N) int32
    batch_aux = (bid_col, bid_row, inv_cnt, onehot, onehot_t)

    params, out_dim = init_cdcnet_params(kp, input_dim, dim1, dim2, nblocks,
                                         coord_dim, space_dims)

    fwd = jax.jit(functools.partial(cdcnet_forward, k=k, out_dim=out_dim))
    preds = jax.block_until_ready(fwd(params, x, batch_aux))

    assert preds.shape == (N, 1 + coord_dim + 3 + 3 + 1)
    assert bool(jnp.all(jnp.isfinite(preds)))
    # sigmoid-bounded columns (beta, charge)
    assert bool(jnp.all((preds[:, 0] > 0) & (preds[:, 0] < 1)))
    assert bool(jnp.all((preds[:, -1] > 0) & (preds[:, -1] < 1)))
    print("KERNEL_OK")
</pallas_src>

<mosaic_0001>
module attributes {stable_mosaic.version = 11 : i64} {
  func.func @_cdcnet_kernel(%arg0: memref<32x8xf32, #tpu.memory_space<vmem>>, %arg1: memref<32x1xi32, #tpu.memory_space<vmem>>, %arg2: memref<1x32xi32, #tpu.memory_space<vmem>>, %arg3: memref<32x1xf32, #tpu.memory_space<vmem>>, %arg4: memref<32x2xf32, #tpu.memory_space<vmem>>, %arg5: memref<2x32xf32, #tpu.memory_space<vmem>>, %arg6: memref<1x8xf32, #tpu.memory_space<vmem>>, %arg7: memref<1x8xf32, #tpu.memory_space<vmem>>, %arg8: memref<16x32xf32, #tpu.memory_space<vmem>>, %arg9: memref<1x32xf32, #tpu.memory_space<vmem>>, %arg10: memref<32x32xf32, #tpu.memory_space<vmem>>, %arg11: memref<1x32xf32, #tpu.memory_space<vmem>>, %arg12: memref<1x32xf32, #tpu.memory_space<vmem>>, %arg13: memref<1x32xf32, #tpu.memory_space<vmem>>, %arg14: memref<32x32xf32, #tpu.memory_space<vmem>>, %arg15: memref<1x32xf32, #tpu.memory_space<vmem>>, %arg16: memref<32x36xf32, #tpu.memory_space<vmem>>, %arg17: memref<1x36xf32, #tpu.memory_space<vmem>>, %arg18: memref<96x64xf32, #tpu.memory_space<vmem>>, %arg19: memref<1x64xf32, #tpu.memory_space<vmem>>, %arg20: memref<1x64xf32, #tpu.memory_space<vmem>>, %arg21: memref<1x64xf32, #tpu.memory_space<vmem>>, %arg22: memref<64x16xf32, #tpu.memory_space<vmem>>, %arg23: memref<1x16xf32, #tpu.memory_space<vmem>>, %arg24: memref<128x32xf32, #tpu.memory_space<vmem>>, %arg25: memref<1x32xf32, #tpu.memory_space<vmem>>, %arg26: memref<32x32xf32, #tpu.memory_space<vmem>>, %arg27: memref<1x32xf32, #tpu.memory_space<vmem>>, %arg28: memref<1x32xf32, #tpu.memory_space<vmem>>, %arg29: memref<1x32xf32, #tpu.memory_space<vmem>>, %arg30: memref<32x32xf32, #tpu.memory_space<vmem>>, %arg31: memref<1x32xf32, #tpu.memory_space<vmem>>, %arg32: memref<32x36xf32, #tpu.memory_space<vmem>>, %arg33: memref<1x36xf32, #tpu.memory_space<vmem>>, %arg34: memref<96x64xf32, #tpu.memory_space<vmem>>, %arg35: memref<1x64xf32, #tpu.memory_space<vmem>>, %arg36: memref<1x64xf32, #tpu.memory_space<vmem>>, %arg37: memref<1x64xf32, #tpu.memory_space<vmem>>, %arg38: memref<64x16xf32, #tpu.memory_space<vmem>>, %arg39: memref<1x16xf32, #tpu.memory_space<vmem>>, %arg40: memref<32x32xf32, #tpu.memory_space<vmem>>, %arg41: memref<1x32xf32, #tpu.memory_space<vmem>>, %arg42: memref<32x128xf32, #tpu.memory_space<vmem>>, %arg43: memref<1x128xf32, #tpu.memory_space<vmem>>, %arg44: memref<32x128xf32, #tpu.memory_space<vmem>>) attributes {dimension_semantics = [], scalar_prefetch = 0 : i64, scratch_operands = 0 : i64, tpu.core_type = #tpu.core_type<tc>} {
    %cst = arith.constant 1.000000e+00 : f32
    %0 = vector.broadcast %cst : f32 to vector<1x32xf32>
    %c0 = arith.constant 0 : index
    %c0_0 = arith.constant 0 : index
    %1 = vector.load %arg1[%c0, %c0_0] : memref<32x1xi32, #tpu.memory_space<vmem>>, vector<32x1xi32>
    %c0_1 = arith.constant 0 : index
    %c0_2 = arith.constant 0 : index
    %2 = vector.load %arg2[%c0_1, %c0_2] : memref<1x32xi32, #tpu.memory_space<vmem>>, vector<1x32xi32>
    %c0_3 = arith.constant 0 : index
    %c0_4 = arith.constant 0 : index
    %3 = vector.load %arg3[%c0_3, %c0_4] : memref<32x1xf32, #tpu.memory_space<vmem>>, vector<32x1xf32>
    %c0_5 = arith.constant 0 : index
    %c0_6 = arith.constant 0 : index
    %4 = vector.load %arg4[%c0_5, %c0_6] : memref<32x2xf32, #tpu.memory_space<vmem>>, vector<32x2xf32>
    %c0_7 = arith.constant 0 : index
    %c0_8 = arith.constant 0 : index
    %5 = vector.load %arg5[%c0_7, %c0_8] : memref<2x32xf32, #tpu.memory_space<vmem>>, vector<2x32xf32>
    %c0_9 = arith.constant 0 : index
    %c0_10 = arith.constant 0 : index
    %6 = vector.load %arg0[%c0_9, %c0_10] : memref<32x8xf32, #tpu.memory_space<vmem>>, vector<32x8xf32>
    %c0_11 = arith.constant 0 : index
    %c0_12 = arith.constant 0 : index
    %7 = vector.load %arg6[%c0_11, %c0_12] : memref<1x8xf32, #tpu.memory_space<vmem>>, vector<1x8xf32>
    %c0_13 = arith.constant 0 : index
    %c0_14 = arith.constant 0 : index
    %8 = vector.load %arg7[%c0_13, %c0_14] : memref<1x8xf32, #tpu.memory_space<vmem>>, vector<1x8xf32>
    %cst_15 = arith.constant dense<0.000000e+00> : vector<1x8xf32>
    %9 = tpu.matmul %0, %6, %cst_15 {dimension_numbers = #tpu.dot_dimension_numbers<[1], [0], [0], [1], [0, 0, 1, 1], [], []>} : vector<1x32xf32>, vector<32x8xf32>, vector<1x8xf32> -> vector<1x8xf32>
    %cst_16 = arith.constant 3.125000e-02 : f32
    %10 = vector.broadcast %cst_16 : f32 to vector<1x8xf32>
    %11 = arith.mulf %9, %10 : vector<1x8xf32>
    %12 = vector.broadcast %11 : vector<1x8xf32> to vector<32x8xf32>
    %13 = arith.subf %6, %12 : vector<32x8xf32>
    %14 = arith.mulf %13, %13 : vector<32x8xf32>
    %cst_17 = arith.constant dense<0.000000e+00> : vector<1x8xf32>
    %15 = tpu.matmul %0, %14, %cst_17 {dimension_numbers = #tpu.dot_dimension_numbers<[1], [0], [0], [1], [0, 0, 1, 1], [], []>} : vector<1x32xf32>, vector<32x8xf32>, vector<1x8xf32> -> vector<1x8xf32>
    %cst_18 = arith.constant 3.125000e-02 : f32
    %16 = vector.broadcast %cst_18 : f32 to vector<1x8xf32>
    %17 = arith.mulf %15, %16 : vector<1x8xf32>
    %cst_19 = arith.constant 9.99999974E-6 : f32
    %18 = vector.broadcast %cst_19 : f32 to vector<1x8xf32>
    %19 = arith.addf %17, %18 : vector<1x8xf32>
    %20 = math.rsqrt %19 : vector<1x8xf32>
    %21 = vector.broadcast %20 : vector<1x8xf32> to vector<32x8xf32>
    %22 = arith.mulf %13, %21 : vector<32x8xf32>
    %23 = vector.broadcast %7 : vector<1x8xf32> to vector<32x8xf32>
    %24 = arith.mulf %22, %23 : vector<32x8xf32>
    %25 = vector.broadcast %8 : vector<1x8xf32> to vector<32x8xf32>
    %26 = arith.addf %24, %25 : vector<32x8xf32>
    %c0_20 = arith.constant 0 : index
    %c0_21 = arith.constant 0 : index
    %27 = vector.load %arg8[%c0_20, %c0_21] : memref<16x32xf32, #tpu.memory_space<vmem>>, vector<16x32xf32>
    %c0_22 = arith.constant 0 : index
    %c0_23 = arith.constant 0 : index
    %28 = vector.load %arg9[%c0_22, %c0_23] : memref<1x32xf32, #tpu.memory_space<vmem>>, vector<1x32xf32>
    %c0_24 = arith.constant 0 : index
    %c0_25 = arith.constant 0 : index
    %29 = vector.load %arg10[%c0_24, %c0_25] : memref<32x32xf32, #tpu.memory_space<vmem>>, vector<32x32xf32>
    %c0_26 = arith.constant 0 : index
    %c0_27 = arith.constant 0 : index
    %30 = vector.load %arg11[%c0_26, %c0_27] : memref<1x32xf32, #tpu.memory_space<vmem>>, vector<1x32xf32>
    %c0_28 = arith.constant 0 : index
    %c0_29 = arith.constant 0 : index
    %31 = vector.load %arg12[%c0_28, %c0_29] : memref<1x32xf32, #tpu.memory_space<vmem>>, vector<1x32xf32>
    %c0_30 = arith.constant 0 : index
    %c0_31 = arith.constant 0 : index
    %32 = vector.load %arg13[%c0_30, %c0_31] : memref<1x32xf32, #tpu.memory_space<vmem>>, vector<1x32xf32>
    %c0_32 = arith.constant 0 : index
    %c0_33 = arith.constant 0 : index
    %33 = vector.load %arg14[%c0_32, %c0_33] : memref<32x32xf32, #tpu.memory_space<vmem>>, vector<32x32xf32>
    %c0_34 = arith.constant 0 : index
    %c0_35 = arith.constant 0 : index
    %34 = vector.load %arg15[%c0_34, %c0_35] : memref<1x32xf32, #tpu.memory_space<vmem>>, vector<1x32xf32>
    %c0_36 = arith.constant 0 : index
    %c0_37 = arith.constant 0 : index
    %35 = vector.load %arg16[%c0_36, %c0_37] : memref<32x36xf32, #tpu.memory_space<vmem>>, vector<32x36xf32>
    %c0_38 = arith.constant 0 : index
    %c0_39 = arith.constant 0 : index
    %36 = vector.load %arg17[%c0_38, %c0_39] : memref<1x36xf32, #tpu.memory_space<vmem>>, vector<1x36xf32>
    %c0_40 = arith.constant 0 : index
    %c0_41 = arith.constant 0 : index
    %37 = vector.load %arg18[%c0_40, %c0_41] : memref<96x64xf32, #tpu.memory_space<vmem>>, vector<96x64xf32>
    %c0_42 = arith.constant 0 : index
    %c0_43 = arith.constant 0 : index
    %38 = vector.load %arg19[%c0_42, %c0_43] : memref<1x64xf32, #tpu.memory_space<vmem>>, vector<1x64xf32>
    %c0_44 = arith.constant 0 : index
    %c0_45 = arith.constant 0 : index
    %39 = vector.load %arg20[%c0_44, %c0_45] : memref<1x64xf32, #tpu.memory_space<vmem>>, vector<1x64xf32>
    %c0_46 = arith.constant 0 : index
    %c0_47 = arith.constant 0 : index
    %40 = vector.load %arg21[%c0_46, %c0_47] : memref<1x64xf32, #tpu.memory_space<vmem>>, vector<1x64xf32>
    %c0_48 = arith.constant 0 : index
    %c0_49 = arith.constant 0 : index
    %41 = vector.load %arg22[%c0_48, %c0_49] : memref<64x16xf32, #tpu.memory_space<vmem>>, vector<64x16xf32>
    %c0_50 = arith.constant 0 : index
    %c0_51 = arith.constant 0 : index
    %42 = vector.load %arg23[%c0_50, %c0_51] : memref<1x16xf32, #tpu.memory_space<vmem>>, vector<1x16xf32>
    %cst_52 = arith.constant dense<0.000000e+00> : vector<2x8xf32>
    %43 = tpu.matmul %5, %26, %cst_52 {dimension_numbers = #tpu.dot_dimension_numbers<[1], [0], [0], [1], [0, 0, 1, 1], [], []>} : vector<2x32xf32>, vector<32x8xf32>, vector<2x8xf32> -> vector<2x8xf32>
    %cst_53 = arith.constant dense<0.000000e+00> : vector<32x8xf32>
    %44 = tpu.matmul %4, %43, %cst_53 {dimension_numbers = #tpu.dot_dimension_numbers<[1], [0], [0], [1], [0, 0, 1, 1], [], []>} : vector<32x2xf32>, vector<2x8xf32>, vector<32x8xf32> -> vector<32x8xf32>
    %45 = vector.broadcast %3 : vector<32x1xf32> to vector<32x8xf32>
    %46 = arith.mulf %44, %45 : vector<32x8xf32>
    %47 = vector.extract_strided_slice %27 {offsets = [0, 0], sizes = [8, 32], strides = [1, 1]} : vector<16x32xf32> to vector<8x32xf32>
    %48 = arith.truncf %26 : vector<32x8xf32> to vector<32x8xbf16>
    %49 = arith.truncf %47 : vector<8x32xf32> to vector<8x32xbf16>
    %cst_54 = arith.constant dense<0.000000e+00> : vector<32x32xf32>
    %50 = tpu.matmul %48, %49, %cst_54 {dimension_numbers = #tpu.dot_dimension_numbers<[1], [0], [0], [1], [0, 0, 1, 1], [], []>} : vector<32x8xbf16>, vector<8x32xbf16>, vector<32x32xf32> -> vector<32x32xf32>
    %51 = vector.extract_strided_slice %27 {offsets = [8, 0], sizes = [8, 32], strides = [1, 1]} : vector<16x32xf32> to vector<8x32xf32>
    %52 = arith.truncf %46 : vector<32x8xf32> to vector<32x8xbf16>
    %53 = arith.truncf %51 : vector<8x32xf32> to vector<8x32xbf16>
    %cst_55 = arith.constant dense<0.000000e+00> : vector<32x32xf32>
    %54 = tpu.matmul %52, %53, %cst_55 {dimension_numbers = #tpu.dot_dimension_numbers<[1], [0], [0], [1], [0, 0, 1, 1], [], []>} : vector<32x8xbf16>, vector<8x32xbf16>, vector<32x32xf32> -> vector<32x32xf32>
    %55 = arith.addf %50, %54 : vector<32x32xf32>
    %56 = vector.broadcast %28 : vector<1x32xf32> to vector<32x32xf32>
    %57 = arith.addf %55, %56 : vector<32x32xf32>
    %cst_56 = arith.constant 0.000000e+00 : f32
    %58 = vector.broadcast %cst_56 : f32 to vector<32x32xf32>
    %59 = arith.cmpf ogt, %57, %58 : vector<32x32xf32>
    %cst_57 = arith.constant 0.000000e+00 : f32
    %60 = vector.broadcast %cst_57 : f32 to vector<32x32xf32>
    %61 = arith.minimumf %57, %60 : vector<32x32xf32>
    %62 = math.exp %61 : vector<32x32xf32>
    %cst_58 = arith.constant 1.000000e+00 : f32
    %63 = vector.broadcast %cst_58 : f32 to vector<32x32xf32>
    %64 = arith.subf %62, %63 : vector<32x32xf32>
    %65 = arith.select %59, %57, %64 : vector<32x32xi1>, vector<32x32xf32>
    %66 = arith.truncf %65 : vector<32x32xf32> to vector<32x32xbf16>
    %67 = arith.truncf %29 : vector<32x32xf32> to vector<32x32xbf16>
    %cst_59 = arith.constant dense<0.000000e+00> : vector<32x32xf32>
    %68 = tpu.matmul %66, %67, %cst_59 {dimension_numbers = #tpu.dot_dimension_numbers<[1], [0], [0], [1], [0, 0, 1, 1], [], []>} : vector<32x32xbf16>, vector<32x32xbf16>, vector<32x32xf32> -> vector<32x32xf32>
    %69 = vector.broadcast %30 : vector<1x32xf32> to vector<32x32xf32>
    %70 = arith.addf %68, %69 : vector<32x32xf32>
    %cst_60 = arith.constant 0.000000e+00 : f32
    %71 = vector.broadcast %cst_60 : f32 to vector<32x32xf32>
    %72 = arith.cmpf ogt, %70, %71 : vector<32x32xf32>
    %cst_61 = arith.constant 0.000000e+00 : f32
    %73 = vector.broadcast %cst_61 : f32 to vector<32x32xf32>
    %74 = arith.minimumf %70, %73 : vector<32x32xf32>
    %75 = math.exp %74 : vector<32x32xf32>
    %cst_62 = arith.constant 1.000000e+00 : f32
    %76 = vector.broadcast %cst_62 : f32 to vector<32x32xf32>
    %77 = arith.subf %75, %76 : vector<32x32xf32>
    %78 = arith.select %72, %70, %77 : vector<32x32xi1>, vector<32x32xf32>
    %cst_63 = arith.constant dense<0.000000e+00> : vector<1x32xf32>
    %79 = tpu.matmul %0, %78, %cst_63 {dimension_numbers = #tpu.dot_dimension_numbers<[1], [0], [0], [1], [0, 0, 1, 1], [], []>} : vector<1x32xf32>, vector<32x32xf32>, vector<1x32xf32> -> vector<1x32xf32>
    %cst_64 = arith.constant 3.125000e-02 : f32
    %80 = vector.broadcast %cst_64 : f32 to vector<1x32xf32>
    %81 = arith.mulf %79, %80 : vector<1x32xf32>
    %82 = vector.broadcast %81 : vector<1x32xf32> to vector<32x32xf32>
    %83 = arith.subf %78, %82 : vector<32x32xf32>
    %84 = arith.mulf %83, %83 : vector<32x32xf32>
    %cst_65 = arith.constant dense<0.000000e+00> : vector<1x32xf32>
    %85 = tpu.matmul %0, %84, %cst_65 {dimension_numbers = #tpu.dot_dimension_numbers<[1], [0], [0], [1], [0, 0, 1, 1], [], []>} : vector<1x32xf32>, vector<32x32xf32>, vector<1x32xf32> -> vector<1x32xf32>
    %cst_66 = arith.constant 3.125000e-02 : f32
    %86 = vector.broadcast %cst_66 : f32 to vector<1x32xf32>
    %87 = arith.mulf %85, %86 : vector<1x32xf32>
    %cst_67 = arith.constant 9.99999974E-6 : f32
    %88 = vector.broadcast %cst_67 : f32 to vector<1x32xf32>
    %89 = arith.addf %87, %88 : vector<1x32xf32>
    %90 = math.rsqrt %89 : vector<1x32xf32>
    %91 = vector.broadcast %90 : vector<1x32xf32> to vector<32x32xf32>
    %92 = arith.mulf %83, %91 : vector<32x32xf32>
    %93 = vector.broadcast %31 : vector<1x32xf32> to vector<32x32xf32>
    %94 = arith.mulf %92, %93 : vector<32x32xf32>
    %95 = vector.broadcast %32 : vector<1x32xf32> to vector<32x32xf32>
    %96 = arith.addf %94, %95 : vector<32x32xf32>
    %97 = arith.truncf %96 : vector<32x32xf32> to vector<32x32xbf16>
    %98 = arith.truncf %33 : vector<32x32xf32> to vector<32x32xbf16>
    %cst_68 = arith.constant dense<0.000000e+00> : vector<32x32xf32>
    %99 = tpu.matmul %97, %98, %cst_68 {dimension_numbers = #tpu.dot_dimension_numbers<[1], [0], [0], [1], [0, 0, 1, 1], [], []>} : vector<32x32xbf16>, vector<32x32xbf16>, vector<32x32xf32> -> vector<32x32xf32>
    %100 = vector.broadcast %34 : vector<1x32xf32> to vector<32x32xf32>
    %101 = arith.addf %99, %100 : vector<32x32xf32>
    %cst_69 = arith.constant 0.000000e+00 : f32
    %102 = vector.broadcast %cst_69 : f32 to vector<32x32xf32>
    %103 = arith.cmpf ogt, %101, %102 : vector<32x32xf32>
    %cst_70 = arith.constant 0.000000e+00 : f32
    %104 = vector.broadcast %cst_70 : f32 to vector<32x32xf32>
    %105 = arith.minimumf %101, %104 : vector<32x32xf32>
    %106 = math.exp %105 : vector<32x32xf32>
    %cst_71 = arith.constant 1.000000e+00 : f32
    %107 = vector.broadcast %cst_71 : f32 to vector<32x32xf32>
    %108 = arith.subf %106, %107 : vector<32x32xf32>
    %109 = arith.select %103, %101, %108 : vector<32x32xi1>, vector<32x32xf32>
    %cst_72 = arith.constant dense<0.000000e+00> : vector<32x36xf32>
    %110 = tpu.matmul %109, %35, %cst_72 {dimension_numbers = #tpu.dot_dimension_numbers<[1], [0], [0], [1], [0, 0, 1, 1], [], []>} : vector<32x32xf32>, vector<32x36xf32>, vector<32x36xf32> -> vector<32x36xf32>
    %111 = vector.broadcast %36 : vector<1x36xf32> to vector<32x36xf32>
    %112 = arith.addf %110, %111 : vector<32x36xf32>
    %113 = vector.extract_strided_slice %112 {offsets = [0, 0], sizes = [32, 4], strides = [1, 1]} : vector<32x36xf32> to vector<32x4xf32>
    %114 = vector.extract_strided_slice %112 {offsets = [0, 4], sizes = [32, 32], strides = [1, 1]} : vector<32x36xf32> to vector<32x32xf32>
    %115 = arith.truncf %114 : vector<32x32xf32> to vector<32x32xbf16>
    %116 = arith.mulf %113, %113 : vector<32x4xf32>
    %cst_73 = arith.constant dense<0.000000e+00> : vector<32xf32>
    %117 = vector.multi_reduction <add>, %116, %cst_73 [1] : vector<32x4xf32> to vector<32xf32>
    %118 = vector.shape_cast %117 : vector<32xf32> to vector<32x1xf32>
    %cst_74 = arith.constant 1.000000e+00 : f32
    %119 = vector.broadcast %cst_74 : f32 to vector<1x4xf32>
    %cst_75 = arith.constant dense<0.000000e+00> : vector<1x32xf32>
    %120 = tpu.matmul %119, %116, %cst_75 {dimension_numbers = #tpu.dot_dimension_numbers<[1], [1], [0], [0], [0, 0, 1, 0], [], []>} : vector<1x4xf32>, vector<32x4xf32>, vector<1x32xf32> -> vector<1x32xf32>
    %cst_76 = arith.constant dense<0.000000e+00> : vector<32x32xf32>
    %121 = tpu.matmul %113, %113, %cst_76 {dimension_numbers = #tpu.dot_dimension_numbers<[1], [1], [0], [0], [0, 0, 1, 0], [], []>} : vector<32x4xf32>, vector<32x4xf32>, vector<32x32xf32> -> vector<32x32xf32>
    %122 = vector.broadcast %118 : vector<32x1xf32> to vector<32x32xf32>
    %123 = vector.broadcast %120 : vector<1x32xf32> to vector<32x32xf32>
    %124 = arith.addf %122, %123 : vector<32x32xf32>
    %cst_77 = arith.constant 2.000000e+00 : f32
    %125 = vector.broadcast %cst_77 : f32 to vector<32x32xf32>
    %126 = arith.mulf %125, %121 : vector<32x32xf32>
    %127 = arith.subf %124, %126 : vector<32x32xf32>
    %cst_78 = arith.constant 0.000000e+00 : f32
    %128 = vector.broadcast %cst_78 : f32 to vector<32x32xf32>
    %129 = arith.maximumf %127, %128 : vector<32x32xf32>
    %130 = vector.broadcast %1 : vector<32x1xi32> to vector<32x32xi32>
    %131 = vector.broadcast %2 : vector<1x32xi32> to vector<32x32xi32>
    %132 = arith.cmpi eq, %130, %131 : vector<32x32xi32>
    %cst_79 = arith.constant 1.000000e+30 : f32
    %133 = vector.broadcast %cst_79 : f32 to vector<32x32xf32>
    %134 = arith.select %132, %129, %133 : vector<32x32xi1>, vector<32x32xf32>
    %135 = tpu.iota {dimensions = array<i32: 1>} : vector<32x32xi32>
    %cst_80 = arith.constant 1.000000e+00 : f32
    %136 = vector.broadcast %cst_80 : f32 to vector<32x32xf32>
    %137 = arith.addf %134, %136 : vector<32x32xf32>
    %138 = tpu.bitcast %137 : vector<32x32xf32> -> vector<32x32xi32>
    %c-32_i32 = arith.constant -32 : i32
    %139 = vector.broadcast %c-32_i32 : i32 to vector<32x32xi32>
    %140 = arith.andi %138, %139 : vector<32x32xi32>
    %141 = arith.ori %140, %135 : vector<32x32xi32>
    %142 = tpu.bitcast %141 : vector<32x32xi32> -> vector<32x32xf32>
    %cst_81 = arith.constant 0.000000e+00 : f32
    %143 = vector.broadcast %cst_81 : f32 to vector<32x32xf32>
    %cst_82 = arith.constant -1.000000e+30 : f32
    %144 = vector.broadcast %cst_82 : f32 to vector<32x32xf32>
    %cst_83 = arith.constant dense<0x7F800000> : vector<32xf32>
    %145 = vector.multi_reduction <minimumf>, %142, %cst_83 [1] : vector<32x32xf32> to vector<32xf32>
    %146 = vector.shape_cast %145 : vector<32xf32> to vector<32x1xf32>
    %147 = tpu.bitcast %146 : vector<32x1xf32> -> vector<32x1xi32>
    %c31_i32 = arith.constant 31 : i32
    %148 = vector.broadcast %c31_i32 : i32 to vector<32x1xi32>
    %149 = arith.andi %147, %148 : vector<32x1xi32>
    %c-32_i32_84 = arith.constant -32 : i32
    %150 = vector.broadcast %c-32_i32_84 : i32 to vector<32x1xi32>
    %151 = arith.andi %147, %150 : vector<32x1xi32>
    %152 = tpu.bitcast %151 : vector<32x1xi32> -> vector<32x1xf32>
    %cst_85 = arith.constant 1.000000e+00 : f32
    %153 = vector.broadcast %cst_85 : f32 to vector<32x1xf32>
    %154 = arith.subf %152, %153 : vector<32x1xf32>
    %cst_86 = arith.constant -1.000000e+01 : f32
    %155 = vector.broadcast %cst_86 : f32 to vector<32x1xf32>
    %156 = arith.mulf %155, %154 : vector<32x1xf32>
    %157 = math.exp %156 : vector<32x1xf32>
    %158 = vector.broadcast %149 : vector<32x1xi32> to vector<32x32xi32>
    %159 = arith.cmpi eq, %135, %158 : vector<32x32xi32>
    %cst_87 = arith.constant 0.000000e+00 : f32
    %160 = vector.shape_cast %157 : vector<32x1xf32> to vector<32x1xf32>
    %161 = vector.broadcast %160 : vector<32x1xf32> to vector<32x32xf32>
    %162 = vector.broadcast %cst_87 : f32 to vector<32x32xf32>
    %163 = arith.select %159, %161, %162 : vector<32x32xi1>, vector<32x32xf32>
    %164 = arith.addf %143, %163 : vector<32x32xf32>
    %165 = arith.truncf %163 : vector<32x32xf32> to vector<32x32xbf16>
    %cst_88 = arith.constant dense<0.000000e+00> : vector<32x32xf32>
    %166 = tpu.matmul %165, %115, %cst_88 {dimension_numbers = #tpu.dot_dimension_numbers<[1], [0], [0], [1], [0, 0, 1, 1], [], []>} : vector<32x32xbf16>, vector<32x32xbf16>, vector<32x32xf32> -> vector<32x32xf32>
    %167 = arith.maximumf %144, %166 : vector<32x32xf32>
    %cst_89 = arith.constant 3.000000e+38 : f32
    %168 = vector.broadcast %cst_89 : f32 to vector<32x32xf32>
    %169 = arith.select %159, %168, %142 : vector<32x32xi1>, vector<32x32xf32>
    %cst_90 = arith.constant dense<0x7F800000> : vector<32xf32>
    %170 = vector.multi_reduction <minimumf>, %169, %cst_90 [1] : vector<32x32xf32> to vector<32xf32>
    %171 = vector.shape_cast %170 : vector<32xf32> to vector<32x1xf32>
    %172 = tpu.bitcast %171 : vector<32x1xf32> -> vector<32x1xi32>
    %c31_i32_91 = arith.constant 31 : i32
    %173 = vector.broadcast %c31_i32_91 : i32 to vector<32x1xi32>
    %174 = arith.andi %172, %173 : vector<32x1xi32>
    %c-32_i32_92 = arith.constant -32 : i32
    %175 = vector.broadcast %c-32_i32_92 : i32 to vector<32x1xi32>
    %176 = arith.andi %172, %175 : vector<32x1xi32>
    %177 = tpu.bitcast %176 : vector<32x1xi32> -> vector<32x1xf32>
    %cst_93 = arith.constant 1.000000e+00 : f32
    %178 = vector.broadcast %cst_93 : f32 to vector<32x1xf32>
    %179 = arith.subf %177, %178 : vector<32x1xf32>
    %cst_94 = arith.constant -1.000000e+01 : f32
    %180 = vector.broadcast %cst_94 : f32 to vector<32x1xf32>
    %181 = arith.mulf %180, %179 : vector<32x1xf32>
    %182 = math.exp %181 : vector<32x1xf32>
    %183 = vector.broadcast %174 : vector<32x1xi32> to vector<32x32xi32>
    %184 = arith.cmpi eq, %135, %183 : vector<32x32xi32>
    %cst_95 = arith.constant 0.000000e+00 : f32
    %185 = vector.shape_cast %182 : vector<32x1xf32> to vector<32x1xf32>
    %186 = vector.broadcast %185 : vector<32x1xf32> to vector<32x32xf32>
    %187 = vector.broadcast %cst_95 : f32 to vector<32x32xf32>
    %188 = arith.select %184, %186, %187 : vector<32x32xi1>, vector<32x32xf32>
    %189 = arith.addf %164, %188 : vector<32x32xf32>
    %190 = arith.truncf %188 : vector<32x32xf32> to vector<32x32xbf16>
    %cst_96 = arith.constant dense<0.000000e+00> : vector<32x32xf32>
    %191 = tpu.matmul %190, %115, %cst_96 {dimension_numbers = #tpu.dot_dimension_numbers<[1], [0], [0], [1], [0, 0, 1, 1], [], []>} : vector<32x32xbf16>, vector<32x32xbf16>, vector<32x32xf32> -> vector<32x32xf32>
    %192 = arith.maximumf %167, %191 : vector<32x32xf32>
    %cst_97 = arith.constant 3.000000e+38 : f32
    %193 = vector.broadcast %cst_97 : f32 to vector<32x32xf32>
    %194 = arith.select %184, %193, %169 : vector<32x32xi1>, vector<32x32xf32>
    %cst_98 = arith.constant dense<0x7F800000> : vector<32xf32>
    %195 = vector.multi_reduction <minimumf>, %194, %cst_98 [1] : vector<32x32xf32> to vector<32xf32>
    %196 = vector.shape_cast %195 : vector<32xf32> to vector<32x1xf32>
    %197 = tpu.bitcast %196 : vector<32x1xf32> -> vector<32x1xi32>
    %c31_i32_99 = arith.constant 31 : i32
    %198 = vector.broadcast %c31_i32_99 : i32 to vector<32x1xi32>
    %199 = arith.andi %197, %198 : vector<32x1xi32>
    %c-32_i32_100 = arith.constant -32 : i32
    %200 = vector.broadcast %c-32_i32_100 : i32 to vector<32x1xi32>
    %201 = arith.andi %197, %200 : vector<32x1xi32>
    %202 = tpu.bitcast %201 : vector<32x1xi32> -> vector<32x1xf32>
    %cst_101 = arith.constant 1.000000e+00 : f32
    %203 = vector.broadcast %cst_101 : f32 to vector<32x1xf32>
    %204 = arith.subf %202, %203 : vector<32x1xf32>
    %cst_102 = arith.constant -1.000000e+01 : f32
    %205 = vector.broadcast %cst_102 : f32 to vector<32x1xf32>
    %206 = arith.mulf %205, %204 : vector<32x1xf32>
    %207 = math.exp %206 : vector<32x1xf32>
    %208 = vector.broadcast %199 : vector<32x1xi32> to vector<32x32xi32>
    %209 = arith.cmpi eq, %135, %208 : vector<32x32xi32>
    %cst_103 = arith.constant 0.000000e+00 : f32
    %210 = vector.shape_cast %207 : vector<32x1xf32> to vector<32x1xf32>
    %211 = vector.broadcast %210 : vector<32x1xf32> to vector<32x32xf32>
    %212 = vector.broadcast %cst_103 : f32 to vector<32x32xf32>
    %213 = arith.select %209, %211, %212 : vector<32x32xi1>, vector<32x32xf32>
    %214 = arith.addf %189, %213 : vector<32x32xf32>
    %215 = arith.truncf %213 : vector<32x32xf32> to vector<32x32xbf16>
    %cst_104 = arith.constant dense<0.000000e+00> : vector<32x32xf32>
    %216 = tpu.matmul %215, %115, %cst_104 {dimension_numbers = #tpu.dot_dimension_numbers<[1], [0], [0], [1], [0, 0, 1, 1], [], []>} : vector<32x32xbf16>, vector<32x32xbf16>, vector<32x32xf32> -> vector<32x32xf32>
    %217 = arith.maximumf %192, %216 : vector<32x32xf32>
    %cst_105 = arith.constant 3.000000e+38 : f32
    %218 = vector.broadcast %cst_105 : f32 to vector<32x32xf32>
    %219 = arith.select %209, %218, %194 : vector<32x32xi1>, vector<32x32xf32>
    %cst_106 = arith.constant dense<0x7F800000> : vector<32xf32>
    %220 = vector.multi_reduction <minimumf>, %219, %cst_106 [1] : vector<32x32xf32> to vector<32xf32>
    %221 = vector.shape_cast %220 : vector<32xf32> to vector<32x1xf32>
    %222 = tpu.bitcast %221 : vector<32x1xf32> -> vector<32x1xi32>
    %c31_i32_107 = arith.constant 31 : i32
    %223 = vector.broadcast %c31_i32_107 : i32 to vector<32x1xi32>
    %224 = arith.andi %222, %223 : vector<32x1xi32>
    %c-32_i32_108 = arith.constant -32 : i32
    %225 = vector.broadcast %c-32_i32_108 : i32 to vector<32x1xi32>
    %226 = arith.andi %222, %225 : vector<32x1xi32>
    %227 = tpu.bitcast %226 : vector<32x1xi32> -> vector<32x1xf32>
    %cst_109 = arith.constant 1.000000e+00 : f32
    %228 = vector.broadcast %cst_109 : f32 to vector<32x1xf32>
    %229 = arith.subf %227, %228 : vector<32x1xf32>
    %cst_110 = arith.constant -1.000000e+01 : f32
    %230 = vector.broadcast %cst_110 : f32 to vector<32x1xf32>
    %231 = arith.mulf %230, %229 : vector<32x1xf32>
    %232 = math.exp %231 : vector<32x1xf32>
    %233 = vector.broadcast %224 : vector<32x1xi32> to vector<32x32xi32>
    %234 = arith.cmpi eq, %135, %233 : vector<32x32xi32>
    %cst_111 = arith.constant 0.000000e+00 : f32
    %235 = vector.shape_cast %232 : vector<32x1xf32> to vector<32x1xf32>
    %236 = vector.broadcast %235 : vector<32x1xf32> to vector<32x32xf32>
    %237 = vector.broadcast %cst_111 : f32 to vector<32x32xf32>
    %238 = arith.select %234, %236, %237 : vector<32x32xi1>, vector<32x32xf32>
    %239 = arith.addf %214, %238 : vector<32x32xf32>
    %240 = arith.truncf %238 : vector<32x32xf32> to vector<32x32xbf16>
    %cst_112 = arith.constant dense<0.000000e+00> : vector<32x32xf32>
    %241 = tpu.matmul %240, %115, %cst_112 {dimension_numbers = #tpu.dot_dimension_numbers<[1], [0], [0], [1], [0, 0, 1, 1], [], []>} : vector<32x32xbf16>, vector<32x32xbf16>, vector<32x32xf32> -> vector<32x32xf32>
    %242 = arith.maximumf %217, %241 : vector<32x32xf32>
    %243 = arith.truncf %239 : vector<32x32xf32> to vector<32x32xbf16>
    %cst_113 = arith.constant dense<0.000000e+00> : vector<32x32xf32>
    %244 = tpu.matmul %243, %115, %cst_113 {dimension_numbers = #tpu.dot_dimension_numbers<[1], [0], [0], [1], [0, 0, 1, 1], [], []>} : vector<32x32xbf16>, vector<32x32xbf16>, vector<32x32xf32> -> vector<32x32xf32>
    %cst_114 = arith.constant 2.500000e-01 : f32
    %245 = vector.broadcast %cst_114 : f32 to vector<32x32xf32>
    %246 = arith.mulf %244, %245 : vector<32x32xf32>
    %247 = vector.extract_strided_slice %37 {offsets = [0, 0], sizes = [32, 64], strides = [1, 1]} : vector<96x64xf32> to vector<32x64xf32>
    %248 = arith.truncf %109 : vector<32x32xf32> to vector<32x32xbf16>
    %249 = arith.truncf %247 : vector<32x64xf32> to vector<32x64xbf16>
    %cst_115 = arith.constant dense<0.000000e+00> : vector<32x64xf32>
    %250 = tpu.matmul %248, %249, %cst_115 {dimension_numbers = #tpu.dot_dimension_numbers<[1], [0], [0], [1], [0, 0, 1, 1], [], []>} : vector<32x32xbf16>, vector<32x64xbf16>, vector<32x64xf32> -> vector<32x64xf32>
    %251 = vector.extract_strided_slice %37 {offsets = [32, 0], sizes = [32, 64], strides = [1, 1]} : vector<96x64xf32> to vector<32x64xf32>
    %252 = arith.truncf %246 : vector<32x32xf32> to vector<32x32xbf16>
    %253 = arith.truncf %251 : vector<32x64xf32> to vector<32x64xbf16>
    %cst_116 = arith.constant dense<0.000000e+00> : vector<32x64xf32>
    %254 = tpu.matmul %252, %253, %cst_116 {dimension_numbers = #tpu.dot_dimension_numbers<[1], [0], [0], [1], [0, 0, 1, 1], [], []>} : vector<32x32xbf16>, vector<32x64xbf16>, vector<32x64xf32> -> vector<32x64xf32>
    %255 = arith.addf %250, %254 : vector<32x64xf32>
    %256 = vector.extract_strided_slice %37 {offsets = [64, 0], sizes = [32, 64], strides = [1, 1]} : vector<96x64xf32> to vector<32x64xf32>
    %257 = arith.truncf %242 : vector<32x32xf32> to vector<32x32xbf16>
    %258 = arith.truncf %256 : vector<32x64xf32> to vector<32x64xbf16>
    %cst_117 = arith.constant dense<0.000000e+00> : vector<32x64xf32>
    %259 = tpu.matmul %257, %258, %cst_117 {dimension_numbers = #tpu.dot_dimension_numbers<[1], [0], [0], [1], [0, 0, 1, 1], [], []>} : vector<32x32xbf16>, vector<32x64xbf16>, vector<32x64xf32> -> vector<32x64xf32>
    %260 = arith.addf %255, %259 : vector<32x64xf32>
    %261 = vector.broadcast %38 : vector<1x64xf32> to vector<32x64xf32>
    %262 = arith.addf %260, %261 : vector<32x64xf32>
    %cst_118 = arith.constant dense<0.000000e+00> : vector<1x64xf32>
    %263 = tpu.matmul %0, %262, %cst_118 {dimension_numbers = #tpu.dot_dimension_numbers<[1], [0], [0], [1], [0, 0, 1, 1], [], []>} : vector<1x32xf32>, vector<32x64xf32>, vector<1x64xf32> -> vector<1x64xf32>
    %cst_119 = arith.constant 3.125000e-02 : f32
    %264 = vector.broadcast %cst_119 : f32 to vector<1x64xf32>
    %265 = arith.mulf %263, %264 : vector<1x64xf32>
    %266 = vector.broadcast %265 : vector<1x64xf32> to vector<32x64xf32>
    %267 = arith.subf %262, %266 : vector<32x64xf32>
    %268 = arith.mulf %267, %267 : vector<32x64xf32>
    %cst_120 = arith.constant dense<0.000000e+00> : vector<1x64xf32>
    %269 = tpu.matmul %0, %268, %cst_120 {dimension_numbers = #tpu.dot_dimension_numbers<[1], [0], [0], [1], [0, 0, 1, 1], [], []>} : vector<1x32xf32>, vector<32x64xf32>, vector<1x64xf32> -> vector<1x64xf32>
    %cst_121 = arith.constant 3.125000e-02 : f32
    %270 = vector.broadcast %cst_121 : f32 to vector<1x64xf32>
    %271 = arith.mulf %269, %270 : vector<1x64xf32>
    %cst_122 = arith.constant 9.99999974E-6 : f32
    %272 = vector.broadcast %cst_122 : f32 to vector<1x64xf32>
    %273 = arith.addf %271, %272 : vector<1x64xf32>
    %274 = math.rsqrt %273 : vector<1x64xf32>
    %275 = vector.broadcast %274 : vector<1x64xf32> to vector<32x64xf32>
    %276 = arith.mulf %267, %275 : vector<32x64xf32>
    %277 = vector.broadcast %39 : vector<1x64xf32> to vector<32x64xf32>
    %278 = arith.mulf %276, %277 : vector<32x64xf32>
    %279 = vector.broadcast %40 : vector<1x64xf32> to vector<32x64xf32>
    %280 = arith.addf %278, %279 : vector<32x64xf32>
    %281 = arith.truncf %280 : vector<32x64xf32> to vector<32x64xbf16>
    %282 = arith.truncf %41 : vector<64x16xf32> to vector<64x16xbf16>
    %cst_123 = arith.constant dense<0.000000e+00> : vector<32x16xf32>
    %283 = tpu.matmul %281, %282, %cst_123 {dimension_numbers = #tpu.dot_dimension_numbers<[1], [0], [0], [1], [0, 0, 1, 1], [], []>} : vector<32x64xbf16>, vector<64x16xbf16>, vector<32x16xf32> -> vector<32x16xf32>
    %284 = vector.broadcast %42 : vector<1x16xf32> to vector<32x16xf32>
    %285 = arith.addf %283, %284 : vector<32x16xf32>
    %cst_124 = arith.constant 0.000000e+00 : f32
    %286 = vector.broadcast %cst_124 : f32 to vector<32x16xf32>
    %287 = arith.cmpf ogt, %285, %286 : vector<32x16xf32>
    %cst_125 = arith.constant 0.000000e+00 : f32
    %288 = vector.broadcast %cst_125 : f32 to vector<32x16xf32>
    %289 = arith.minimumf %285, %288 : vector<32x16xf32>
    %290 = math.exp %289 : vector<32x16xf32>
    %cst_126 = arith.constant 1.000000e+00 : f32
    %291 = vector.broadcast %cst_126 : f32 to vector<32x16xf32>
    %292 = arith.subf %290, %291 : vector<32x16xf32>
    %293 = arith.select %287, %285, %292 : vector<32x16xi1>, vector<32x16xf32>
    %c0_127 = arith.constant 0 : index
    %c0_128 = arith.constant 0 : index
    %294 = vector.load %arg24[%c0_127, %c0_128] : memref<128x32xf32, #tpu.memory_space<vmem>>, vector<128x32xf32>
    %c0_129 = arith.constant 0 : index
    %c0_130 = arith.constant 0 : index
    %295 = vector.load %arg25[%c0_129, %c0_130] : memref<1x32xf32, #tpu.memory_space<vmem>>, vector<1x32xf32>
    %c0_131 = arith.constant 0 : index
    %c0_132 = arith.constant 0 : index
    %296 = vector.load %arg26[%c0_131, %c0_132] : memref<32x32xf32, #tpu.memory_space<vmem>>, vector<32x32xf32>
    %c0_133 = arith.constant 0 : index
    %c0_134 = arith.constant 0 : index
    %297 = vector.load %arg27[%c0_133, %c0_134] : memref<1x32xf32, #tpu.memory_space<vmem>>, vector<1x32xf32>
    %c0_135 = arith.constant 0 : index
    %c0_136 = arith.constant 0 : index
    %298 = vector.load %arg28[%c0_135, %c0_136] : memref<1x32xf32, #tpu.memory_space<vmem>>, vector<1x32xf32>
    %c0_137 = arith.constant 0 : index
    %c0_138 = arith.constant 0 : index
    %299 = vector.load %arg29[%c0_137, %c0_138] : memref<1x32xf32, #tpu.memory_space<vmem>>, vector<1x32xf32>
    %c0_139 = arith.constant 0 : index
    %c0_140 = arith.constant 0 : index
    %300 = vector.load %arg30[%c0_139, %c0_140] : memref<32x32xf32, #tpu.memory_space<vmem>>, vector<32x32xf32>
    %c0_141 = arith.constant 0 : index
    %c0_142 = arith.constant 0 : index
    %301 = vector.load %arg31[%c0_141, %c0_142] : memref<1x32xf32, #tpu.memory_space<vmem>>, vector<1x32xf32>
    %c0_143 = arith.constant 0 : index
    %c0_144 = arith.constant 0 : index
    %302 = vector.load %arg32[%c0_143, %c0_144] : memref<32x36xf32, #tpu.memory_space<vmem>>, vector<32x36xf32>
    %c0_145 = arith.constant 0 : index
    %c0_146 = arith.constant 0 : index
    %303 = vector.load %arg33[%c0_145, %c0_146] : memref<1x36xf32, #tpu.memory_space<vmem>>, vector<1x36xf32>
    %c0_147 = arith.constant 0 : index
    %c0_148 = arith.constant 0 : index
    %304 = vector.load %arg34[%c0_147, %c0_148] : memref<96x64xf32, #tpu.memory_space<vmem>>, vector<96x64xf32>
    %c0_149 = arith.constant 0 : index
    %c0_150 = arith.constant 0 : index
    %305 = vector.load %arg35[%c0_149, %c0_150] : memref<1x64xf32, #tpu.memory_space<vmem>>, vector<1x64xf32>
    %c0_151 = arith.constant 0 : index
    %c0_152 = arith.constant 0 : index
    %306 = vector.load %arg36[%c0_151, %c0_152] : memref<1x64xf32, #tpu.memory_space<vmem>>, vector<1x64xf32>
    %c0_153 = arith.constant 0 : index
    %c0_154 = arith.constant 0 : index
    %307 = vector.load %arg37[%c0_153, %c0_154] : memref<1x64xf32, #tpu.memory_space<vmem>>, vector<1x64xf32>
    %c0_155 = arith.constant 0 : index
    %c0_156 = arith.constant 0 : index
    %308 = vector.load %arg38[%c0_155, %c0_156] : memref<64x16xf32, #tpu.memory_space<vmem>>, vector<64x16xf32>
    %c0_157 = arith.constant 0 : index
    %c0_158 = arith.constant 0 : index
    %309 = vector.load %arg39[%c0_157, %c0_158] : memref<1x16xf32, #tpu.memory_space<vmem>>, vector<1x16xf32>
    %cst_159 = arith.constant dense<0.000000e+00> : vector<2x64xf32>
    %310 = tpu.matmul %5, %280, %cst_159 {dimension_numbers = #tpu.dot_dimension_numbers<[1], [0], [0], [1], [0, 0, 1, 1], [], []>} : vector<2x32xf32>, vector<32x64xf32>, vector<2x64xf32> -> vector<2x64xf32>
    %cst_160 = arith.constant dense<0.000000e+00> : vector<32x64xf32>
    %311 = tpu.matmul %4, %310, %cst_160 {dimension_numbers = #tpu.dot_dimension_numbers<[1], [0], [0], [1], [0, 0, 1, 1], [], []>} : vector<32x2xf32>, vector<2x64xf32>, vector<32x64xf32> -> vector<32x64xf32>
    %312 = vector.broadcast %3 : vector<32x1xf32> to vector<32x64xf32>
    %313 = arith.mulf %311, %312 : vector<32x64xf32>
    %314 = vector.extract_strided_slice %294 {offsets = [0, 0], sizes = [64, 32], strides = [1, 1]} : vector<128x32xf32> to vector<64x32xf32>
    %315 = arith.truncf %280 : vector<32x64xf32> to vector<32x64xbf16>
    %316 = arith.truncf %314 : vector<64x32xf32> to vector<64x32xbf16>
    %cst_161 = arith.constant dense<0.000000e+00> : vector<32x32xf32>
    %317 = tpu.matmul %315, %316, %cst_161 {dimension_numbers = #tpu.dot_dimension_numbers<[1], [0], [0], [1], [0, 0, 1, 1], [], []>} : vector<32x64xbf16>, vector<64x32xbf16>, vector<32x32xf32> -> vector<32x32xf32>
    %318 = vector.extract_strided_slice %294 {offsets = [64, 0], sizes = [64, 32], strides = [1, 1]} : vector<128x32xf32> to vector<64x32xf32>
    %319 = arith.truncf %313 : vector<32x64xf32> to vector<32x64xbf16>
    %320 = arith.truncf %318 : vector<64x32xf32> to vector<64x32xbf16>
    %cst_162 = arith.constant dense<0.000000e+00> : vector<32x32xf32>
    %321 = tpu.matmul %319, %320, %cst_162 {dimension_numbers = #tpu.dot_dimension_numbers<[1], [0], [0], [1], [0, 0, 1, 1], [], []>} : vector<32x64xbf16>, vector<64x32xbf16>, vector<32x32xf32> -> vector<32x32xf32>
    %322 = arith.addf %317, %321 : vector<32x32xf32>
    %323 = vector.broadcast %295 : vector<1x32xf32> to vector<32x32xf32>
    %324 = arith.addf %322, %323 : vector<32x32xf32>
    %cst_163 = arith.constant 0.000000e+00 : f32
    %325 = vector.broadcast %cst_163 : f32 to vector<32x32xf32>
    %326 = arith.cmpf ogt, %324, %325 : vector<32x32xf32>
    %cst_164 = arith.constant 0.000000e+00 : f32
    %327 = vector.broadcast %cst_164 : f32 to vector<32x32xf32>
    %328 = arith.minimumf %324, %327 : vector<32x32xf32>
    %329 = math.exp %328 : vector<32x32xf32>
    %cst_165 = arith.constant 1.000000e+00 : f32
    %330 = vector.broadcast %cst_165 : f32 to vector<32x32xf32>
    %331 = arith.subf %329, %330 : vector<32x32xf32>
    %332 = arith.select %326, %324, %331 : vector<32x32xi1>, vector<32x32xf32>
    %333 = arith.truncf %332 : vector<32x32xf32> to vector<32x32xbf16>
    %334 = arith.truncf %296 : vector<32x32xf32> to vector<32x32xbf16>
    %cst_166 = arith.constant dense<0.000000e+00> : vector<32x32xf32>
    %335 = tpu.matmul %333, %334, %cst_166 {dimension_numbers = #tpu.dot_dimension_numbers<[1], [0], [0], [1], [0, 0, 1, 1], [], []>} : vector<32x32xbf16>, vector<32x32xbf16>, vector<32x32xf32> -> vector<32x32xf32>
    %336 = vector.broadcast %297 : vector<1x32xf32> to vector<32x32xf32>
    %337 = arith.addf %335, %336 : vector<32x32xf32>
    %cst_167 = arith.constant 0.000000e+00 : f32
    %338 = vector.broadcast %cst_167 : f32 to vector<32x32xf32>
    %339 = arith.cmpf ogt, %337, %338 : vector<32x32xf32>
    %cst_168 = arith.constant 0.000000e+00 : f32
    %340 = vector.broadcast %cst_168 : f32 to vector<32x32xf32>
    %341 = arith.minimumf %337, %340 : vector<32x32xf32>
    %342 = math.exp %341 : vector<32x32xf32>
    %cst_169 = arith.constant 1.000000e+00 : f32
    %343 = vector.broadcast %cst_169 : f32 to vector<32x32xf32>
    %344 = arith.subf %342, %343 : vector<32x32xf32>
    %345 = arith.select %339, %337, %344 : vector<32x32xi1>, vector<32x32xf32>
    %cst_170 = arith.constant dense<0.000000e+00> : vector<1x32xf32>
    %346 = tpu.matmul %0, %345, %cst_170 {dimension_numbers = #tpu.dot_dimension_numbers<[1], [0], [0], [1], [0, 0, 1, 1], [], []>} : vector<1x32xf32>, vector<32x32xf32>, vector<1x32xf32> -> vector<1x32xf32>
    %cst_171 = arith.constant 3.125000e-02 : f32
    %347 = vector.broadcast %cst_171 : f32 to vector<1x32xf32>
    %348 = arith.mulf %346, %347 : vector<1x32xf32>
    %349 = vector.broadcast %348 : vector<1x32xf32> to vector<32x32xf32>
    %350 = arith.subf %345, %349 : vector<32x32xf32>
    %351 = arith.mulf %350, %350 : vector<32x32xf32>
    %cst_172 = arith.constant dense<0.000000e+00> : vector<1x32xf32>
    %352 = tpu.matmul %0, %351, %cst_172 {dimension_numbers = #tpu.dot_dimension_numbers<[1], [0], [0], [1], [0, 0, 1, 1], [], []>} : vector<1x32xf32>, vector<32x32xf32>, vector<1x32xf32> -> vector<1x32xf32>
    %cst_173 = arith.constant 3.125000e-02 : f32
    %353 = vector.broadcast %cst_173 : f32 to vector<1x32xf32>
    %354 = arith.mulf %352, %353 : vector<1x32xf32>
    %cst_174 = arith.constant 9.99999974E-6 : f32
    %355 = vector.broadcast %cst_174 : f32 to vector<1x32xf32>
    %356 = arith.addf %354, %355 : vector<1x32xf32>
    %357 = math.rsqrt %356 : vector<1x32xf32>
    %358 = vector.broadcast %357 : vector<1x32xf32> to vector<32x32xf32>
    %359 = arith.mulf %350, %358 : vector<32x32xf32>
    %360 = vector.broadcast %298 : vector<1x32xf32> to vector<32x32xf32>
    %361 = arith.mulf %359, %360 : vector<32x32xf32>
    %362 = vector.broadcast %299 : vector<1x32xf32> to vector<32x32xf32>
    %363 = arith.addf %361, %362 : vector<32x32xf32>
    %364 = arith.truncf %363 : vector<32x32xf32> to vector<32x32xbf16>
    %365 = arith.truncf %300 : vector<32x32xf32> to vector<32x32xbf16>
    %cst_175 = arith.constant dense<0.000000e+00> : vector<32x32xf32>
    %366 = tpu.matmul %364, %365, %cst_175 {dimension_numbers = #tpu.dot_dimension_numbers<[1], [0], [0], [1], [0, 0, 1, 1], [], []>} : vector<32x32xbf16>, vector<32x32xbf16>, vector<32x32xf32> -> vector<32x32xf32>
    %367 = vector.broadcast %301 : vector<1x32xf32> to vector<32x32xf32>
    %368 = arith.addf %366, %367 : vector<32x32xf32>
    %cst_176 = arith.constant 0.000000e+00 : f32
    %369 = vector.broadcast %cst_176 : f32 to vector<32x32xf32>
    %370 = arith.cmpf ogt, %368, %369 : vector<32x32xf32>
    %cst_177 = arith.constant 0.000000e+00 : f32
    %371 = vector.broadcast %cst_177 : f32 to vector<32x32xf32>
    %372 = arith.minimumf %368, %371 : vector<32x32xf32>
    %373 = math.exp %372 : vector<32x32xf32>
    %cst_178 = arith.constant 1.000000e+00 : f32
    %374 = vector.broadcast %cst_178 : f32 to vector<32x32xf32>
    %375 = arith.subf %373, %374 : vector<32x32xf32>
    %376 = arith.select %370, %368, %375 : vector<32x32xi1>, vector<32x32xf32>
    %cst_179 = arith.constant dense<0.000000e+00> : vector<32x36xf32>
    %377 = tpu.matmul %376, %302, %cst_179 {dimension_numbers = #tpu.dot_dimension_numbers<[1], [0], [0], [1], [0, 0, 1, 1], [], []>} : vector<32x32xf32>, vector<32x36xf32>, vector<32x36xf32> -> vector<32x36xf32>
    %378 = vector.broadcast %303 : vector<1x36xf32> to vector<32x36xf32>
    %379 = arith.addf %377, %378 : vector<32x36xf32>
    %380 = vector.extract_strided_slice %379 {offsets = [0, 0], sizes = [32, 4], strides = [1, 1]} : vector<32x36xf32> to vector<32x4xf32>
    %381 = vector.extract_strided_slice %379 {offsets = [0, 4], sizes = [32, 32], strides = [1, 1]} : vector<32x36xf32> to vector<32x32xf32>
    %382 = arith.truncf %381 : vector<32x32xf32> to vector<32x32xbf16>
    %383 = arith.mulf %380, %380 : vector<32x4xf32>
    %cst_180 = arith.constant dense<0.000000e+00> : vector<32xf32>
    %384 = vector.multi_reduction <add>, %383, %cst_180 [1] : vector<32x4xf32> to vector<32xf32>
    %385 = vector.shape_cast %384 : vector<32xf32> to vector<32x1xf32>
    %cst_181 = arith.constant 1.000000e+00 : f32
    %386 = vector.broadcast %cst_181 : f32 to vector<1x4xf32>
    %cst_182 = arith.constant dense<0.000000e+00> : vector<1x32xf32>
    %387 = tpu.matmul %386, %383, %cst_182 {dimension_numbers = #tpu.dot_dimension_numbers<[1], [1], [0], [0], [0, 0, 1, 0], [], []>} : vector<1x4xf32>, vector<32x4xf32>, vector<1x32xf32> -> vector<1x32xf32>
    %cst_183 = arith.constant dense<0.000000e+00> : vector<32x32xf32>
    %388 = tpu.matmul %380, %380, %cst_183 {dimension_numbers = #tpu.dot_dimension_numbers<[1], [1], [0], [0], [0, 0, 1, 0], [], []>} : vector<32x4xf32>, vector<32x4xf32>, vector<32x32xf32> -> vector<32x32xf32>
    %389 = vector.broadcast %385 : vector<32x1xf32> to vector<32x32xf32>
    %390 = vector.broadcast %387 : vector<1x32xf32> to vector<32x32xf32>
    %391 = arith.addf %389, %390 : vector<32x32xf32>
    %cst_184 = arith.constant 2.000000e+00 : f32
    %392 = vector.broadcast %cst_184 : f32 to vector<32x32xf32>
    %393 = arith.mulf %392, %388 : vector<32x32xf32>
    %394 = arith.subf %391, %393 : vector<32x32xf32>
    %cst_185 = arith.constant 0.000000e+00 : f32
    %395 = vector.broadcast %cst_185 : f32 to vector<32x32xf32>
    %396 = arith.maximumf %394, %395 : vector<32x32xf32>
    %397 = vector.broadcast %1 : vector<32x1xi32> to vector<32x32xi32>
    %398 = vector.broadcast %2 : vector<1x32xi32> to vector<32x32xi32>
    %399 = arith.cmpi eq, %397, %398 : vector<32x32xi32>
    %cst_186 = arith.constant 1.000000e+30 : f32
    %400 = vector.broadcast %cst_186 : f32 to vector<32x32xf32>
    %401 = arith.select %399, %396, %400 : vector<32x32xi1>, vector<32x32xf32>
    %402 = tpu.iota {dimensions = array<i32: 1>} : vector<32x32xi32>
    %cst_187 = arith.constant 1.000000e+00 : f32
    %403 = vector.broadcast %cst_187 : f32 to vector<32x32xf32>
    %404 = arith.addf %401, %403 : vector<32x32xf32>
    %405 = tpu.bitcast %404 : vector<32x32xf32> -> vector<32x32xi32>
    %c-32_i32_188 = arith.constant -32 : i32
    %406 = vector.broadcast %c-32_i32_188 : i32 to vector<32x32xi32>
    %407 = arith.andi %405, %406 : vector<32x32xi32>
    %408 = arith.ori %407, %402 : vector<32x32xi32>
    %409 = tpu.bitcast %408 : vector<32x32xi32> -> vector<32x32xf32>
    %cst_189 = arith.constant 0.000000e+00 : f32
    %410 = vector.broadcast %cst_189 : f32 to vector<32x32xf32>
    %cst_190 = arith.constant -1.000000e+30 : f32
    %411 = vector.broadcast %cst_190 : f32 to vector<32x32xf32>
    %cst_191 = arith.constant dense<0x7F800000> : vector<32xf32>
    %412 = vector.multi_reduction <minimumf>, %409, %cst_191 [1] : vector<32x32xf32> to vector<32xf32>
    %413 = vector.shape_cast %412 : vector<32xf32> to vector<32x1xf32>
    %414 = tpu.bitcast %413 : vector<32x1xf32> -> vector<32x1xi32>
    %c31_i32_192 = arith.constant 31 : i32
    %415 = vector.broadcast %c31_i32_192 : i32 to vector<32x1xi32>
    %416 = arith.andi %414, %415 : vector<32x1xi32>
    %c-32_i32_193 = arith.constant -32 : i32
    %417 = vector.broadcast %c-32_i32_193 : i32 to vector<32x1xi32>
    %418 = arith.andi %414, %417 : vector<32x1xi32>
    %419 = tpu.bitcast %418 : vector<32x1xi32> -> vector<32x1xf32>
    %cst_194 = arith.constant 1.000000e+00 : f32
    %420 = vector.broadcast %cst_194 : f32 to vector<32x1xf32>
    %421 = arith.subf %419, %420 : vector<32x1xf32>
    %cst_195 = arith.constant -1.000000e+01 : f32
    %422 = vector.broadcast %cst_195 : f32 to vector<32x1xf32>
    %423 = arith.mulf %422, %421 : vector<32x1xf32>
    %424 = math.exp %423 : vector<32x1xf32>
    %425 = vector.broadcast %416 : vector<32x1xi32> to vector<32x32xi32>
    %426 = arith.cmpi eq, %402, %425 : vector<32x32xi32>
    %cst_196 = arith.constant 0.000000e+00 : f32
    %427 = vector.shape_cast %424 : vector<32x1xf32> to vector<32x1xf32>
    %428 = vector.broadcast %427 : vector<32x1xf32> to vector<32x32xf32>
    %429 = vector.broadcast %cst_196 : f32 to vector<32x32xf32>
    %430 = arith.select %426, %428, %429 : vector<32x32xi1>, vector<32x32xf32>
    %431 = arith.addf %410, %430 : vector<32x32xf32>
    %432 = arith.truncf %430 : vector<32x32xf32> to vector<32x32xbf16>
    %cst_197 = arith.constant dense<0.000000e+00> : vector<32x32xf32>
    %433 = tpu.matmul %432, %382, %cst_197 {dimension_numbers = #tpu.dot_dimension_numbers<[1], [0], [0], [1], [0, 0, 1, 1], [], []>} : vector<32x32xbf16>, vector<32x32xbf16>, vector<32x32xf32> -> vector<32x32xf32>
    %434 = arith.maximumf %411, %433 : vector<32x32xf32>
    %cst_198 = arith.constant 3.000000e+38 : f32
    %435 = vector.broadcast %cst_198 : f32 to vector<32x32xf32>
    %436 = arith.select %426, %435, %409 : vector<32x32xi1>, vector<32x32xf32>
    %cst_199 = arith.constant dense<0x7F800000> : vector<32xf32>
    %437 = vector.multi_reduction <minimumf>, %436, %cst_199 [1] : vector<32x32xf32> to vector<32xf32>
    %438 = vector.shape_cast %437 : vector<32xf32> to vector<32x1xf32>
    %439 = tpu.bitcast %438 : vector<32x1xf32> -> vector<32x1xi32>
    %c31_i32_200 = arith.constant 31 : i32
    %440 = vector.broadcast %c31_i32_200 : i32 to vector<32x1xi32>
    %441 = arith.andi %439, %440 : vector<32x1xi32>
    %c-32_i32_201 = arith.constant -32 : i32
    %442 = vector.broadcast %c-32_i32_201 : i32 to vector<32x1xi32>
    %443 = arith.andi %439, %442 : vector<32x1xi32>
    %444 = tpu.bitcast %443 : vector<32x1xi32> -> vector<32x1xf32>
    %cst_202 = arith.constant 1.000000e+00 : f32
    %445 = vector.broadcast %cst_202 : f32 to vector<32x1xf32>
    %446 = arith.subf %444, %445 : vector<32x1xf32>
    %cst_203 = arith.constant -1.000000e+01 : f32
    %447 = vector.broadcast %cst_203 : f32 to vector<32x1xf32>
    %448 = arith.mulf %447, %446 : vector<32x1xf32>
    %449 = math.exp %448 : vector<32x1xf32>
    %450 = vector.broadcast %441 : vector<32x1xi32> to vector<32x32xi32>
    %451 = arith.cmpi eq, %402, %450 : vector<32x32xi32>
    %cst_204 = arith.constant 0.000000e+00 : f32
    %452 = vector.shape_cast %449 : vector<32x1xf32> to vector<32x1xf32>
    %453 = vector.broadcast %452 : vector<32x1xf32> to vector<32x32xf32>
    %454 = vector.broadcast %cst_204 : f32 to vector<32x32xf32>
    %455 = arith.select %451, %453, %454 : vector<32x32xi1>, vector<32x32xf32>
    %456 = arith.addf %431, %455 : vector<32x32xf32>
    %457 = arith.truncf %455 : vector<32x32xf32> to vector<32x32xbf16>
    %cst_205 = arith.constant dense<0.000000e+00> : vector<32x32xf32>
    %458 = tpu.matmul %457, %382, %cst_205 {dimension_numbers = #tpu.dot_dimension_numbers<[1], [0], [0], [1], [0, 0, 1, 1], [], []>} : vector<32x32xbf16>, vector<32x32xbf16>, vector<32x32xf32> -> vector<32x32xf32>
    %459 = arith.maximumf %434, %458 : vector<32x32xf32>
    %cst_206 = arith.constant 3.000000e+38 : f32
    %460 = vector.broadcast %cst_206 : f32 to vector<32x32xf32>
    %461 = arith.select %451, %460, %436 : vector<32x32xi1>, vector<32x32xf32>
    %cst_207 = arith.constant dense<0x7F800000> : vector<32xf32>
    %462 = vector.multi_reduction <minimumf>, %461, %cst_207 [1] : vector<32x32xf32> to vector<32xf32>
    %463 = vector.shape_cast %462 : vector<32xf32> to vector<32x1xf32>
    %464 = tpu.bitcast %463 : vector<32x1xf32> -> vector<32x1xi32>
    %c31_i32_208 = arith.constant 31 : i32
    %465 = vector.broadcast %c31_i32_208 : i32 to vector<32x1xi32>
    %466 = arith.andi %464, %465 : vector<32x1xi32>
    %c-32_i32_209 = arith.constant -32 : i32
    %467 = vector.broadcast %c-32_i32_209 : i32 to vector<32x1xi32>
    %468 = arith.andi %464, %467 : vector<32x1xi32>
    %469 = tpu.bitcast %468 : vector<32x1xi32> -> vector<32x1xf32>
    %cst_210 = arith.constant 1.000000e+00 : f32
    %470 = vector.broadcast %cst_210 : f32 to vector<32x1xf32>
    %471 = arith.subf %469, %470 : vector<32x1xf32>
    %cst_211 = arith.constant -1.000000e+01 : f32
    %472 = vector.broadcast %cst_211 : f32 to vector<32x1xf32>
    %473 = arith.mulf %472, %471 : vector<32x1xf32>
    %474 = math.exp %473 : vector<32x1xf32>
    %475 = vector.broadcast %466 : vector<32x1xi32> to vector<32x32xi32>
    %476 = arith.cmpi eq, %402, %475 : vector<32x32xi32>
    %cst_212 = arith.constant 0.000000e+00 : f32
    %477 = vector.shape_cast %474 : vector<32x1xf32> to vector<32x1xf32>
    %478 = vector.broadcast %477 : vector<32x1xf32> to vector<32x32xf32>
    %479 = vector.broadcast %cst_212 : f32 to vector<32x32xf32>
    %480 = arith.select %476, %478, %479 : vector<32x32xi1>, vector<32x32xf32>
    %481 = arith.addf %456, %480 : vector<32x32xf32>
    %482 = arith.truncf %480 : vector<32x32xf32> to vector<32x32xbf16>
    %cst_213 = arith.constant dense<0.000000e+00> : vector<32x32xf32>
    %483 = tpu.matmul %482, %382, %cst_213 {dimension_numbers = #tpu.dot_dimension_numbers<[1], [0], [0], [1], [0, 0, 1, 1], [], []>} : vector<32x32xbf16>, vector<32x32xbf16>, vector<32x32xf32> -> vector<32x32xf32>
    %484 = arith.maximumf %459, %483 : vector<32x32xf32>
    %cst_214 = arith.constant 3.000000e+38 : f32
    %485 = vector.broadcast %cst_214 : f32 to vector<32x32xf32>
    %486 = arith.select %476, %485, %461 : vector<32x32xi1>, vector<32x32xf32>
    %cst_215 = arith.constant dense<0x7F800000> : vector<32xf32>
    %487 = vector.multi_reduction <minimumf>, %486, %cst_215 [1] : vector<32x32xf32> to vector<32xf32>
    %488 = vector.shape_cast %487 : vector<32xf32> to vector<32x1xf32>
    %489 = tpu.bitcast %488 : vector<32x1xf32> -> vector<32x1xi32>
    %c31_i32_216 = arith.constant 31 : i32
    %490 = vector.broadcast %c31_i32_216 : i32 to vector<32x1xi32>
    %491 = arith.andi %489, %490 : vector<32x1xi32>
    %c-32_i32_217 = arith.constant -32 : i32
    %492 = vector.broadcast %c-32_i32_217 : i32 to vector<32x1xi32>
    %493 = arith.andi %489, %492 : vector<32x1xi32>
    %494 = tpu.bitcast %493 : vector<32x1xi32> -> vector<32x1xf32>
    %cst_218 = arith.constant 1.000000e+00 : f32
    %495 = vector.broadcast %cst_218 : f32 to vector<32x1xf32>
    %496 = arith.subf %494, %495 : vector<32x1xf32>
    %cst_219 = arith.constant -1.000000e+01 : f32
    %497 = vector.broadcast %cst_219 : f32 to vector<32x1xf32>
    %498 = arith.mulf %497, %496 : vector<32x1xf32>
    %499 = math.exp %498 : vector<32x1xf32>
    %500 = vector.broadcast %491 : vector<32x1xi32> to vector<32x32xi32>
    %501 = arith.cmpi eq, %402, %500 : vector<32x32xi32>
    %cst_220 = arith.constant 0.000000e+00 : f32
    %502 = vector.shape_cast %499 : vector<32x1xf32> to vector<32x1xf32>
    %503 = vector.broadcast %502 : vector<32x1xf32> to vector<32x32xf32>
    %504 = vector.broadcast %cst_220 : f32 to vector<32x32xf32>
    %505 = arith.select %501, %503, %504 : vector<32x32xi1>, vector<32x32xf32>
    %506 = arith.addf %481, %505 : vector<32x32xf32>
    %507 = arith.truncf %505 : vector<32x32xf32> to vector<32x32xbf16>
    %cst_221 = arith.constant dense<0.000000e+00> : vector<32x32xf32>
    %508 = tpu.matmul %507, %382, %cst_221 {dimension_numbers = #tpu.dot_dimension_numbers<[1], [0], [0], [1], [0, 0, 1, 1], [], []>} : vector<32x32xbf16>, vector<32x32xbf16>, vector<32x32xf32> -> vector<32x32xf32>
    %509 = arith.maximumf %484, %508 : vector<32x32xf32>
    %510 = arith.truncf %506 : vector<32x32xf32> to vector<32x32xbf16>
    %cst_222 = arith.constant dense<0.000000e+00> : vector<32x32xf32>
    %511 = tpu.matmul %510, %382, %cst_222 {dimension_numbers = #tpu.dot_dimension_numbers<[1], [0], [0], [1], [0, 0, 1, 1], [], []>} : vector<32x32xbf16>, vector<32x32xbf16>, vector<32x32xf32> -> vector<32x32xf32>
    %cst_223 = arith.constant 2.500000e-01 : f32
    %512 = vector.broadcast %cst_223 : f32 to vector<32x32xf32>
    %513 = arith.mulf %511, %512 : vector<32x32xf32>
    %514 = vector.extract_strided_slice %304 {offsets = [0, 0], sizes = [32, 64], strides = [1, 1]} : vector<96x64xf32> to vector<32x64xf32>
    %515 = arith.truncf %376 : vector<32x32xf32> to vector<32x32xbf16>
    %516 = arith.truncf %514 : vector<32x64xf32> to vector<32x64xbf16>
    %cst_224 = arith.constant dense<0.000000e+00> : vector<32x64xf32>
    %517 = tpu.matmul %515, %516, %cst_224 {dimension_numbers = #tpu.dot_dimension_numbers<[1], [0], [0], [1], [0, 0, 1, 1], [], []>} : vector<32x32xbf16>, vector<32x64xbf16>, vector<32x64xf32> -> vector<32x64xf32>
    %518 = vector.extract_strided_slice %304 {offsets = [32, 0], sizes = [32, 64], strides = [1, 1]} : vector<96x64xf32> to vector<32x64xf32>
    %519 = arith.truncf %513 : vector<32x32xf32> to vector<32x32xbf16>
    %520 = arith.truncf %518 : vector<32x64xf32> to vector<32x64xbf16>
    %cst_225 = arith.constant dense<0.000000e+00> : vector<32x64xf32>
    %521 = tpu.matmul %519, %520, %cst_225 {dimension_numbers = #tpu.dot_dimension_numbers<[1], [0], [0], [1], [0, 0, 1, 1], [], []>} : vector<32x32xbf16>, vector<32x64xbf16>, vector<32x64xf32> -> vector<32x64xf32>
    %522 = arith.addf %517, %521 : vector<32x64xf32>
    %523 = vector.extract_strided_slice %304 {offsets = [64, 0], sizes = [32, 64], strides = [1, 1]} : vector<96x64xf32> to vector<32x64xf32>
    %524 = arith.truncf %509 : vector<32x32xf32> to vector<32x32xbf16>
    %525 = arith.truncf %523 : vector<32x64xf32> to vector<32x64xbf16>
    %cst_226 = arith.constant dense<0.000000e+00> : vector<32x64xf32>
    %526 = tpu.matmul %524, %525, %cst_226 {dimension_numbers = #tpu.dot_dimension_numbers<[1], [0], [0], [1], [0, 0, 1, 1], [], []>} : vector<32x32xbf16>, vector<32x64xbf16>, vector<32x64xf32> -> vector<32x64xf32>
    %527 = arith.addf %522, %526 : vector<32x64xf32>
    %528 = vector.broadcast %305 : vector<1x64xf32> to vector<32x64xf32>
    %529 = arith.addf %527, %528 : vector<32x64xf32>
    %cst_227 = arith.constant dense<0.000000e+00> : vector<1x64xf32>
    %530 = tpu.matmul %0, %529, %cst_227 {dimension_numbers = #tpu.dot_dimension_numbers<[1], [0], [0], [1], [0, 0, 1, 1], [], []>} : vector<1x32xf32>, vector<32x64xf32>, vector<1x64xf32> -> vector<1x64xf32>
    %cst_228 = arith.constant 3.125000e-02 : f32
    %531 = vector.broadcast %cst_228 : f32 to vector<1x64xf32>
    %532 = arith.mulf %530, %531 : vector<1x64xf32>
    %533 = vector.broadcast %532 : vector<1x64xf32> to vector<32x64xf32>
    %534 = arith.subf %529, %533 : vector<32x64xf32>
    %535 = arith.mulf %534, %534 : vector<32x64xf32>
    %cst_229 = arith.constant dense<0.000000e+00> : vector<1x64xf32>
    %536 = tpu.matmul %0, %535, %cst_229 {dimension_numbers = #tpu.dot_dimension_numbers<[1], [0], [0], [1], [0, 0, 1, 1], [], []>} : vector<1x32xf32>, vector<32x64xf32>, vector<1x64xf32> -> vector<1x64xf32>
    %cst_230 = arith.constant 3.125000e-02 : f32
    %537 = vector.broadcast %cst_230 : f32 to vector<1x64xf32>
    %538 = arith.mulf %536, %537 : vector<1x64xf32>
    %cst_231 = arith.constant 9.99999974E-6 : f32
    %539 = vector.broadcast %cst_231 : f32 to vector<1x64xf32>
    %540 = arith.addf %538, %539 : vector<1x64xf32>
    %541 = math.rsqrt %540 : vector<1x64xf32>
    %542 = vector.broadcast %541 : vector<1x64xf32> to vector<32x64xf32>
    %543 = arith.mulf %534, %542 : vector<32x64xf32>
    %544 = vector.broadcast %306 : vector<1x64xf32> to vector<32x64xf32>
    %545 = arith.mulf %543, %544 : vector<32x64xf32>
    %546 = vector.broadcast %307 : vector<1x64xf32> to vector<32x64xf32>
    %547 = arith.addf %545, %546 : vector<32x64xf32>
    %548 = arith.truncf %547 : vector<32x64xf32> to vector<32x64xbf16>
    %549 = arith.truncf %308 : vector<64x16xf32> to vector<64x16xbf16>
    %cst_232 = arith.constant dense<0.000000e+00> : vector<32x16xf32>
    %550 = tpu.matmul %548, %549, %cst_232 {dimension_numbers = #tpu.dot_dimension_numbers<[1], [0], [0], [1], [0, 0, 1, 1], [], []>} : vector<32x64xbf16>, vector<64x16xbf16>, vector<32x16xf32> -> vector<32x16xf32>
    %551 = vector.broadcast %309 : vector<1x16xf32> to vector<32x16xf32>
    %552 = arith.addf %550, %551 : vector<32x16xf32>
    %cst_233 = arith.constant 0.000000e+00 : f32
    %553 = vector.broadcast %cst_233 : f32 to vector<32x16xf32>
    %554 = arith.cmpf ogt, %552, %553 : vector<32x16xf32>
    %cst_234 = arith.constant 0.000000e+00 : f32
    %555 = vector.broadcast %cst_234 : f32 to vector<32x16xf32>
    %556 = arith.minimumf %552, %555 : vector<32x16xf32>
    %557 = math.exp %556 : vector<32x16xf32>
    %cst_235 = arith.constant 1.000000e+00 : f32
    %558 = vector.broadcast %cst_235 : f32 to vector<32x16xf32>
    %559 = arith.subf %557, %558 : vector<32x16xf32>
    %560 = arith.select %554, %552, %559 : vector<32x16xi1>, vector<32x16xf32>
    %c0_236 = arith.constant 0 : index
    %c0_237 = arith.constant 0 : index
    %561 = vector.load %arg40[%c0_236, %c0_237] : memref<32x32xf32, #tpu.memory_space<vmem>>, vector<32x32xf32>
    %c0_238 = arith.constant 0 : index
    %c0_239 = arith.constant 0 : index
    %562 = vector.load %arg41[%c0_238, %c0_239] : memref<1x32xf32, #tpu.memory_space<vmem>>, vector<1x32xf32>
    %563 = vector.extract_strided_slice %561 {offsets = [0, 0], sizes = [16, 32], strides = [1, 1]} : vector<32x32xf32> to vector<16x32xf32>
    %564 = arith.truncf %293 : vector<32x16xf32> to vector<32x16xbf16>
    %565 = arith.truncf %563 : vector<16x32xf32> to vector<16x32xbf16>
    %cst_240 = arith.constant dense<0.000000e+00> : vector<32x32xf32>
    %566 = tpu.matmul %564, %565, %cst_240 {dimension_numbers = #tpu.dot_dimension_numbers<[1], [0], [0], [1], [0, 0, 1, 1], [], []>} : vector<32x16xbf16>, vector<16x32xbf16>, vector<32x32xf32> -> vector<32x32xf32>
    %567 = vector.broadcast %562 : vector<1x32xf32> to vector<32x32xf32>
    %568 = arith.addf %567, %566 : vector<32x32xf32>
    %569 = vector.extract_strided_slice %561 {offsets = [16, 0], sizes = [16, 32], strides = [1, 1]} : vector<32x32xf32> to vector<16x32xf32>
    %570 = arith.truncf %560 : vector<32x16xf32> to vector<32x16xbf16>
    %571 = arith.truncf %569 : vector<16x32xf32> to vector<16x32xbf16>
    %cst_241 = arith.constant dense<0.000000e+00> : vector<32x32xf32>
    %572 = tpu.matmul %570, %571, %cst_241 {dimension_numbers = #tpu.dot_dimension_numbers<[1], [0], [0], [1], [0, 0, 1, 1], [], []>} : vector<32x16xbf16>, vector<16x32xbf16>, vector<32x32xf32> -> vector<32x32xf32>
    %573 = arith.addf %568, %572 : vector<32x32xf32>
    %cst_242 = arith.constant 0.000000e+00 : f32
    %574 = vector.broadcast %cst_242 : f32 to vector<32x32xf32>
    %575 = arith.cmpf ogt, %573, %574 : vector<32x32xf32>
    %cst_243 = arith.constant 0.000000e+00 : f32
    %576 = vector.broadcast %cst_243 : f32 to vector<32x32xf32>
    %577 = arith.minimumf %573, %576 : vector<32x32xf32>
    %578 = math.exp %577 : vector<32x32xf32>
    %cst_244 = arith.constant 1.000000e+00 : f32
    %579 = vector.broadcast %cst_244 : f32 to vector<32x32xf32>
    %580 = arith.subf %578, %579 : vector<32x32xf32>
    %581 = arith.select %575, %573, %580 : vector<32x32xi1>, vector<32x32xf32>
    %c0_245 = arith.constant 0 : index
    %c0_246 = arith.constant 0 : index
    %582 = vector.load %arg42[%c0_245, %c0_246] : memref<32x128xf32, #tpu.memory_space<vmem>>, vector<32x128xf32>
    %583 = arith.truncf %581 : vector<32x32xf32> to vector<32x32xbf16>
    %584 = arith.truncf %582 : vector<32x128xf32> to vector<32x128xbf16>
    %cst_247 = arith.constant dense<0.000000e+00> : vector<32x128xf32>
    %585 = tpu.matmul %583, %584, %cst_247 {dimension_numbers = #tpu.dot_dimension_numbers<[1], [0], [0], [1], [0, 0, 1, 1], [], []>} : vector<32x32xbf16>, vector<32x128xbf16>, vector<32x128xf32> -> vector<32x128xf32>
    %c0_248 = arith.constant 0 : index
    %c0_249 = arith.constant 0 : index
    %586 = vector.load %arg43[%c0_248, %c0_249] : memref<1x128xf32, #tpu.memory_space<vmem>>, vector<1x128xf32>
    %587 = vector.broadcast %586 : vector<1x128xf32> to vector<32x128xf32>
    %588 = arith.addf %585, %587 : vector<32x128xf32>
    %589 = tpu.iota {dimensions = array<i32: 1>} : vector<32x128xi32>
    %cst_250 = arith.constant 0.000000e+00 : f32
    %590 = vector.broadcast %cst_250 : f32 to vector<32x128xf32>
    %591 = arith.subf %590, %588 : vector<32x128xf32>
    %592 = math.exp %591 : vector<32x128xf32>
    %cst_251 = arith.constant 1.000000e+00 : f32
    %593 = vector.broadcast %cst_251 : f32 to vector<32x128xf32>
    %594 = arith.addf %593, %592 : vector<32x128xf32>
    %cst_252 = arith.constant 1.000000e+00 : f32
    %595 = vector.broadcast %cst_252 : f32 to vector<32x128xf32>
    %596 = arith.divf %595, %594 : vector<32x128xf32>
    %c0_i32 = arith.constant 0 : i32
    %597 = vector.broadcast %c0_i32 : i32 to vector<32x128xi32>
    %598 = arith.cmpi eq, %589, %597 : vector<32x128xi32>
    %c9_i32 = arith.constant 9 : i32
    %599 = vector.broadcast %c9_i32 : i32 to vector<32x128xi32>
    %600 = arith.cmpi eq, %589, %599 : vector<32x128xi32>
    %601 = arith.ori %598, %600 : vector<32x128xi1>
    %602 = arith.select %601, %596, %588 : vector<32x128xi1>, vector<32x128xf32>
    %c0_253 = arith.constant 0 : index
    %c0_254 = arith.constant 0 : index
    %603 = vector.load %arg44[%c0_253, %c0_254] : memref<32x128xf32, #tpu.memory_space<vmem>>, vector<32x128xf32>
    tpu.vector_store %arg44[%c0_253, %c0_254], %602 {strides = array<i32>} : memref<32x128xf32, #tpu.memory_space<vmem>>, vector<32x128xf32>,
    return
  }
}

</mosaic_0001>

<llo_original>
// kernel: cdcnet_forward.1
$region0: #{cdcnet_forward.1}
  #allocation0 [shape = 'u32[]', space=smem, size = 0x4, offset = 0x4, fixed_abs, tag = 'smem constant byte address 0x4 - core index']
  #allocation1 [shape = 'u32[144,128]{1,0:T(1,128)}', space=vmem, size = 0x12000, scoped, tag = 'internal scratch']
  %s0 = inlined_call_operand.smem [shape: u32[45], index: -1, kind: input, shape index: {}]
  %s1 = sld [smem:[%s0]]
  %s2 = scalar_lea.smem %s0, 1
  %s3 = sld [smem:[%s2]]
  %s4 = scalar_lea.smem %s0, 2
  %s5 = sld [smem:[%s4]]
  %s6 = scalar_lea.smem %s0, 3
  %s7 = sld [smem:[%s6]]
  %s8 = scalar_lea.smem %s0, 4
  %s9 = sld [smem:[%s8]]
  %s10 = scalar_lea.smem %s0, 5
  %s11 = sld [smem:[%s10]]
  %s12 = scalar_lea.smem %s0, 6
  %s13 = sld [smem:[%s12]]
  %s14 = scalar_lea.smem %s0, 7
  %s15 = sld [smem:[%s14]]
  %s16 = scalar_lea.smem %s0, 8
  %s17 = sld [smem:[%s16]]
  %s18 = scalar_lea.smem %s0, 9
  %s19 = sld [smem:[%s18]]
  %s20 = scalar_lea.smem %s0, 10
  %s21 = sld [smem:[%s20]]
  %s22 = scalar_lea.smem %s0, 11
  %s23 = sld [smem:[%s22]]
  %s24 = scalar_lea.smem %s0, 12
  %s25 = sld [smem:[%s24]]
  %s26 = scalar_lea.smem %s0, 13
  %s27 = sld [smem:[%s26]]
  %s28 = scalar_lea.smem %s0, 14
  %s29 = sld [smem:[%s28]]
  %s30 = scalar_lea.smem %s0, 15
  %s31 = sld [smem:[%s30]]
  %s32 = scalar_lea.smem %s0, 16
  %s33 = sld [smem:[%s32]]
  %s34 = scalar_lea.smem %s0, 17
  %s35 = sld [smem:[%s34]]
  %s36 = scalar_lea.smem %s0, 18
  %s37 = sld [smem:[%s36]]
  %s38 = scalar_lea.smem %s0, 19
  %s39 = sld [smem:[%s38]]
  %s40 = scalar_lea.smem %s0, 20
  %s41 = sld [smem:[%s40]]
  %s42 = scalar_lea.smem %s0, 21
  %s43 = sld [smem:[%s42]]
  %s44 = scalar_lea.smem %s0, 22
  %s45 = sld [smem:[%s44]]
  %s46 = scalar_lea.smem %s0, 23
  %s47 = sld [smem:[%s46]]
  %s48 = scalar_lea.smem %s0, 24
  %s49 = sld [smem:[%s48]]
  %s50 = scalar_lea.smem %s0, 25
  %s51 = sld [smem:[%s50]]
  %s52 = scalar_lea.smem %s0, 26
  %s53 = sld [smem:[%s52]]
  %s54 = scalar_lea.smem %s0, 27
  %s55 = sld [smem:[%s54]]
  %s56 = scalar_lea.smem %s0, 28
  %s57 = sld [smem:[%s56]]
  %s58 = scalar_lea.smem %s0, 29
  %s59 = sld [smem:[%s58]]
  %s60 = scalar_lea.smem %s0, 30
  %s61 = sld [smem:[%s60]]
  %s62 = scalar_lea.smem %s0, 31
  %s63 = sld [smem:[%s62]]
  %s64 = scalar_lea.smem %s0, 32
  %s65 = sld [smem:[%s64]]
  %s66 = scalar_lea.smem %s0, 33
  %s67 = sld [smem:[%s66]]
  %s68 = scalar_lea.smem %s0, 34
  %s69 = sld [smem:[%s68]]
  %s70 = scalar_lea.smem %s0, 35
  %s71 = sld [smem:[%s70]]
  %s72 = scalar_lea.smem %s0, 36
  %s73 = sld [smem:[%s72]]
  %s74 = scalar_lea.smem %s0, 37
  %s75 = sld [smem:[%s74]]
  %s76 = scalar_lea.smem %s0, 38
  %s77 = sld [smem:[%s76]]
  %s78 = scalar_lea.smem %s0, 39
  %s79 = sld [smem:[%s78]]
  %s80 = scalar_lea.smem %s0, 40
  %s81 = sld [smem:[%s80]]
  %s82 = scalar_lea.smem %s0, 41
  %s83 = sld [smem:[%s82]]
  %s84 = scalar_lea.smem %s0, 42
  %s85 = sld [smem:[%s84]]
  %s86 = scalar_lea.smem %s0, 43
  %s87 = sld [smem:[%s86]]
  %s88 = scalar_lea.smem %s0, 44
  %s89 = sld [smem:[%s88]]
  %s90 = sld [smem:[#allocation0]]
  $region186: #{cdcnet_forward.1} parent=0
    _
  %s92 = ssub.s32 1, %s90
  %s93 = scalar_select 0, %s92, %s90
  // Predicated region
  $region2: #{cdcnet_forward.1} parent=0 // pred_check
    _
  $region3: #{cdcnet_forward.1} parent=0 // pred_check_branch
    %95 = sbr.rel (0) target = $region5
  $region4: #{cdcnet_forward.1} parent=0 // pred_region
    _
  $region5: #{cdcnet_forward.1} parent=0 // pred_fallthru
    _
  // Predicated region
  $region6: #{cdcnet_forward.1} parent=0 // pred_check
    _
  $region7: #{cdcnet_forward.1} parent=0 // pred_check_branch
    %97 = sbr.rel (0) target = $region9
  $region8: #{cdcnet_forward.1} parent=0 // pred_region
    _
  $region9: #{cdcnet_forward.1} parent=0 // pred_fallthru
    _
  // Predicated region
  $region10: #{cdcnet_forward.1} parent=0 // pred_check
    _
  $region11: #{cdcnet_forward.1} parent=0 // pred_check_branch
    %99 = sbr.rel (0) target = $region13
  $region12: #{cdcnet_forward.1} parent=0 // pred_region
    _
  $region13: #{cdcnet_forward.1} parent=0 // pred_fallthru
    _
  // Predicated region
  $region14: #{cdcnet_forward.1} parent=0 // pred_check
    _
  $region15: #{cdcnet_forward.1} parent=0 // pred_check_branch
    %101 = sbr.rel (0) target = $region17
  $region16: #{cdcnet_forward.1} parent=0 // pred_region
    _
  $region17: #{cdcnet_forward.1} parent=0 // pred_fallthru
    _
  // Predicated region
  $region18: #{cdcnet_forward.1} parent=0 // pred_check
    _
  $region19: #{cdcnet_forward.1} parent=0 // pred_check_branch
    %103 = sbr.rel (0) target = $region21
  $region20: #{cdcnet_forward.1} parent=0 // pred_region
    _
  $region21: #{cdcnet_forward.1} parent=0 // pred_fallthru
    _
  // Predicated region
  $region22: #{cdcnet_forward.1} parent=0 // pred_check
    _
  $region23: #{cdcnet_forward.1} parent=0 // pred_check_branch
    %105 = sbr.rel (0) target = $region25
  $region24: #{cdcnet_forward.1} parent=0 // pred_region
    _
  $region25: #{cdcnet_forward.1} parent=0 // pred_fallthru
    _
  // Predicated region
  $region26: #{cdcnet_forward.1} parent=0 // pred_check
    _
  $region27: #{cdcnet_forward.1} parent=0 // pred_check_branch
    %107 = sbr.rel (0) target = $region29
  $region28: #{cdcnet_forward.1} parent=0 // pred_region
    _
  $region29: #{cdcnet_forward.1} parent=0 // pred_fallthru
    _
  // Predicated region
  $region30: #{cdcnet_forward.1} parent=0 // pred_check
    _
  $region31: #{cdcnet_forward.1} parent=0 // pred_check_branch
    %109 = sbr.rel (0) target = $region33
  $region32: #{cdcnet_forward.1} parent=0 // pred_region
    _
  $region33: #{cdcnet_forward.1} parent=0 // pred_fallthru
    _
  // Predicated region
  $region34: #{cdcnet_forward.1} parent=0 // pred_check
    _
  $region35: #{cdcnet_forward.1} parent=0 // pred_check_branch
    %111 = sbr.rel (0) target = $region37
  $region36: #{cdcnet_forward.1} parent=0 // pred_region
    _
  $region37: #{cdcnet_forward.1} parent=0 // pred_fallthru
    _
  // Predicated region
  $region38: #{cdcnet_forward.1} parent=0 // pred_check
    _
  $region39: #{cdcnet_forward.1} parent=0 // pred_check_branch
    %113 = sbr.rel (0) target = $region41
  $region40: #{cdcnet_forward.1} parent=0 // pred_region
    _
  $region41: #{cdcnet_forward.1} parent=0 // pred_fallthru
    _
  // Predicated region
  $region42: #{cdcnet_forward.1} parent=0 // pred_check
    _
  $region43: #{cdcnet_forward.1} parent=0 // pred_check_branch
    %115 = sbr.rel (0) target = $region45
  $region44: #{cdcnet_forward.1} parent=0 // pred_region
    _
  $region45: #{cdcnet_forward.1} parent=0 // pred_fallthru
    _
  // Predicated region
  $region46: #{cdcnet_forward.1} parent=0 // pred_check
    _
  $region47: #{cdcnet_forward.1} parent=0 // pred_check_branch
    %117 = sbr.rel (0) target = $region49
  $region48: #{cdcnet_forward.1} parent=0 // pred_region
    _
  $region49: #{cdcnet_forward.1} parent=0 // pred_fallthru
    _
  // Predicated region
  $region50: #{cdcnet_forward.1} parent=0 // pred_check
    _
  $region51: #{cdcnet_forward.1} parent=0 // pred_check_branch
    %119 = sbr.rel (0) target = $region53
  $region52: #{cdcnet_forward.1} parent=0 // pred_region
    _
  $region53: #{cdcnet_forward.1} parent=0 // pred_fallthru
    _
  // Predicated region
  $region54: #{cdcnet_forward.1} parent=0 // pred_check
    _
  $region55: #{cdcnet_forward.1} parent=0 // pred_check_branch
    %121 = sbr.rel (0) target = $region57
  $region56: #{cdcnet_forward.1} parent=0 // pred_region
    _
  $region57: #{cdcnet_forward.1} parent=0 // pred_fallthru
    _
  // Predicated region
  $region58: #{cdcnet_forward.1} parent=0 // pred_check
    _
  $region59: #{cdcnet_forward.1} parent=0 // pred_check_branch
    %123 = sbr.rel (0) target = $region61
  $region60: #{cdcnet_forward.1} parent=0 // pred_region
    _
  $region61: #{cdcnet_forward.1} parent=0 // pred_fallthru
    _
  // Predicated region
  $region62: #{cdcnet_forward.1} parent=0 // pred_check
    _
  $region63: #{cdcnet_forward.1} parent=0 // pred_check_branch
    %125 = sbr.rel (0) target = $region65
  $region64: #{cdcnet_forward.1} parent=0 // pred_region
    _
  $region65: #{cdcnet_forward.1} parent=0 // pred_fallthru
    _
  // Predicated region
  $region66: #{cdcnet_forward.1} parent=0 // pred_check
    _
  $region67: #{cdcnet_forward.1} parent=0 // pred_check_branch
    %127 = sbr.rel (0) target = $region69
  $region68: #{cdcnet_forward.1} parent=0 // pred_region
    _
  $region69: #{cdcnet_forward.1} parent=0 // pred_fallthru
    _
  // Predicated region
  $region70: #{cdcnet_forward.1} parent=0 // pred_check
    _
  $region71: #{cdcnet_forward.1} parent=0 // pred_check_branch
    %129 = sbr.rel (0) target = $region73
  $region72: #{cdcnet_forward.1} parent=0 // pred_region
    _
  $region73: #{cdcnet_forward.1} parent=0 // pred_fallthru
    _
  // Predicated region
  $region74: #{cdcnet_forward.1} parent=0 // pred_check
    _
  $region75: #{cdcnet_forward.1} parent=0 // pred_check_branch
    %131 = sbr.rel (0) target = $region77
  $region76: #{cdcnet_forward.1} parent=0 // pred_region
    _
  $region77: #{cdcnet_forward.1} parent=0 // pred_fallthru
    _
  // Predicated region
  $region78: #{cdcnet_forward.1} parent=0 // pred_check
    _
  $region79: #{cdcnet_forward.1} parent=0 // pred_check_branch
    %133 = sbr.rel (0) target = $region81
  $region80: #{cdcnet_forward.1} parent=0 // pred_region
    _
  $region81: #{cdcnet_forward.1} parent=0 // pred_fallthru
    _
  // Predicated region
  $region82: #{cdcnet_forward.1} parent=0 // pred_check
    _
  $region83: #{cdcnet_forward.1} parent=0 // pred_check_branch
    %135 = sbr.rel (0) target = $region85
  $region84: #{cdcnet_forward.1} parent=0 // pred_region
    _
  $region85: #{cdcnet_forward.1} parent=0 // pred_fallthru
    _
  // Predicated region
  $region86: #{cdcnet_forward.1} parent=0 // pred_check
    _
  $region87: #{cdcnet_forward.1} parent=0 // pred_check_branch
    %137 = sbr.rel (0) target = $region89
  $region88: #{cdcnet_forward.1} parent=0 // pred_region
    _
  $region89: #{cdcnet_forward.1} parent=0 // pred_fallthru
    _
  // Predicated region
  $region90: #{cdcnet_forward.1} parent=0 // pred_check
    _
  $region91: #{cdcnet_forward.1} parent=0 // pred_check_branch
    %139 = sbr.rel (0) target = $region93
  $region92: #{cdcnet_forward.1} parent=0 // pred_region
    _
  $region93: #{cdcnet_forward.1} parent=0 // pred_fallthru
    _
  // Predicated region
  $region94: #{cdcnet_forward.1} parent=0 // pred_check
    _
  $region95: #{cdcnet_forward.1} parent=0 // pred_check_branch
    %141 = sbr.rel (0) target = $region97
  $region96: #{cdcnet_forward.1} parent=0 // pred_region
    _
  $region97: #{cdcnet_forward.1} parent=0 // pred_fallthru
    _
  // Predicated region
  $region98: #{cdcnet_forward.1} parent=0 // pred_check
    _
  $region99: #{cdcnet_forward.1} parent=0 // pred_check_branch
    %143 = sbr.rel (0) target = $region101
  $region100: #{cdcnet_forward.1} parent=0 // pred_region
    _
  $region101: #{cdcnet_forward.1} parent=0 // pred_fallthru
    _
  // Predicated region
  $region102: #{cdcnet_forward.1} parent=0 // pred_check
    _
  $region103: #{cdcnet_forward.1} parent=0 // pred_check_branch
    %145 = sbr.rel (0) target = $region105
  $region104: #{cdcnet_forward.1} parent=0 // pred_region
    _
  $region105: #{cdcnet_forward.1} parent=0 // pred_fallthru
    _
  // Predicated region
  $region106: #{cdcnet_forward.1} parent=0 // pred_check
    _
  $region107: #{cdcnet_forward.1} parent=0 // pred_check_branch
    %147 = sbr.rel (0) target = $region109
  $region108: #{cdcnet_forward.1} parent=0 // pred_region
    _
  $region109: #{cdcnet_forward.1} parent=0 // pred_fallthru
    _
  // Predicated region
  $region110: #{cdcnet_forward.1} parent=0 // pred_check
    _
  $region111: #{cdcnet_forward.1} parent=0 // pred_check_branch
    %149 = sbr.rel (0) target = $region113
  $region112: #{cdcnet_forward.1} parent=0 // pred_region
    _
  $region113: #{cdcnet_forward.1} parent=0 // pred_fallthru
    _
  // Predicated region
  $region114: #{cdcnet_forward.1} parent=0 // pred_check
    _
  $region115: #{cdcnet_forward.1} parent=0 // pred_check_branch
    %151 = sbr.rel (0) target = $region117
  $region116: #{cdcnet_forward.1} parent=0 // pred_region
    _
  $region117: #{cdcnet_forward.1} parent=0 // pred_fallthru
    _
  // Predicated region
  $region118: #{cdcnet_forward.1} parent=0 // pred_check
    _
  $region119: #{cdcnet_forward.1} parent=0 // pred_check_branch
    %153 = sbr.rel (0) target = $region121
  $region120: #{cdcnet_forward.1} parent=0 // pred_region
    _
  $region121: #{cdcnet_forward.1} parent=0 // pred_fallthru
    _
  // Predicated region
  $region122: #{cdcnet_forward.1} parent=0 // pred_check
    _
  $region123: #{cdcnet_forward.1} parent=0 // pred_check_branch
    %155 = sbr.rel (0) target = $region125
  $region124: #{cdcnet_forward.1} parent=0 // pred_region
    _
  $region125: #{cdcnet_forward.1} parent=0 // pred_fallthru
    _
  // Predicated region
  $region126: #{cdcnet_forward.1} parent=0 // pred_check
    _
  $region127: #{cdcnet_forward.1} parent=0 // pred_check_branch
    %157 = sbr.rel (0) target = $region129
  $region128: #{cdcnet_forward.1} parent=0 // pred_region
    _
  $region129: #{cdcnet_forward.1} parent=0 // pred_fallthru
    _
  // Predicated region
  $region130: #{cdcnet_forward.1} parent=0 // pred_check
    _
  $region131: #{cdcnet_forward.1} parent=0 // pred_check_branch
    %159 = sbr.rel (0) target = $region133
  $region132: #{cdcnet_forward.1} parent=0 // pred_region
    _
  $region133: #{cdcnet_forward.1} parent=0 // pred_fallthru
    _
  // Predicated region
  $region134: #{cdcnet_forward.1} parent=0 // pred_check
    _
  $region135: #{cdcnet_forward.1} parent=0 // pred_check_branch
    %161 = sbr.rel (0) target = $region137
  $region136: #{cdcnet_forward.1} parent=0 // pred_region
    _
  $region137: #{cdcnet_forward.1} parent=0 // pred_fallthru
    _
  // Predicated region
  $region138: #{cdcnet_forward.1} parent=0 // pred_check
    _
  $region139: #{cdcnet_forward.1} parent=0 // pred_check_branch
    %163 = sbr.rel (0) target = $region141
  $region140: #{cdcnet_forward.1} parent=0 // pred_region
    _
  $region141: #{cdcnet_forward.1} parent=0 // pred_fallthru
    _
  // Predicated region
  $region142: #{cdcnet_forward.1} parent=0 // pred_check
    _
  $region143: #{cdcnet_forward.1} parent=0 // pred_check_branch
    %165 = sbr.rel (0) target = $region145
  $region144: #{cdcnet_forward.1} parent=0 // pred_region
    _
  $region145: #{cdcnet_forward.1} parent=0 // pred_fallthru
    _
  // Predicated region
  $region146: #{cdcnet_forward.1} parent=0 // pred_check
    _
  $region147: #{cdcnet_forward.1} parent=0 // pred_check_branch
    %167 = sbr.rel (0) target = $region149
  $region148: #{cdcnet_forward.1} parent=0 // pred_region
    _
  $region149: #{cdcnet_forward.1} parent=0 // pred_fallthru
    _
  // Predicated region
  $region150: #{cdcnet_forward.1} parent=0 // pred_check
    _
  $region151: #{cdcnet_forward.1} parent=0 // pred_check_branch
    %169 = sbr.rel (0) target = $region153
  $region152: #{cdcnet_forward.1} parent=0 // pred_region
    _
  $region153: #{cdcnet_forward.1} parent=0 // pred_fallthru
    _
  // Predicated region
  $region154: #{cdcnet_forward.1} parent=0 // pred_check
    _
  $region155: #{cdcnet_forward.1} parent=0 // pred_check_branch
    %171 = sbr.rel (0) target = $region157
  $region156: #{cdcnet_forward.1} parent=0 // pred_region
    _
  $region157: #{cdcnet_forward.1} parent=0 // pred_fallthru
    _
  // Predicated region
  $region158: #{cdcnet_forward.1} parent=0 // pred_check
    _
  $region159: #{cdcnet_forward.1} parent=0 // pred_check_branch
    %173 = sbr.rel (0) target = $region161
  $region160: #{cdcnet_forward.1} parent=0 // pred_region
    _
  $region161: #{cdcnet_forward.1} parent=0 // pred_fallthru
    _
  // Predicated region
  $region162: #{cdcnet_forward.1} parent=0 // pred_check
    _
  $region163: #{cdcnet_forward.1} parent=0 // pred_check_branch
    %175 = sbr.rel (0) target = $region165
  $region164: #{cdcnet_forward.1} parent=0 // pred_region
    _
  $region165: #{cdcnet_forward.1} parent=0 // pred_fallthru
    _
  // Predicated region
  $region166: #{cdcnet_forward.1} parent=0 // pred_check
    _
  $region167: #{cdcnet_forward.1} parent=0 // pred_check_branch
    %177 = sbr.rel (0) target = $region169
  $region168: #{cdcnet_forward.1} parent=0 // pred_region
    _
  $region169: #{cdcnet_forward.1} parent=0 // pred_fallthru
    _
  // Predicated region
  $region170: #{cdcnet_forward.1} parent=0 // pred_check
    _
  $region171: #{cdcnet_forward.1} parent=0 // pred_check_branch
    %179 = sbr.rel (0) target = $region173
  $region172: #{cdcnet_forward.1} parent=0 // pred_region
    _
  $region173: #{cdcnet_forward.1} parent=0 // pred_fallthru
    _
  // Predicated region
  $region174: #{cdcnet_forward.1} parent=0 // pred_check
    _
  $region175: #{cdcnet_forward.1} parent=0 // pred_check_branch
    %181 = sbr.rel (0) target = $region177
  $region176: #{cdcnet_forward.1} parent=0 // pred_region
    _
  $region177: #{cdcnet_forward.1} parent=0 // pred_fallthru
    _
  %v183 = vld [vmem:[%s3] sm:$0xff]
  %v184 = vld [vmem:[%s3 + $0x8] sm:$0xff]
  %v185 = vld [vmem:[%s3 + $0x10] sm:$0xff]
  %v186 = vld [vmem:[%s3 + $0x18] sm:$0xff]
  %v187 = vld [vmem:[%s5] sm:$0x1]
  %v188 = vld [vmem:[%s7] sm:$0xff]
  %v189 = vld [vmem:[%s7 + $0x8] sm:$0xff]
  %v190 = vld [vmem:[%s7 + $0x10] sm:$0xff]
  %v191 = vld [vmem:[%s7 + $0x18] sm:$0xff]
  %v192 = vld [vmem:[%s9] sm:$0xff]
  %v193 = vld [vmem:[%s9 + $0x8] sm:$0xff]
  %v194 = vld [vmem:[%s9 + $0x10] sm:$0xff]
  %v195 = vld [vmem:[%s9 + $0x18] sm:$0xff]
  %v196 = vld [vmem:[%s11] sm:$0x3]
  %v197 = vld [vmem:[%s1] sm:$0xff]
  %v198 = vld [vmem:[%s1 + $0x8] sm:$0xff]
  %v199 = vld [vmem:[%s1 + $0x10] sm:$0xff]
  %v200 = vld [vmem:[%s1 + $0x18] sm:$0xff]
  %v201 = vld [vmem:[%s13] sm:$0x1]
  %v202 = vld [vmem:[%s15] sm:$0x1]
  %vm203 = vcmask 261120
  %v205 = vsel %vm203, 1.0, 0
  %207 = vmatprep.subr.mxu0 0.0
  %208 = vmatpush1.msra.mxu0 %v197
  %209 = vmatprep.subr.mxu0 0.0
  %210 = vmatpush1.msra.mxu0 %v198
  %211 = vmatprep.subr.mxu0 0.0
  %212 = vmatpush1.msra.mxu0 %v199
  %213 = vmatprep.subr.mxu0 0.0
  %214 = vmatpush1.msra.mxu0 %v200
  %215 = vmatprep.subr.mxu0 0.0
  %216 = vmatpush1.msra.mxu0 0.0
  %217 = vmatprep.subr.mxu0 0.0
  %218 = vmatpush1.msra.mxu0 0.0
  %219 = vmatprep.subr.mxu0 0.0
  %220 = vmatpush1.msra.mxu0 0.0
  %221 = vmatprep.subr.mxu0 0.0
  %222 = vmatpush1.msra.mxu0 0.0
  %223 = vmatprep.subr.mxu0 0.0
  %224 = vmatpush1.msra.mxu0 0.0
  %225 = vmatprep.subr.mxu0 0.0
  %226 = vmatpush1.msra.mxu0 0.0
  %227 = vmatprep.subr.mxu0 0.0
  %228 = vmatpush1.msra.mxu0 0.0
  %229 = vmatprep.subr.mxu0 0.0
  %230 = vmatpush1.msra.mxu0 0.0
  %231 = vmatprep.subr.mxu0 0.0
  %232 = vmatpush1.msra.mxu0 0.0
  %233 = vmatprep.subr.mxu0 0.0
  %234 = vmatpush1.msra.mxu0 0.0
  %235 = vmatprep.subr.mxu0 0.0
  %236 = vmatpush1.msra.mxu0 0.0
  %237 = vmatprep.subr.mxu0 0.0
  %238 = vmatpush1.msra.mxu0 0.0
  %239 = vmatprep.subr.mxu0 0.0
  %240 = vmatpush1.msra.mxu0 0.0
  %241 = vmatprep.subr.mxu0 0.0
  %242 = vmatpush1.msra.mxu0 0.0
  %243 = vmatprep.subr.mxu0 0.0
  %244 = vmatpush1.msra.mxu0 0.0
  %245 = vmatprep.subr.mxu0 0.0
  %246 = vmatpush1.msra.mxu0 0.0
  %247 = vmatprep.subr.mxu0 0.0
  %248 = vmatpush1.msra.mxu0 0.0
  %249 = vmatprep.subr.mxu0 0.0
  %250 = vmatpush1.msra.mxu0 0.0
  %251 = vmatprep.subr.mxu0 0.0
  %252 = vmatpush1.msra.mxu0 0.0
  %253 = vmatprep.subr.mxu0 0.0
  %254 = vmatpush1.msra.mxu0 0.0
  %255 = vmatprep.subr.mxu0 0.0
  %256 = vmatpush1.msra.mxu0 0.0
  %257 = vmatprep.subr.mxu0 0.0
  %258 = vmatpush1.msra.mxu0 0.0
  %259 = vmatprep.subr.mxu0 0.0
  %260 = vmatpush1.msra.mxu0 0.0
  %261 = vmatprep.subr.mxu0 0.0
  %262 = vmatpush1.msra.mxu0 0.0
  %263 = vmatprep.subr.mxu0 0.0
  %264 = vmatpush1.msra.mxu0 0.0
  %265 = vmatprep.subr.mxu0 0.0
  %266 = vmatpush1.msra.mxu0 0.0
  %267 = vmatprep.subr.mxu0 0.0
  %268 = vmatpush1.msra.mxu0 0.0
  %269 = vmatprep.subr.mxu0 0.0
  %270 = vmatpush1.msra.mxu0 0.0
  %271 = vmatprep.mubr.f32.mxu0 0.0
  %272 = vmatmul.mubr.f32.gmra.mrb[0].mxu0 %v205
  %v273 = vpop.f32.mrb[0].mxu0
  %v274 = vadd.f32 0.0, %v273
  %v275 = vpop.f32.mrb[0].mxu0
  %276 = vdwg.mxu0
  %v277 = vmul.f32 %v274, 0.03125
  %v278 = vlaneseq
  %v279 = vshrl.u32 %v278, 7
  %v280 = vsub.s32 0, %v279
  %v281 = vrot.slane %v277, %v280
  %v282 = vsub.f32 %v197, %v281
  %v283 = vsub.f32 %v198, %v281
  %v284 = vsub.f32 %v199, %v281
  %v285 = vsub.f32 %v200, %v281
  %v286 = vmul.f32 %v282, %v282
  %v287 = vmul.f32 %v283, %v283
  %v288 = vmul.f32 %v284, %v284
  %v289 = vmul.f32 %v285, %v285
  %290 = vmatprep.subr.mxu0 0.0
  %291 = vmatpush1.msra.mxu0 %v286
  %292 = vmatprep.subr.mxu0 0.0
  %293 = vmatpush1.msra.mxu0 %v287
  %294 = vmatprep.subr.mxu0 0.0
  %295 = vmatpush1.msra.mxu0 %v288
  %296 = vmatprep.subr.mxu0 0.0
  %297 = vmatpush1.msra.mxu0 %v289
  %298 = vmatprep.subr.mxu0 0.0
  %299 = vmatpush1.msra.mxu0 0.0
  %300 = vmatprep.subr.mxu0 0.0
  %301 = vmatpush1.msra.mxu0 0.0
  %302 = vmatprep.subr.mxu0 0.0
  %303 = vmatpush1.msra.mxu0 0.0
  %304 = vmatprep.subr.mxu0 0.0
  %305 = vmatpush1.msra.mxu0 0.0
  %306 = vmatprep.subr.mxu0 0.0
  %307 = vmatpush1.msra.mxu0 0.0
  %308 = vmatprep.subr.mxu0 0.0
  %309 = vmatpush1.msra.mxu0 0.0
  %310 = vmatprep.subr.mxu0 0.0
  %311 = vmatpush1.msra.mxu0 0.0
  %312 = vmatprep.subr.mxu0 0.0
  %313 = vmatpush1.msra.mxu0 0.0
  %314 = vmatprep.subr.mxu0 0.0
  %315 = vmatpush1.msra.mxu0 0.0
  %316 = vmatprep.subr.mxu0 0.0
  %317 = vmatpush1.msra.mxu0 0.0
  %318 = vmatprep.subr.mxu0 0.0
  %319 = vmatpush1.msra.mxu0 0.0
  %320 = vmatprep.subr.mxu0 0.0
  %321 = vmatpush1.msra.mxu0 0.0
  %322 = vmatprep.subr.mxu0 0.0
  %323 = vmatpush1.msra.mxu0 0.0
  %324 = vmatprep.subr.mxu0 0.0
  %325 = vmatpush1.msra.mxu0 0.0
  %326 = vmatprep.subr.mxu0 0.0
  %327 = vmatpush1.msra.mxu0 0.0
  %328 = vmatprep.subr.mxu0 0.0
  %329 = vmatpush1.msra.mxu0 0.0
  %330 = vmatprep.subr.mxu0 0.0
  %331 = vmatpush1.msra.mxu0 0.0
  %332 = vmatprep.subr.mxu0 0.0
  %333 = vmatpush1.msra.mxu0 0.0
  %334 = vmatprep.subr.mxu0 0.0
  %335 = vmatpush1.msra.mxu0 0.0
  %336 = vmatprep.subr.mxu0 0.0
  %337 = vmatpush1.msra.mxu0 0.0
  %338 = vmatprep.subr.mxu0 0.0
  %339 = vmatpush1.msra.mxu0 0.0
  %340 = vmatprep.subr.mxu0 0.0
  %341 = vmatpush1.msra.mxu0 0.0
  %342 = vmatprep.subr.mxu0 0.0
  %343 = vmatpush1.msra.mxu0 0.0
  %344 = vmatprep.subr.mxu0 0.0
  %345 = vmatpush1.msra.mxu0 0.0
  %346 = vmatprep.subr.mxu0 0.0
  %347 = vmatpush1.msra.mxu0 0.0
  %348 = vmatprep.subr.mxu0 0.0
  %349 = vmatpush1.msra.mxu0 0.0
  %350 = vmatprep.subr.mxu0 0.0
  %351 = vmatpush1.msra.mxu0 0.0
  %352 = vmatprep.subr.mxu0 0.0
  %353 = vmatpush1.msra.mxu0 0.0
  %354 = vmatprep.mubr.f32.mxu0 0.0
  %355 = vmatmul.mubr.f32.gmra.mrb[0].mxu0 %v205
  %v356 = vpop.f32.mrb[0].mxu0
  %v357 = vadd.f32 0.0, %v356
  %v358 = vpop.f32.mrb[0].mxu0
  %359 = vdwg.mxu0
  %v360 = vmul.f32 %v357, 0.03125
  %v361 = vadd.f32 %v360, 1e-05
  %v362 = vrsqrt.pop %v361
  %v363 = vlaneseq
  %v364 = vshrl.u32 %v363, 7
  %v365 = vsub.s32 0, %v364
  %v366 = vrot.slane %v362, %v365
  %v367 = vmul.f32 %v282, %v366
  %v368 = vmul.f32 %v283, %v366
  %v369 = vmul.f32 %v284, %v366
  %v370 = vmul.f32 %v285, %v366
  %v372 = vlaneseq
  %v373 = vshrl.u32 %v372, 7
  %v374 = vsub.s32 0, %v373
  %v375 = vrot.slane %v201, %v374
  %v377 = vmul.f32 %v367, %v375
  %v378 = vmul.f32 %v368, %v375
  %v379 = vmul.f32 %v369, %v375
  %v380 = vmul.f32 %v370, %v375
  %v382 = vlaneseq
  %v383 = vshrl.u32 %v382, 7
  %v384 = vsub.s32 0, %v383
  %v385 = vrot.slane %v202, %v384
  %v387 = vadd.f32 %v377, %v385
  %v388 = vadd.f32 %v378, %v385
  %v389 = vadd.f32 %v379, %v385
  %v390 = vadd.f32 %v380, %v385
  %v391 = vld [vmem:[%s17] sm:$0xff]
  %v392 = vld [vmem:[%s17 + $0x8] sm:$0xff]
  %v393 = vld [vmem:[%s19] sm:$0x1]
  %v394 = vld [vmem:[%s21] sm:$0xff]
  %v395 = vld [vmem:[%s21 + $0x8] sm:$0xff]
  %v396 = vld [vmem:[%s21 + $0x10] sm:$0xff]
  %v397 = vld [vmem:[%s21 + $0x18] sm:$0xff]
  %v398 = vld [vmem:[%s23] sm:$0x1]
  %v399 = vld [vmem:[%s25] sm:$0x1]
  %v400 = vld [vmem:[%s27] sm:$0x1]
  %v401 = vld [vmem:[%s29] sm:$0xff]
  %v402 = vld [vmem:[%s29 + $0x8] sm:$0xff]
  %v403 = vld [vmem:[%s29 + $0x10] sm:$0xff]
  %v404 = vld [vmem:[%s29 + $0x18] sm:$0xff]
  %v405 = vld [vmem:[%s31] sm:$0x1]
  %v406 = vld [vmem:[%s33] sm:$0xff]
  %v407 = vld [vmem:[%s33 + $0x8] sm:$0xff]
  %v408 = vld [vmem:[%s33 + $0x10] sm:$0xff]
  %v409 = vld [vmem:[%s33 + $0x18] sm:$0xff]
  %v410 = vld [vmem:[%s35] sm:$0x1]
  %v411 = vld [vmem:[%s37] sm:$0xff]
  %v412 = vld [vmem:[%s37 + $0x8] sm:$0xff]
  %v413 = vld [vmem:[%s37 + $0x10] sm:$0xff]
  %v414 = vld [vmem:[%s37 + $0x18] sm:$0xff]
  %v415 = vld [vmem:[%s37 + $0x20] sm:$0xff]
  %v416 = vld [vmem:[%s37 + $0x28] sm:$0xff]
  %v417 = vld [vmem:[%s37 + $0x30] sm:$0xff]
  %v418 = vld [vmem:[%s37 + $0x38] sm:$0xff]
  %v419 = vld [vmem:[%s37 + $0x40] sm:$0xff]
  %v420 = vld [vmem:[%s37 + $0x48] sm:$0xff]
  %v421 = vld [vmem:[%s37 + $0x50] sm:$0xff]
  %v422 = vld [vmem:[%s37 + $0x58] sm:$0xff]
  %v423 = vld [vmem:[%s39] sm:$0x1]
  %v424 = vld [vmem:[%s41] sm:$0x1]
  %v425 = vld [vmem:[%s43] sm:$0x1]
  %v426 = vld [vmem:[%s45] sm:$0xff]
  %v427 = vld [vmem:[%s45 + $0x8] sm:$0xff]
  %v428 = vld [vmem:[%s45 + $0x10] sm:$0xff]
  %v429 = vld [vmem:[%s45 + $0x18] sm:$0xff]
  %v430 = vld [vmem:[%s45 + $0x20] sm:$0xff]
  %v431 = vld [vmem:[%s45 + $0x28] sm:$0xff]
  %v432 = vld [vmem:[%s45 + $0x30] sm:$0xff]
  %v433 = vld [vmem:[%s45 + $0x38] sm:$0xff]
  %v434 = vld [vmem:[%s47] sm:$0x1]
  %v436 = vsel %vm203, %v196, 0
  %438 = vmatprep.subr.mxu0 0.0
  %439 = vmatpush1.msra.mxu0 %v387
  %440 = vmatprep.subr.mxu0 0.0
  %441 = vmatpush1.msra.mxu0 %v388
  %442 = vmatprep.subr.mxu0 0.0
  %443 = vmatpush1.msra.mxu0 %v389
  %444 = vmatprep.subr.mxu0 0.0
  %445 = vmatpush1.msra.mxu0 %v390
  %446 = vmatprep.subr.mxu0 0.0
  %447 = vmatpush1.msra.mxu0 0.0
  %448 = vmatprep.subr.mxu0 0.0
  %449 = vmatpush1.msra.mxu0 0.0
  %450 = vmatprep.subr.mxu0 0.0
  %451 = vmatpush1.msra.mxu0 0.0
  %452 = vmatprep.subr.mxu0 0.0
  %453 = vmatpush1.msra.mxu0 0.0
  %454 = vmatprep.subr.mxu0 0.0
  %455 = vmatpush1.msra.mxu0 0.0
  %456 = vmatprep.subr.mxu0 0.0
  %457 = vmatpush1.msra.mxu0 0.0
  %458 = vmatprep.subr.mxu0 0.0
  %459 = vmatpush1.msra.mxu0 0.0
  %460 = vmatprep.subr.mxu0 0.0
  %461 = vmatpush1.msra.mxu0 0.0
  %462 = vmatprep.subr.mxu0 0.0
  %463 = vmatpush1.msra.mxu0 0.0
  %464 = vmatprep.subr.mxu0 0.0
  %465 = vmatpush1.msra.mxu0 0.0
  %466 = vmatprep.subr.mxu0 0.0
  %467 = vmatpush1.msra.mxu0 0.0
  %468 = vmatprep.subr.mxu0 0.0
  %469 = vmatpush1.msra.mxu0 0.0
  %470 = vmatprep.subr.mxu0 0.0
  %471 = vmatpush1.msra.mxu0 0.0
  %472 = vmatprep.subr.mxu0 0.0
  %473 = vmatpush1.msra.mxu0 0.0
  %474 = vmatprep.subr.mxu0 0.0
  %475 = vmatpush1.msra.mxu0 0.0
  %476 = vmatprep.subr.mxu0 0.0
  %477 = vmatpush1.msra.mxu0 0.0
  %478 = vmatprep.subr.mxu0 0.0
  %479 = vmatpush1.msra.mxu0 0.0
  %480 = vmatprep.subr.mxu0 0.0
  %481 = vmatpush1.msra.mxu0 0.0
  %482 = vmatprep.subr.mxu0 0.0
  %483 = vmatpush1.msra.mxu0 0.0
  %484 = vmatprep.subr.mxu0 0.0
  %485 = vmatpush1.msra.mxu0 0.0
  %486 = vmatprep.subr.mxu0 0.0
  %487 = vmatpush1.msra.mxu0 0.0
  %488 = vmatprep.subr.mxu0 0.0
  %489 = vmatpush1.msra.mxu0 0.0
  %490 = vmatprep.subr.mxu0 0.0
  %491 = vmatpush1.msra.mxu0 0.0
  %492 = vmatprep.subr.mxu0 0.0
  %493 = vmatpush1.msra.mxu0 0.0
  %494 = vmatprep.subr.mxu0 0.0
  %495 = vmatpush1.msra.mxu0 0.0
  %496 = vmatprep.subr.mxu0 0.0
  %497 = vmatpush1.msra.mxu0 0.0
  %498 = vmatprep.subr.mxu0 0.0
  %499 = vmatpush1.msra.mxu0 0.0
  %500 = vmatprep.subr.mxu0 0.0
  %501 = vmatpush1.msra.mxu0 0.0
  %502 = vmatprep.mubr.f32.mxu0 0.0
  %503 = vmatmul.mubr.f32.gmra.mrb[0].mxu0 %v436
  %v504 = vpop.f32.mrb[0].mxu0
  %v505 = vadd.f32 0.0, %v504
  %v506 = vpop.f32.mrb[0].mxu0
  %507 = vdwg.mxu0
  %vm508 = vcmask 15360
  %v510 = vsel %vm508, %v192, 0
  %v513 = vsel %vm508, %v193, 0
  %v516 = vsel %vm508, %v194, 0
  %v519 = vsel %vm508, %v195, 0
  %vm521 = vcmask 1041408
  %v523 = vsel %vm521, %v505, 0
  %525 = vmatprep.subr.mxu0 0.0
  %526 = vmatpush1.msra.mxu0 %v523
  %527 = vmatprep.subr.mxu0 0.0
  %528 = vmatpush1.msra.mxu0 0.0
  %529 = vmatprep.subr.mxu0 0.0
  %530 = vmatpush1.msra.mxu0 0.0
  %531 = vmatprep.subr.mxu0 0.0
  %532 = vmatpush1.msra.mxu0 0.0
  %533 = vmatprep.subr.mxu0 0.0
  %534 = vmatpush1.msra.mxu0 0.0
  %535 = vmatprep.subr.mxu0 0.0
  %536 = vmatpush1.msra.mxu0 0.0
  %537 = vmatprep.subr.mxu0 0.0
  %538 = vmatpush1.msra.mxu0 0.0
  %539 = vmatprep.subr.mxu0 0.0
  %540 = vmatpush1.msra.mxu0 0.0
  %541 = vmatprep.subr.mxu0 0.0
  %542 = vmatpush1.msra.mxu0 0.0
  %543 = vmatprep.subr.mxu0 0.0
  %544 = vmatpush1.msra.mxu0 0.0
  %545 = vmatprep.subr.mxu0 0.0
  %546 = vmatpush1.msra.mxu0 0.0
  %547 = vmatprep.subr.mxu0 0.0
  %548 = vmatpush1.msra.mxu0 0.0
  %549 = vmatprep.subr.mxu0 0.0
  %550 = vmatpush1.msra.mxu0 0.0
  %551 = vmatprep.subr.mxu0 0.0
  %552 = vmatpush1.msra.mxu0 0.0
  %553 = vmatprep.subr.mxu0 0.0
  %554 = vmatpush1.msra.mxu0 0.0
  %555 = vmatprep.subr.mxu0 0.0
  %556 = vmatpush1.msra.mxu0 0.0
  %557 = vmatprep.subr.mxu0 0.0
  %558 = vmatpush1.msra.mxu0 0.0
  %559 = vmatprep.subr.mxu0 0.0
  %560 = vmatpush1.msra.mxu0 0.0
  %561 = vmatprep.subr.mxu0 0.0
  %562 = vmatpush1.msra.mxu0 0.0
  %563 = vmatprep.subr.mxu0 0.0
  %564 = vmatpush1.msra.mxu0 0.0
  %565 = vmatprep.subr.mxu0 0.0
  %566 = vmatpush1.msra.mxu0 0.0
  %567 = vmatprep.subr.mxu0 0.0
  %568 = vmatpush1.msra.mxu0 0.0
  %569 = vmatprep.subr.mxu0 0.0
  %570 = vmatpush1.msra.mxu0 0.0
  %571 = vmatprep.subr.mxu0 0.0
  %572 = vmatpush1.msra.mxu0 0.0
  %573 = vmatprep.subr.mxu0 0.0
  %574 = vmatpush1.msra.mxu0 0.0
  %575 = vmatprep.subr.mxu0 0.0
  %576 = vmatpush1.msra.mxu0 0.0
  %577 = vmatprep.subr.mxu0 0.0
  %578 = vmatpush1.msra.mxu0 0.0
  %579 = vmatprep.subr.mxu0 0.0
  %580 = vmatpush1.msra.mxu0 0.0
  %581 = vmatprep.subr.mxu0 0.0
  %582 = vmatpush1.msra.mxu0 0.0
  %583 = vmatprep.subr.mxu0 0.0
  %584 = vmatpush1.msra.mxu0 0.0
  %585 = vmatprep.subr.mxu0 0.0
  %586 = vmatpush1.msra.mxu0 0.0
  %587 = vmatprep.subr.mxu0 0.0
  %588 = vmatpush1.msra.mxu0 0.0
  %589 = vmatprep.mubr.f32.mxu0 0.0
  %590 = vmatmul.mubr.f32.gmra.mrb[0].mxu0 %v510
  %v591 = vpop.f32.mrb[0].mxu0
  %v592 = vadd.f32 0.0, %v591
  %v593 = vpop.f32.mrb[0].mxu0
  %594 = vmatprep.mubr.f32.mxu0 0.0
  %595 = vmatmul.mubr.f32.gmra.mrb[0].mxu0 %v513
  %v596 = vpop.f32.mrb[0].mxu0
  %v597 = vadd.f32 0.0, %v596
  %v598 = vpop.f32.mrb[0].mxu0
  %599 = vmatprep.mubr.f32.mxu0 0.0
  %600 = vmatmul.mubr.f32.gmra.mrb[0].mxu0 %v516
  %v601 = vpop.f32.mrb[0].mxu0
  %v602 = vadd.f32 0.0, %v601
  %v603 = vpop.f32.mrb[0].mxu0
  %604 = vmatprep.mubr.f32.mxu0 0.0
  %605 = vmatmul.mubr.f32.gmra.mrb[0].mxu0 %v519
  %v606 = vpop.f32.mrb[0].mxu0
  %v607 = vadd.f32 0.0, %v606
  %v608 = vpop.f32.mrb[0].mxu0
  %609 = vdwg.mxu0
  %611 = vset.pattern.permute.xlu0 0
  %612 = vperm.xlu0 %611, %v188
  %v613 = vpop.permute.xlu0 %612
  %616 = vset.pattern.permute.xlu0 0
  %617 = vperm.xlu0 %616, %v189
  %v618 = vpop.permute.xlu0 %617
  %621 = vset.pattern.permute.xlu0 0
  %622 = vperm.xlu0 %621, %v190
  %v623 = vpop.permute.xlu0 %622
  %626 = vset.pattern.permute.xlu0 0
  %627 = vperm.xlu0 %626, %v191
  %v628 = vpop.permute.xlu0 %627
  %v630 = vmul.f32 %v592, %v613
  %v631 = vmul.f32 %v597, %v618
  %v632 = vmul.f32 %v602, %v623
  %v633 = vmul.f32 %v607, %v628
  %v634 = vpack.c.bf16 %v388, %v387
  %v635 = vpack.c.bf16 %v390, %v389
  %v636 = vpack.c.bf16 %v391, %v391
  %v637 = vpack.c.bf16 %v631, %v630
  %v638 = vpack.c.bf16 %v633, %v632
  %v639 = vpack.c.bf16 %v392, %v392
  %vm640 = vcmask 64512
  %v642 = vsel %vm640, %v637, 0
  %v645 = vsel %vm640, %v638, 0
  %vm647 = vcmask 1043456
  %v649 = vsel %vm647, %v639, 0
  %651 = vmatprep.subr.bf16.mxu0 0
  %652 = vmatpush1.bf16.msra.mxu0 %v649
  %653 = vmatprep.subr.bf16.mxu0 0
  %654 = vmatpush1.bf16.msra.mxu0 0
  %655 = vmatprep.subr.bf16.mxu0 0
  %656 = vmatpush1.bf16.msra.mxu0 0
  %657 = vmatprep.subr.bf16.mxu0 0
  %658 = vmatpush1.bf16.msra.mxu0 0
  %659 = vmatprep.subr.bf16.mxu0 0
  %660 = vmatpush1.bf16.msra.mxu0 0
  %661 = vmatprep.subr.bf16.mxu0 0
  %662 = vmatpush1.bf16.msra.mxu0 0
  %663 = vmatprep.subr.bf16.mxu0 0
  %664 = vmatpush1.bf16.msra.mxu0 0
  %665 = vmatprep.subr.bf16.mxu0 0
  %666 = vmatpush1.bf16.msra.mxu0 0
  %667 = vmatprep.subr.bf16.mxu0 0
  %668 = vmatpush1.bf16.msra.mxu0 0
  %669 = vmatprep.subr.bf16.mxu0 0
  %670 = vmatpush1.bf16.msra.mxu0 0
  %671 = vmatprep.subr.bf16.mxu0 0
  %672 = vmatpush1.bf16.msra.mxu0 0
  %673 = vmatprep.subr.bf16.mxu0 0
  %674 = vmatpush1.bf16.msra.mxu0 0
  %675 = vmatprep.subr.bf16.mxu0 0
  %676 = vmatpush1.bf16.msra.mxu0 0
  %677 = vmatprep.subr.bf16.mxu0 0
  %678 = vmatpush1.bf16.msra.mxu0 0
  %679 = vmatprep.subr.bf16.mxu0 0
  %680 = vmatpush1.bf16.msra.mxu0 0
  %681 = vmatprep.subr.bf16.mxu0 0
  %682 = vmatpush1.bf16.msra.mxu0 0
  %683 = vmatprep.mubr.bf16.mxu0 0
  %684 = vmatmul.mubr.bf16.gmra.mrb[0].mxu0 %v642
  %v685 = vpop.f32.mrb[0].mxu0
  %v686 = vadd.f32 0.0, %v685
  %v687 = vpop.f32.mrb[0].mxu0
  %v688 = vpop.f32.mrb[0].mxu0
  %v689 = vadd.f32 0.0, %v688
  %v690 = vpop.f32.mrb[0].mxu0
  %691 = vmatprep.mubr.bf16.mxu0 0
  %692 = vmatmul.mubr.bf16.gmra.mrb[0].mxu0 %v645
  %v693 = vpop.f32.mrb[0].mxu0
  %v694 = vadd.f32 0.0, %v693
  %v695 = vpop.f32.mrb[0].mxu0
  %v696 = vpop.f32.mrb[0].mxu0
  %v697 = vadd.f32 0.0, %v696
  %v698 = vpop.f32.mrb[0].mxu0
  %699 = vdwg.mxu0
  %v701 = vsel %vm640, %v634, 0
  %v704 = vsel %vm640, %v635, 0
  %v707 = vsel %vm647, %v636, 0
  %709 = vmatprep.subr.bf16.mxu0 0
  %710 = vmatpush1.bf16.msra.mxu0 %v707
  %711 = vmatprep.subr.bf16.mxu0 0
  %712 = vmatpush1.bf16.msra.mxu0 0
  %713 = vmatprep.subr.bf16.mxu0 0
  %714 = vmatpush1.bf16.msra.mxu0 0
  %715 = vmatprep.subr.bf16.mxu0 0
  %716 = vmatpush1.bf16.msra.mxu0 0
  %717 = vmatprep.subr.bf16.mxu0 0
  %718 = vmatpush1.bf16.msra.mxu0 0
  %719 = vmatprep.subr.bf16.mxu0 0
  %720 = vmatpush1.bf16.msra.mxu0 0
  %721 = vmatprep.subr.bf16.mxu0 0
  %722 = vmatpush1.bf16.msra.mxu0 0
  %723 = vmatprep.subr.bf16.mxu0 0
  %724 = vmatpush1.bf16.msra.mxu0 0
  %725 = vmatprep.subr.bf16.mxu0 0
  %726 = vmatpush1.bf16.msra.mxu0 0
  %727 = vmatprep.subr.bf16.mxu0 0
  %728 = vmatpush1.bf16.msra.mxu0 0
  %729 = vmatprep.subr.bf16.mxu0 0
  %730 = vmatpush1.bf16.msra.mxu0 0
  %731 = vmatprep.subr.bf16.mxu0 0
  %732 = vmatpush1.bf16.msra.mxu0 0
  %733 = vmatprep.subr.bf16.mxu0 0
  %734 = vmatpush1.bf16.msra.mxu0 0
  %735 = vmatprep.subr.bf16.mxu0 0
  %736 = vmatpush1.bf16.msra.mxu0 0
  %737 = vmatprep.subr.bf16.mxu0 0
  %738 = vmatpush1.bf16.msra.mxu0 0
  %739 = vmatprep.subr.bf16.mxu0 0
  %740 = vmatpush1.bf16.msra.mxu0 0
  %741 = vmatprep.mubr.bf16.mxu0 0
  %742 = vmatmul.mubr.bf16.gmra.mrb[0].mxu0 %v701
  %v743 = vpop.f32.mrb[0].mxu0
  %v744 = vadd.f32 %v686, %v743
  %v745 = vpop.f32.mrb[0].mxu0
  %v746 = vpop.f32.mrb[0].mxu0
  %v747 = vadd.f32 %v689, %v746
  %v748 = vpop.f32.mrb[0].mxu0
  %749 = vmatprep.mubr.bf16.mxu0 0
  %750 = vmatmul.mubr.bf16.gmra.mrb[0].mxu0 %v704
  %v751 = vpop.f32.mrb[0].mxu0
  %v752 = vadd.f32 %v694, %v751
  %v753 = vpop.f32.mrb[0].mxu0
  %v754 = vpop.f32.mrb[0].mxu0
  %v755 = vadd.f32 %v697, %v754
  %v756 = vpop.f32.mrb[0].mxu0
  %757 = vdwg.mxu0
  %v759 = vlaneseq
  %v760 = vshrl.u32 %v759, 7
  %v761 = vsub.s32 0, %v760
  %v762 = vrot.slane %v393, %v761
  %v764 = vadd.f32 %v744, %v762
  %v765 = vadd.f32 %v747, %v762
  %v766 = vadd.f32 %v752, %v762
  %v767 = vadd.f32 %v755, %v762
  %vm768 = vcmp.gt.f32.partialorder %v764, 0.0
  %vm769 = vcmp.gt.f32.partialorder %v765, 0.0
  %vm770 = vcmp.gt.f32.partialorder %v766, 0.0
  %vm771 = vcmp.gt.f32.partialorder %v767, 0.0
  %v772 = vmin.f32 %v764, 0.0
  %v773 = vmin.f32 %v765, 0.0
  %v774 = vmin.f32 %v766, 0.0
  %v775 = vmin.f32 %v767, 0.0
  %v776 = vmul.f32 %v772, 1.442695
  %v777 = vpow.pop %v776
  %v778 = vmul.f32 %v773, 1.442695
  %v779 = vpow.pop %v778
  %v780 = vmul.f32 %v774, 1.442695
  %v781 = vpow.pop %v780
  %v782 = vmul.f32 %v775, 1.442695
  %v783 = vpow.pop %v782
  %v784 = vsub.f32 %v777, 1.0
  %v785 = vsub.f32 %v779, 1.0
  %v786 = vsub.f32 %v781, 1.0
  %v787 = vsub.f32 %v783, 1.0
  %v788 = vsel %vm768, %v764, %v784
  %v789 = vsel %vm769, %v765, %v785
  %v790 = vsel %vm770, %v766, %v786
  %v791 = vsel %vm771, %v767, %v787
  %v792 = vpack.c.bf16 %v789, %v788
  %v793 = vpack.c.bf16 %v791, %v790
  %v794 = vpack.c.bf16 %v395, %v394
  %v795 = vpack.c.bf16 %v397, %v396
  %v797 = vlaneseq
  %v798 = vshrl.u32 %v797, 7
  %v799 = vsub.s32 0, %v798
  %v800 = vrot.slane %v398, %v799
  %v803 = vsel %vm203, %v792, 0
  %v806 = vsel %vm203, %v793, 0
  %808 = vmatprep.subr.bf16.mxu0 0
  %809 = vmatpush1.bf16.msra.mxu0 %v794
  %810 = vmatprep.subr.bf16.mxu0 0
  %811 = vmatpush1.bf16.msra.mxu0 %v795
  %812 = vmatprep.subr.bf16.mxu0 0
  %813 = vmatpush1.bf16.msra.mxu0 0
  %814 = vmatprep.subr.bf16.mxu0 0
  %815 = vmatpush1.bf16.msra.mxu0 0
  %816 = vmatprep.subr.bf16.mxu0 0
  %817 = vmatpush1.bf16.msra.mxu0 0
  %818 = vmatprep.subr.bf16.mxu0 0
  %819 = vmatpush1.bf16.msra.mxu0 0
  %820 = vmatprep.subr.bf16.mxu0 0
  %821 = vmatpush1.bf16.msra.mxu0 0
  %822 = vmatprep.subr.bf16.mxu0 0
  %823 = vmatpush1.bf16.msra.mxu0 0
  %824 = vmatprep.subr.bf16.mxu0 0
  %825 = vmatpush1.bf16.msra.mxu0 0
  %826 = vmatprep.subr.bf16.mxu0 0
  %827 = vmatpush1.bf16.msra.mxu0 0
  %828 = vmatprep.subr.bf16.mxu0 0
  %829 = vmatpush1.bf16.msra.mxu0 0
  %830 = vmatprep.subr.bf16.mxu0 0
  %831 = vmatpush1.bf16.msra.mxu0 0
  %832 = vmatprep.subr.bf16.mxu0 0
  %833 = vmatpush1.bf16.msra.mxu0 0
  %834 = vmatprep.subr.bf16.mxu0 0
  %835 = vmatpush1.bf16.msra.mxu0 0
  %836 = vmatprep.subr.bf16.mxu0 0
  %837 = vmatpush1.bf16.msra.mxu0 0
  %838 = vmatprep.subr.bf16.mxu0 0
  %839 = vmatpush1.bf16.msra.mxu0 0
  %840 = vmatprep.mubr.bf16.mxu0 0
  %841 = vmatmul.mubr.bf16.gmra.mrb[0].mxu0 %v803
  %v842 = vpop.f32.mrb[0].mxu0
  %v843 = vadd.f32 %v800, %v842
  %v844 = vpop.f32.mrb[0].mxu0
  %v845 = vpop.f32.mrb[0].mxu0
  %v846 = vadd.f32 %v800, %v845
  %v847 = vpop.f32.mrb[0].mxu0
  %848 = vmatprep.mubr.bf16.mxu0 0
  %849 = vmatmul.mubr.bf16.gmra.mrb[0].mxu0 %v806
  %v850 = vpop.f32.mrb[0].mxu0
  %v851 = vadd.f32 %v800, %v850
  %v852 = vpop.f32.mrb[0].mxu0
  %v853 = vpop.f32.mrb[0].mxu0
  %v854 = vadd.f32 %v800, %v853
  %v855 = vpop.f32.mrb[0].mxu0
  %856 = vdwg.mxu0
  %vm857 = vcmp.gt.f32.partialorder %v843, 0.0
  %vm858 = vcmp.gt.f32.partialorder %v846, 0.0
  %vm859 = vcmp.gt.f32.partialorder %v851, 0.0
  %vm860 = vcmp.gt.f32.partialorder %v854, 0.0
  %v861 = vmin.f32 %v843, 0.0
  %v862 = vmin.f32 %v846, 0.0
  %v863 = vmin.f32 %v851, 0.0
  %v864 = vmin.f32 %v854, 0.0
  %v865 = vmul.f32 %v861, 1.442695
  %v866 = vpow.pop %v865
  %v867 = vmul.f32 %v862, 1.442695
  %v868 = vpow.pop %v867
  %v869 = vmul.f32 %v863, 1.442695
  %v870 = vpow.pop %v869
  %v871 = vmul.f32 %v864, 1.442695
  %v872 = vpow.pop %v871
  %v873 = vsub.f32 %v866, 1.0
  %v874 = vsub.f32 %v868, 1.0
  %v875 = vsub.f32 %v870, 1.0
  %v876 = vsub.f32 %v872, 1.0
  %v877 = vsel %vm857, %v843, %v873
  %v878 = vsel %vm858, %v846, %v874
  %v879 = vsel %vm859, %v851, %v875
  %v880 = vsel %vm860, %v854, %v876
  %881 = vmatprep.subr.mxu0 0.0
  %882 = vmatpush1.msra.mxu0 %v877
  %883 = vmatprep.subr.mxu0 0.0
  %884 = vmatpush1.msra.mxu0 %v878
  %885 = vmatprep.subr.mxu0 0.0
  %886 = vmatpush1.msra.mxu0 %v879
  %887 = vmatprep.subr.mxu0 0.0
  %888 = vmatpush1.msra.mxu0 %v880
  %889 = vmatprep.subr.mxu0 0.0
  %890 = vmatpush1.msra.mxu0 0.0
  %891 = vmatprep.subr.mxu0 0.0
  %892 = vmatpush1.msra.mxu0 0.0
  %893 = vmatprep.subr.mxu0 0.0
  %894 = vmatpush1.msra.mxu0 0.0
  %895 = vmatprep.subr.mxu0 0.0
  %896 = vmatpush1.msra.mxu0 0.0
  %897 = vmatprep.subr.mxu0 0.0
  %898 = vmatpush1.msra.mxu0 0.0
  %899 = vmatprep.subr.mxu0 0.0
  %900 = vmatpush1.msra.mxu0 0.0
  %901 = vmatprep.subr.mxu0 0.0
  %902 = vmatpush1.msra.mxu0 0.0
  %903 = vmatprep.subr.mxu0 0.0
  %904 = vmatpush1.msra.mxu0 0.0
  %905 = vmatprep.subr.mxu0 0.0
  %906 = vmatpush1.msra.mxu0 0.0
  %907 = vmatprep.subr.mxu0 0.0
  %908 = vmatpush1.msra.mxu0 0.0
  %909 = vmatprep.subr.mxu0 0.0
  %910 = vmatpush1.msra.mxu0 0.0
  %911 = vmatprep.subr.mxu0 0.0
  %912 = vmatpush1.msra.mxu0 0.0
  %913 = vmatprep.subr.mxu0 0.0
  %914 = vmatpush1.msra.mxu0 0.0
  %915 = vmatprep.subr.mxu0 0.0
  %916 = vmatpush1.msra.mxu0 0.0
  %917 = vmatprep.subr.mxu0 0.0
  %918 = vmatpush1.msra.mxu0 0.0
  %919 = vmatprep.subr.mxu0 0.0
  %920 = vmatpush1.msra.mxu0 0.0
  %921 = vmatprep.subr.mxu0 0.0
  %922 = vmatpush1.msra.mxu0 0.0
  %923 = vmatprep.subr.mxu0 0.0
  %924 = vmatpush1.msra.mxu0 0.0
  %925 = vmatprep.subr.mxu0 0.0
  %926 = vmatpush1.msra.mxu0 0.0
  %927 = vmatprep.subr.mxu0 0.0
  %928 = vmatpush1.msra.mxu0 0.0
  %929 = vmatprep.subr.mxu0 0.0
  %930 = vmatpush1.msra.mxu0 0.0
  %931 = vmatprep.subr.mxu0 0.0
  %932 = vmatpush1.msra.mxu0 0.0
  %933 = vmatprep.subr.mxu0 0.0
  %934 = vmatpush1.msra.mxu0 0.0
  %935 = vmatprep.subr.mxu0 0.0
  %936 = vmatpush1.msra.mxu0 0.0
  %937 = vmatprep.subr.mxu0 0.0
  %938 = vmatpush1.msra.mxu0 0.0
  %939 = vmatprep.subr.mxu0 0.0
  %940 = vmatpush1.msra.mxu0 0.0
  %941 = vmatprep.subr.mxu0 0.0
  %942 = vmatpush1.msra.mxu0 0.0
  %943 = vmatprep.subr.mxu0 0.0
  %944 = vmatpush1.msra.mxu0 0.0
  %945 = vmatprep.mubr.f32.mxu0 0.0
  %946 = vmatmul.mubr.f32.gmra.mrb[0].mxu0 %v205
  %v947 = vpop.f32.mrb[0].mxu0
  %v948 = vadd.f32 0.0, %v947
  %v949 = vpop.f32.mrb[0].mxu0
  %950 = vdwg.mxu0
  %v951 = vmul.f32 %v948, 0.03125
  %v952 = vlaneseq
  %v953 = vshrl.u32 %v952, 7
  %v954 = vsub.s32 0, %v953
  %v955 = vrot.slane %v951, %v954
  %v956 = vsub.f32 %v877, %v955
  %v957 = vsub.f32 %v878, %v955
  %v958 = vsub.f32 %v879, %v955
  %v959 = vsub.f32 %v880, %v955
  %v960 = vmul.f32 %v956, %v956
  %v961 = vmul.f32 %v957, %v957
  %v962 = vmul.f32 %v958, %v958
  %v963 = vmul.f32 %v959, %v959
  %964 = vmatprep.subr.mxu0 0.0
  %965 = vmatpush1.msra.mxu0 %v960
  %966 = vmatprep.subr.mxu0 0.0
  %967 = vmatpush1.msra.mxu0 %v961
  %968 = vmatprep.subr.mxu0 0.0
  %969 = vmatpush1.msra.mxu0 %v962
  %970 = vmatprep.subr.mxu0 0.0
  %971 = vmatpush1.msra.mxu0 %v963
  %972 = vmatprep.subr.mxu0 0.0
  %973 = vmatpush1.msra.mxu0 0.0
  %974 = vmatprep.subr.mxu0 0.0
  %975 = vmatpush1.msra.mxu0 0.0
  %976 = vmatprep.subr.mxu0 0.0
  %977 = vmatpush1.msra.mxu0 0.0
  %978 = vmatprep.subr.mxu0 0.0
  %979 = vmatpush1.msra.mxu0 0.0
  %980 = vmatprep.subr.mxu0 0.0
  %981 = vmatpush1.msra.mxu0 0.0
  %982 = vmatprep.subr.mxu0 0.0
  %983 = vmatpush1.msra.mxu0 0.0
  %984 = vmatprep.subr.mxu0 0.0
  %985 = vmatpush1.msra.mxu0 0.0
  %986 = vmatprep.subr.mxu0 0.0
  %987 = vmatpush1.msra.mxu0 0.0
  %988 = vmatprep.subr.mxu0 0.0
  %989 = vmatpush1.msra.mxu0 0.0
  %990 = vmatprep.subr.mxu0 0.0
  %991 = vmatpush1.msra.mxu0 0.0
  %992 = vmatprep.subr.mxu0 0.0
  %993 = vmatpush1.msra.mxu0 0.0
  %994 = vmatprep.subr.mxu0 0.0
  %995 = vmatpush1.msra.mxu0 0.0
  %996 = vmatprep.subr.mxu0 0.0
  %997 = vmatpush1.msra.mxu0 0.0
  %998 = vmatprep.subr.mxu0 0.0
  %999 = vmatpush1.msra.mxu0 0.0
  %1000 = vmatprep.subr.mxu0 0.0
  %1001 = vmatpush1.msra.mxu0 0.0
  %1002 = vmatprep.subr.mxu0 0.0
  %1003 = vmatpush1.msra.mxu0 0.0
  %1004 = vmatprep.subr.mxu0 0.0
  %1005 = vmatpush1.msra.mxu0 0.0
  %1006 = vmatprep.subr.mxu0 0.0
  %1007 = vmatpush1.msra.mxu0 0.0
  %1008 = vmatprep.subr.mxu0 0.0
  %1009 = vmatpush1.msra.mxu0 0.0
  %1010 = vmatprep.subr.mxu0 0.0
  %1011 = vmatpush1.msra.mxu0 0.0
  %1012 = vmatprep.subr.mxu0 0.0
  %1013 = vmatpush1.msra.mxu0 0.0
  %1014 = vmatprep.subr.mxu0 0.0
  %1015 = vmatpush1.msra.mxu0 0.0
  %1016 = vmatprep.subr.mxu0 0.0
  %1017 = vmatpush1.msra.mxu0 0.0
  %1018 = vmatprep.subr.mxu0 0.0
  %1019 = vmatpush1.msra.mxu0 0.0
  %1020 = vmatprep.subr.mxu0 0.0
  %1021 = vmatpush1.msra.mxu0 0.0
  %1022 = vmatprep.subr.mxu0 0.0
  %1023 = vmatpush1.msra.mxu0 0.0
  %1024 = vmatprep.subr.mxu0 0.0
  %1025 = vmatpush1.msra.mxu0 0.0
  %1026 = vmatprep.subr.mxu0 0.0
  %1027 = vmatpush1.msra.mxu0 0.0
  %1028 = vmatprep.mubr.f32.mxu0 0.0
  %1029 = vmatmul.mubr.f32.gmra.mrb[0].mxu0 %v205
  %v1030 = vpop.f32.mrb[0].mxu0
  %v1031 = vadd.f32 0.0, %v1030
  %v1032 = vpop.f32.mrb[0].mxu0
  %1033 = vdwg.mxu0
  %v1034 = vmul.f32 %v1031, 0.03125
  %v1035 = vadd.f32 %v1034, 1e-05
  %v1036 = vrsqrt.pop %v1035
  %v1037 = vlaneseq
  %v1038 = vshrl.u32 %v1037, 7
  %v1039 = vsub.s32 0, %v1038
  %v1040 = vrot.slane %v1036, %v1039
  %v1041 = vmul.f32 %v956, %v1040
  %v1042 = vmul.f32 %v957, %v1040
  %v1043 = vmul.f32 %v958, %v1040
  %v1044 = vmul.f32 %v959, %v1040
  %v1046 = vlaneseq
  %v1047 = vshrl.u32 %v1046, 7
  %v1048 = vsub.s32 0, %v1047
  %v1049 = vrot.slane %v399, %v1048
  %v1051 = vmul.f32 %v1041, %v1049
  %v1052 = vmul.f32 %v1042, %v1049
  %v1053 = vmul.f32 %v1043, %v1049
  %v1054 = vmul.f32 %v1044, %v1049
  %v1056 = vlaneseq
  %v1057 = vshrl.u32 %v1056, 7
  %v1058 = vsub.s32 0, %v1057
  %v1059 = vrot.slane %v400, %v1058
  %v1061 = vadd.f32 %v1051, %v1059
  %v1062 = vadd.f32 %v1052, %v1059
  %v1063 = vadd.f32 %v1053, %v1059
  %v1064 = vadd.f32 %v1054, %v1059
  %v1065 = vpack.c.bf16 %v1062, %v1061
  %v1066 = vpack.c.bf16 %v1064, %v1063
  %v1067 = vpack.c.bf16 %v402, %v401
  %v1068 = vpack.c.bf16 %v404, %v403
  %v1070 = vlaneseq
  %v1071 = vshrl.u32 %v1070, 7
  %v1072 = vsub.s32 0, %v1071
  %v1073 = vrot.slane %v405, %v1072
  %v1076 = vsel %vm203, %v1065, 0
  %v1079 = vsel %vm203, %v1066, 0
  %1081 = vmatprep.subr.bf16.mxu0 0
  %1082 = vmatpush1.bf16.msra.mxu0 %v1067
  %1083 = vmatprep.subr.bf16.mxu0 0
  %1084 = vmatpush1.bf16.msra.mxu0 %v1068
  %1085 = vmatprep.subr.bf16.mxu0 0
  %1086 = vmatpush1.bf16.msra.mxu0 0
  %1087 = vmatprep.subr.bf16.mxu0 0
  %1088 = vmatpush1.bf16.msra.mxu0 0
  %1089 = vmatprep.subr.bf16.mxu0 0
  %1090 = vmatpush1.bf16.msra.mxu0 0
  %1091 = vmatprep.subr.bf16.mxu0 0
  %1092 = vmatpush1.bf16.msra.mxu0 0
  %1093 = vmatprep.subr.bf16.mxu0 0
  %1094 = vmatpush1.bf16.msra.mxu0 0
  %1095 = vmatprep.subr.bf16.mxu0 0
  %1096 = vmatpush1.bf16.msra.mxu0 0
  %1097 = vmatprep.subr.bf16.mxu0 0
  %1098 = vmatpush1.bf16.msra.mxu0 0
  %1099 = vmatprep.subr.bf16.mxu0 0
  %1100 = vmatpush1.bf16.msra.mxu0 0
  %1101 = vmatprep.subr.bf16.mxu0 0
  %1102 = vmatpush1.bf16.msra.mxu0 0
  %1103 = vmatprep.subr.bf16.mxu0 0
  %1104 = vmatpush1.bf16.msra.mxu0 0
  %1105 = vmatprep.subr.bf16.mxu0 0
  %1106 = vmatpush1.bf16.msra.mxu0 0
  %1107 = vmatprep.subr.bf16.mxu0 0
  %1108 = vmatpush1.bf16.msra.mxu0 0
  %1109 = vmatprep.subr.bf16.mxu0 0
  %1110 = vmatpush1.bf16.msra.mxu0 0
  %1111 = vmatprep.subr.bf16.mxu0 0
  %1112 = vmatpush1.bf16.msra.mxu0 0
  %1113 = vmatprep.mubr.bf16.mxu0 0
  %1114 = vmatmul.mubr.bf16.gmra.mrb[0].mxu0 %v1076
  %v1115 = vpop.f32.mrb[0].mxu0
  %v1116 = vadd.f32 %v1073, %v1115
  %v1117 = vpop.f32.mrb[0].mxu0
  %v1118 = vpop.f32.mrb[0].mxu0
  %v1119 = vadd.f32 %v1073, %v1118
  %v1120 = vpop.f32.mrb[0].mxu0
  %1121 = vmatprep.mubr.bf16.mxu0 0
  %1122 = vmatmul.mubr.bf16.gmra.mrb[0].mxu0 %v1079
  %v1123 = vpop.f32.mrb[0].mxu0
  %v1124 = vadd.f32 %v1073, %v1123
  %v1125 = vpop.f32.mrb[0].mxu0
  %v1126 = vpop.f32.mrb[0].mxu0
  %v1127 = vadd.f32 %v1073, %v1126
  %v1128 = vpop.f32.mrb[0].mxu0
  %1129 = vdwg.mxu0
  %vm1130 = vcmp.gt.f32.partialorder %v1116, 0.0
  %vm1131 = vcmp.gt.f32.partialorder %v1119, 0.0
  %vm1132 = vcmp.gt.f32.partialorder %v1124, 0.0
  %vm1133 = vcmp.gt.f32.partialorder %v1127, 0.0
  %v1134 = vmin.f32 %v1116, 0.0
  %v1135 = vmin.f32 %v1119, 0.0
  %v1136 = vmin.f32 %v1124, 0.0
  %v1137 = vmin.f32 %v1127, 0.0
  %v1138 = vmul.f32 %v1134, 1.442695
  %v1139 = vpow.pop %v1138
  %v1140 = vmul.f32 %v1135, 1.442695
  %v1141 = vpow.pop %v1140
  %v1142 = vmul.f32 %v1136, 1.442695
  %v1143 = vpow.pop %v1142
  %v1144 = vmul.f32 %v1137, 1.442695
  %v1145 = vpow.pop %v1144
  %v1146 = vsub.f32 %v1139, 1.0
  %v1147 = vsub.f32 %v1141, 1.0
  %v1148 = vsub.f32 %v1143, 1.0
  %v1149 = vsub.f32 %v1145, 1.0
  %v1150 = vsel %vm1130, %v1116, %v1146
  %v1151 = vsel %vm1131, %v1119, %v1147
  %v1152 = vsel %vm1132, %v1124, %v1148
  %v1153 = vsel %vm1133, %v1127, %v1149
  %v1155 = vlaneseq
  %v1156 = vshrl.u32 %v1155, 7
  %v1157 = vsub.s32 0, %v1156
  %v1158 = vrot.slane %v410, %v1157
  %v1161 = vsel %vm203, %v1150, 0
  %v1164 = vsel %vm203, %v1151, 0
  %v1167 = vsel %vm203, %v1152, 0
  %v1170 = vsel %vm203, %v1153, 0
  %1172 = vmatprep.subr.mxu0 0.0
  %1173 = vmatpush1.msra.mxu0 %v406
  %1174 = vmatprep.subr.mxu0 0.0
  %1175 = vmatpush1.msra.mxu0 %v407
  %1176 = vmatprep.subr.mxu0 0.0
  %1177 = vmatpush1.msra.mxu0 %v408
  %1178 = vmatprep.subr.mxu0 0.0
  %1179 = vmatpush1.msra.mxu0 %v409
  %1180 = vmatprep.subr.mxu0 0.0
  %1181 = vmatpush1.msra.mxu0 0.0
  %1182 = vmatprep.subr.mxu0 0.0
  %1183 = vmatpush1.msra.mxu0 0.0
  %1184 = vmatprep.subr.mxu0 0.0
  %1185 = vmatpush1.msra.mxu0 0.0
  %1186 = vmatprep.subr.mxu0 0.0
  %1187 = vmatpush1.msra.mxu0 0.0
  %1188 = vmatprep.subr.mxu0 0.0
  %1189 = vmatpush1.msra.mxu0 0.0
  %1190 = vmatprep.subr.mxu0 0.0
  %1191 = vmatpush1.msra.mxu0 0.0
  %1192 = vmatprep.subr.mxu0 0.0
  %1193 = vmatpush1.msra.mxu0 0.0
  %1194 = vmatprep.subr.mxu0 0.0
  %1195 = vmatpush1.msra.mxu0 0.0
  %1196 = vmatprep.subr.mxu0 0.0
  %1197 = vmatpush1.msra.mxu0 0.0
  %1198 = vmatprep.subr.mxu0 0.0
  %1199 = vmatpush1.msra.mxu0 0.0
  %1200 = vmatprep.subr.mxu0 0.0
  %1201 = vmatpush1.msra.mxu0 0.0
  %1202 = vmatprep.subr.mxu0 0.0
  %1203 = vmatpush1.msra.mxu0 0.0
  %1204 = vmatprep.subr.mxu0 0.0
  %1205 = vmatpush1.msra.mxu0 0.0
  %1206 = vmatprep.subr.mxu0 0.0
  %1207 = vmatpush1.msra.mxu0 0.0
  %1208 = vmatprep.subr.mxu0 0.0
  %1209 = vmatpush1.msra.mxu0 0.0
  %1210 = vmatprep.subr.mxu0 0.0
  %1211 = vmatpush1.msra.mxu0 0.0
  %1212 = vmatprep.subr.mxu0 0.0
  %1213 = vmatpush1.msra.mxu0 0.0
  %1214 = vmatprep.subr.mxu0 0.0
  %1215 = vmatpush1.msra.mxu0 0.0
  %1216 = vmatprep.subr.mxu0 0.0
  %1217 = vmatpush1.msra.mxu0 0.0
  %1218 = vmatprep.subr.mxu0 0.0
  %1219 = vmatpush1.msra.mxu0 0.0
  %1220 = vmatprep.subr.mxu0 0.0
  %1221 = vmatpush1.msra.mxu0 0.0
  %1222 = vmatprep.subr.mxu0 0.0
  %1223 = vmatpush1.msra.mxu0 0.0
  %1224 = vmatprep.subr.mxu0 0.0
  %1225 = vmatpush1.msra.mxu0 0.0
  %1226 = vmatprep.subr.mxu0 0.0
  %1227 = vmatpush1.msra.mxu0 0.0
  %1228 = vmatprep.subr.mxu0 0.0
  %1229 = vmatpush1.msra.mxu0 0.0
  %1230 = vmatprep.subr.mxu0 0.0
  %1231 = vmatpush1.msra.mxu0 0.0
  %1232 = vmatprep.subr.mxu0 0.0
  %1233 = vmatpush1.msra.mxu0 0.0
  %1234 = vmatprep.subr.mxu0 0.0
  %1235 = vmatpush1.msra.mxu0 0.0
  %1236 = vmatprep.mubr.f32.mxu0 0.0
  %1237 = vmatmul.mubr.f32.gmra.mrb[0].mxu0 %v1161
  %v1238 = vpop.f32.mrb[0].mxu0
  %v1239 = vadd.f32 %v1158, %v1238
  %v1240 = vpop.f32.mrb[0].mxu0
  %1241 = vmatprep.mubr.f32.mxu0 0.0
  %1242 = vmatmul.mubr.f32.gmra.mrb[0].mxu0 %v1164
  %v1243 = vpop.f32.mrb[0].mxu0
  %v1244 = vadd.f32 %v1158, %v1243
  %v1245 = vpop.f32.mrb[0].mxu0
  %1246 = vmatprep.mubr.f32.mxu0 0.0
  %1247 = vmatmul.mubr.f32.gmra.mrb[0].mxu0 %v1167
  %v1248 = vpop.f32.mrb[0].mxu0
  %v1249 = vadd.f32 %v1158, %v1248
  %v1250 = vpop.f32.mrb[0].mxu0
  %1251 = vmatprep.mubr.f32.mxu0 0.0
  %1252 = vmatmul.mubr.f32.gmra.mrb[0].mxu0 %v1170
  %v1253 = vpop.f32.mrb[0].mxu0
  %v1254 = vadd.f32 %v1158, %v1253
  %v1255 = vpop.f32.mrb[0].mxu0
  %1256 = vdwg.mxu0
  %v1257 = vpack.c.bf16 %v1244, %v1239
  %v1258 = vpack.c.bf16 %v1254, %v1249
  %v1259 = vmul.f32 %v1239, %v1239
  %v1260 = vmul.f32 %v1244, %v1244
  %v1261 = vmul.f32 %v1249, %v1249
  %v1262 = vmul.f32 %v1254, %v1254
  %vm1263 = vcmask 31744
  %v1264 = vsel %vm1263, %v1259, 0.0
  %1265 = vadd.xlane.f32.xlu0 %v1264
  %v1266 = vpop.xlane.xlu0 %1265
  %v1267 = vsel %vm1263, %v1260, 0.0
  %1268 = vadd.xlane.f32.xlu0 %v1267
  %v1269 = vpop.xlane.xlu0 %1268
  %v1270 = vsel %vm1263, %v1261, 0.0
  %1271 = vadd.xlane.f32.xlu0 %v1270
  %v1272 = vpop.xlane.xlu0 %1271
  %v1273 = vsel %vm1263, %v1262, 0.0
  %1274 = vadd.xlane.f32.xlu0 %v1273
  %v1275 = vpop.xlane.xlu0 %1274
  %v1276 = vsel %vm1263, 1.0, 0
  %v1279 = vsel %vm1263, %v1259, 0
  %v1282 = vsel %vm1263, %v1260, 0
  %v1285 = vsel %vm1263, %v1261, 0
  %v1288 = vsel %vm1263, %v1262, 0
  %1290 = vmatprep.subr.mxu0 0.0
  %1291 = vmatpush1.xpose.msra.mxu0 %v1279
  %1292 = vmatprep.subr.mxu0 0.0
  %1293 = vmatpush1.xpose.msra.mxu0 %v1282
  %1294 = vmatprep.subr.mxu0 0.0
  %1295 = vmatpush1.xpose.msra.mxu0 %v1285
  %1296 = vmatprep.subr.mxu0 0.0
  %1297 = vmatpush1.xpose.msra.mxu0 %v1288
  %1298 = vmatprep.subr.mxu0 0.0
  %1299 = vmatpush1.xpose.msra.mxu0 0.0
  %1300 = vmatprep.subr.mxu0 0.0
  %1301 = vmatpush1.xpose.msra.mxu0 0.0
  %1302 = vmatprep.subr.mxu0 0.0
  %1303 = vmatpush1.xpose.msra.mxu0 0.0
  %1304 = vmatprep.subr.mxu0 0.0
  %1305 = vmatpush1.xpose.msra.mxu0 0.0
  %1306 = vmatprep.subr.mxu0 0.0
  %1307 = vmatpush1.xpose.msra.mxu0 0.0
  %1308 = vmatprep.subr.mxu0 0.0
  %1309 = vmatpush1.xpose.msra.mxu0 0.0
  %1310 = vmatprep.subr.mxu0 0.0
  %1311 = vmatpush1.xpose.msra.mxu0 0.0
  %1312 = vmatprep.subr.mxu0 0.0
  %1313 = vmatpush1.xpose.msra.mxu0 0.0
  %1314 = vmatprep.subr.mxu0 0.0
  %1315 = vmatpush1.xpose.msra.mxu0 0.0
  %1316 = vmatprep.subr.mxu0 0.0
  %1317 = vmatpush1.xpose.msra.mxu0 0.0
  %1318 = vmatprep.subr.mxu0 0.0
  %1319 = vmatpush1.xpose.msra.mxu0 0.0
  %1320 = vmatprep.subr.mxu0 0.0
  %1321 = vmatpush1.xpose.msra.mxu0 0.0
  %1322 = vmatprep.subr.mxu0 0.0
  %1323 = vmatpush1.xpose.msra.mxu0 0.0
  %1324 = vmatprep.subr.mxu0 0.0
  %1325 = vmatpush1.xpose.msra.mxu0 0.0
  %1326 = vmatprep.subr.mxu0 0.0
  %1327 = vmatpush1.xpose.msra.mxu0 0.0
  %1328 = vmatprep.subr.mxu0 0.0
  %1329 = vmatpush1.xpose.msra.mxu0 0.0
  %1330 = vmatprep.subr.mxu0 0.0
  %1331 = vmatpush1.xpose.msra.mxu0 0.0
  %1332 = vmatprep.subr.mxu0 0.0
  %1333 = vmatpush1.xpose.msra.mxu0 0.0
  %1334 = vmatprep.subr.mxu0 0.0
  %1335 = vmatpush1.xpose.msra.mxu0 0.0
  %1336 = vmatprep.subr.mxu0 0.0
  %1337 = vmatpush1.xpose.msra.mxu0 0.0
  %1338 = vmatprep.subr.mxu0 0.0
  %1339 = vmatpush1.xpose.msra.mxu0 0.0
  %1340 = vmatprep.subr.mxu0 0.0
  %1341 = vmatpush1.xpose.msra.mxu0 0.0
  %1342 = vmatprep.subr.mxu0 0.0
  %1343 = vmatpush1.xpose.msra.mxu0 0.0
  %1344 = vmatprep.subr.mxu0 0.0
  %1345 = vmatpush1.xpose.msra.mxu0 0.0
  %1346 = vmatprep.subr.mxu0 0.0
  %1347 = vmatpush1.xpose.msra.mxu0 0.0
  %1348 = vmatprep.subr.mxu0 0.0
  %1349 = vmatpush1.xpose.msra.mxu0 0.0
  %1350 = vmatprep.subr.mxu0 0.0
  %1351 = vmatpush1.xpose.msra.mxu0 0.0
  %1352 = vmatprep.subr.mxu0 0.0
  %1353 = vmatpush1.xpose.msra.mxu0 0.0
  %1354 = vmatprep.mubr.f32.mxu0 0.0
  %1355 = vmatmul.mubr.f32.gmra.mrb[0].mxu0 %v1276
  %v1356 = vpop.f32.mrb[0].mxu0
  %v1357 = vadd.f32 0.0, %v1356
  %v1358 = vpop.f32.mrb[0].mxu0
  %1359 = vdwg.mxu0
  %v1361 = vsel %vm1263, %v1239, 0
  %v1364 = vsel %vm1263, %v1244, 0
  %v1367 = vsel %vm1263, %v1249, 0
  %v1370 = vsel %vm1263, %v1254, 0
  %1372 = vmatprep.subr.mxu0 0.0
  %1373 = vmatpush1.xpose.msra.mxu0 %v1361
  %1374 = vmatprep.subr.mxu0 0.0
  %1375 = vmatpush1.xpose.msra.mxu0 %v1364
  %1376 = vmatprep.subr.mxu0 0.0
  %1377 = vmatpush1.xpose.msra.mxu0 %v1367
  %1378 = vmatprep.subr.mxu0 0.0
  %1379 = vmatpush1.xpose.msra.mxu0 %v1370
  %1380 = vmatprep.subr.mxu0 0.0
  %1381 = vmatpush1.xpose.msra.mxu0 0.0
  %1382 = vmatprep.subr.mxu0 0.0
  %1383 = vmatpush1.xpose.msra.mxu0 0.0
  %1384 = vmatprep.subr.mxu0 0.0
  %1385 = vmatpush1.xpose.msra.mxu0 0.0
  %1386 = vmatprep.subr.mxu0 0.0
  %1387 = vmatpush1.xpose.msra.mxu0 0.0
  %1388 = vmatprep.subr.mxu0 0.0
  %1389 = vmatpush1.xpose.msra.mxu0 0.0
  %1390 = vmatprep.subr.mxu0 0.0
  %1391 = vmatpush1.xpose.msra.mxu0 0.0
  %1392 = vmatprep.subr.mxu0 0.0
  %1393 = vmatpush1.xpose.msra.mxu0 0.0
  %1394 = vmatprep.subr.mxu0 0.0
  %1395 = vmatpush1.xpose.msra.mxu0 0.0
  %1396 = vmatprep.subr.mxu0 0.0
  %1397 = vmatpush1.xpose.msra.mxu0 0.0
  %1398 = vmatprep.subr.mxu0 0.0
  %1399 = vmatpush1.xpose.msra.mxu0 0.0
  %1400 = vmatprep.subr.mxu0 0.0
  %1401 = vmatpush1.xpose.msra.mxu0 0.0
  %1402 = vmatprep.subr.mxu0 0.0
  %1403 = vmatpush1.xpose.msra.mxu0 0.0
  %1404 = vmatprep.subr.mxu0 0.0
  %1405 = vmatpush1.xpose.msra.mxu0 0.0
  %1406 = vmatprep.subr.mxu0 0.0
  %1407 = vmatpush1.xpose.msra.mxu0 0.0
  %1408 = vmatprep.subr.mxu0 0.0
  %1409 = vmatpush1.xpose.msra.mxu0 0.0
  %1410 = vmatprep.subr.mxu0 0.0
  %1411 = vmatpush1.xpose.msra.mxu0 0.0
  %1412 = vmatprep.subr.mxu0 0.0
  %1413 = vmatpush1.xpose.msra.mxu0 0.0
  %1414 = vmatprep.subr.mxu0 0.0
  %1415 = vmatpush1.xpose.msra.mxu0 0.0
  %1416 = vmatprep.subr.mxu0 0.0
  %1417 = vmatpush1.xpose.msra.mxu0 0.0
  %1418 = vmatprep.subr.mxu0 0.0
  %1419 = vmatpush1.xpose.msra.mxu0 0.0
  %1420 = vmatprep.subr.mxu0 0.0
  %1421 = vmatpush1.xpose.msra.mxu0 0.0
  %1422 = vmatprep.subr.mxu0 0.0
  %1423 = vmatpush1.xpose.msra.mxu0 0.0
  %1424 = vmatprep.subr.mxu0 0.0
  %1425 = vmatpush1.xpose.msra.mxu0 0.0
  %1426 = vmatprep.subr.mxu0 0.0
  %1427 = vmatpush1.xpose.msra.mxu0 0.0
  %1428 = vmatprep.subr.mxu0 0.0
  %1429 = vmatpush1.xpose.msra.mxu0 0.0
  %1430 = vmatprep.subr.mxu0 0.0
  %1431 = vmatpush1.xpose.msra.mxu0 0.0
  %1432 = vmatprep.subr.mxu0 0.0
  %1433 = vmatpush1.xpose.msra.mxu0 0.0
  %1434 = vmatprep.subr.mxu0 0.0
  %1435 = vmatpush1.xpose.msra.mxu0 0.0
  %1436 = vmatprep.mubr.f32.mxu0 0.0
  %1437 = vmatmul.mubr.f32.gmra.mrb[0].mxu0 %v1361
  %v1438 = vpop.f32.mrb[0].mxu0
  %v1439 = vadd.f32 0.0, %v1438
  %v1440 = vpop.f32.mrb[0].mxu0
  %1441 = vmatprep.mubr.f32.mxu0 0.0
  %1442 = vmatmul.mubr.f32.gmra.mrb[0].mxu0 %v1364
  %v1443 = vpop.f32.mrb[0].mxu0
  %v1444 = vadd.f32 0.0, %v1443
  %v1445 = vpop.f32.mrb[0].mxu0
  %1446 = vmatprep.mubr.f32.mxu0 0.0
  %1447 = vmatmul.mubr.f32.gmra.mrb[0].mxu0 %v1367
  %v1448 = vpop.f32.mrb[0].mxu0
  %v1449 = vadd.f32 0.0, %v1448
  %v1450 = vpop.f32.mrb[0].mxu0
  %1451 = vmatprep.mubr.f32.mxu0 0.0
  %1452 = vmatmul.mubr.f32.gmra.mrb[0].mxu0 %v1370
  %v1453 = vpop.f32.mrb[0].mxu0
  %v1454 = vadd.f32 0.0, %v1453
  %v1455 = vpop.f32.mrb[0].mxu0
  %1456 = vdwg.mxu0
  %v1457 = vlaneseq
  %v1458 = vshrl.u32 %v1457, 7
  %v1459 = vsub.s32 0, %v1458
  %v1460 = vrot.slane %v1357, %v1459
  %v1461 = vadd.f32 %v1266, %v1460
  %v1462 = vadd.f32 %v1269, %v1460
  %v1463 = vadd.f32 %v1272, %v1460
  %v1464 = vadd.f32 %v1275, %v1460
  %v1465 = vmul.f32 %v1439, 2.0
  %v1466 = vmul.f32 %v1444, 2.0
  %v1467 = vmul.f32 %v1449, 2.0
  %v1468 = vmul.f32 %v1454, 2.0
  %v1469 = vsub.f32 %v1461, %v1465
  %v1470 = vsub.f32 %v1462, %v1466
  %v1471 = vsub.f32 %v1463, %v1467
  %v1472 = vsub.f32 %v1464, %v1468
  %v1473 = vmax.f32 %v1469, 0.0
  %v1474 = vmax.f32 %v1470, 0.0
  %v1475 = vmax.f32 %v1471, 0.0
  %v1476 = vmax.f32 %v1472, 0.0
  %1477 = vset.pattern.permute.xlu0 0
  %1478 = vperm.xlu0 %1477, %v183
  %v1479 = vpop.permute.xlu0 %1478
  %1480 = vset.pattern.permute.xlu0 0
  %1481 = vperm.xlu0 %1480, %v184
  %v1482 = vpop.permute.xlu0 %1481
  %1483 = vset.pattern.permute.xlu0 0
  %1484 = vperm.xlu0 %1483, %v185
  %v1485 = vpop.permute.xlu0 %1484
  %1486 = vset.pattern.permute.xlu0 0
  %1487 = vperm.xlu0 %1486, %v186
  %v1488 = vpop.permute.xlu0 %1487
  %v1489 = vlaneseq
  %v1490 = vshrl.u32 %v1489, 7
  %v1491 = vsub.s32 0, %v1490
  %v1492 = vrot.slane %v187, %v1491
  %vm1493 = vcmp.eq.s32.totalorder %v1479, %v1492
  %vm1494 = vcmp.eq.s32.totalorder %v1482, %v1492
  %vm1495 = vcmp.eq.s32.totalorder %v1485, %v1492
  %vm1496 = vcmp.eq.s32.totalorder %v1488, %v1492
  %v1497 = vsel %vm1493, %v1473, 1e+30
  %v1498 = vsel %vm1494, %v1474, 1e+30
  %v1499 = vsel %vm1495, %v1475, 1e+30
  %v1500 = vsel %vm1496, %v1476, 1e+30
  %v1501 = vlaneseq
  %v1502 = vand.u32 %v1501, 127
  %v1503 = vadd.f32 %v1497, 1.0
  %v1504 = vadd.f32 %v1498, 1.0
  %v1505 = vadd.f32 %v1499, 1.0
  %v1506 = vadd.f32 %v1500, 1.0
  %v1511 = vand.u32 %v1503, 4294967264
  %v1512 = vand.u32 %v1504, 4294967264
  %v1513 = vand.u32 %v1505, 4294967264
  %v1514 = vand.u32 %v1506, 4294967264
  %v1515 = vor.u32 %v1511, %v1502
  %v1516 = vor.u32 %v1512, %v1502
  %v1517 = vor.u32 %v1513, %v1502
  %v1518 = vor.u32 %v1514, %v1502
  %v1523 = vsel %vm203, %v1515, inf
  %1524 = vmin.xlane.f32.xlu0 %v1523
  %v1525 = vpop.xlane.xlu0 %1524
  %v1526 = vsel %vm203, %v1516, inf
  %1527 = vmin.xlane.f32.xlu0 %v1526
  %v1528 = vpop.xlane.xlu0 %1527
  %v1529 = vsel %vm203, %v1517, inf
  %1530 = vmin.xlane.f32.xlu0 %v1529
  %v1531 = vpop.xlane.xlu0 %1530
  %v1532 = vsel %vm203, %v1518, inf
  %1533 = vmin.xlane.f32.xlu0 %v1532
  %v1534 = vpop.xlane.xlu0 %1533
  %v1539 = vand.u32 %v1525, 31
  %v1540 = vand.u32 %v1528, 31
  %v1541 = vand.u32 %v1531, 31
  %v1542 = vand.u32 %v1534, 31
  %v1543 = vand.u32 %v1525, 4294967264
  %v1544 = vand.u32 %v1528, 4294967264
  %v1545 = vand.u32 %v1531, 4294967264
  %v1546 = vand.u32 %v1534, 4294967264
  %v1551 = vsub.f32 %v1543, 1.0
  %v1552 = vsub.f32 %v1544, 1.0
  %v1553 = vsub.f32 %v1545, 1.0
  %v1554 = vsub.f32 %v1546, 1.0
  %v1555 = vmul.f32 %v1551, -10.0
  %v1556 = vmul.f32 %v1552, -10.0
  %v1557 = vmul.f32 %v1553, -10.0
  %v1558 = vmul.f32 %v1554, -10.0
  %v1559 = vmul.f32 %v1555, 1.442695
  %v1560 = vpow.pop %v1559
  %v1561 = vmul.f32 %v1556, 1.442695
  %v1562 = vpow.pop %v1561
  %v1563 = vmul.f32 %v1557, 1.442695
  %v1564 = vpow.pop %v1563
  %v1565 = vmul.f32 %v1558, 1.442695
  %v1566 = vpow.pop %v1565
  %vm1567 = vcmp.eq.s32.totalorder %v1502, %v1539
  %vm1568 = vcmp.eq.s32.totalorder %v1502, %v1540
  %vm1569 = vcmp.eq.s32.totalorder %v1502, %v1541
  %vm1570 = vcmp.eq.s32.totalorder %v1502, %v1542
  %v1571 = vsel %vm1567, %v1560, 0.0
  %v1572 = vsel %vm1568, %v1562, 0.0
  %v1573 = vsel %vm1569, %v1564, 0.0
  %v1574 = vsel %vm1570, %v1566, 0.0
  %v1575 = vadd.f32 %v1571, 0.0
  %v1576 = vadd.f32 %v1572, 0.0
  %v1577 = vadd.f32 %v1573, 0.0
  %v1578 = vadd.f32 %v1574, 0.0
  %v1579 = vpack.c.bf16 %v1572, %v1571
  %v1580 = vpack.c.bf16 %v1574, %v1573
  %1583 = vrot.lane.b32.xlu0 %v1257, 124
  %v1584 = vpop.permute.xlu0 %1583
  %1585 = vrot.lane.b32.xlu0 %v1258, 124
  %v1586 = vpop.permute.xlu0 %1585
  %v1590 = vsel %vm203, %v1579, 0
  %v1593 = vsel %vm203, %v1580, 0
  %1595 = vmatprep.subr.bf16.mxu0 0
  %1596 = vmatpush1.bf16.msra.mxu0 %v1584
  %1597 = vmatprep.subr.bf16.mxu0 0
  %1598 = vmatpush1.bf16.msra.mxu0 %v1586
  %1599 = vmatprep.subr.bf16.mxu0 0
  %1600 = vmatpush1.bf16.msra.mxu0 0
  %1601 = vmatprep.subr.bf16.mxu0 0
  %1602 = vmatpush1.bf16.msra.mxu0 0
  %1603 = vmatprep.subr.bf16.mxu0 0
  %1604 = vmatpush1.bf16.msra.mxu0 0
  %1605 = vmatprep.subr.bf16.mxu0 0
  %1606 = vmatpush1.bf16.msra.mxu0 0
  %1607 = vmatprep.subr.bf16.mxu0 0
  %1608 = vmatpush1.bf16.msra.mxu0 0
  %1609 = vmatprep.subr.bf16.mxu0 0
  %1610 = vmatpush1.bf16.msra.mxu0 0
  %1611 = vmatprep.subr.bf16.mxu0 0
  %1612 = vmatpush1.bf16.msra.mxu0 0
  %1613 = vmatprep.subr.bf16.mxu0 0
  %1614 = vmatpush1.bf16.msra.mxu0 0
  %1615 = vmatprep.subr.bf16.mxu0 0
  %1616 = vmatpush1.bf16.msra.mxu0 0
  %1617 = vmatprep.subr.bf16.mxu0 0
  %1618 = vmatpush1.bf16.msra.mxu0 0
  %1619 = vmatprep.subr.bf16.mxu0 0
  %1620 = vmatpush1.bf16.msra.mxu0 0
  %1621 = vmatprep.subr.bf16.mxu0 0
  %1622 = vmatpush1.bf16.msra.mxu0 0
  %1623 = vmatprep.subr.bf16.mxu0 0
  %1624 = vmatpush1.bf16.msra.mxu0 0
  %1625 = vmatprep.subr.bf16.mxu0 0
  %1626 = vmatpush1.bf16.msra.mxu0 0
  %1627 = vmatprep.mubr.bf16.mxu0 0
  %1628 = vmatmul.mubr.bf16.gmra.mrb[0].mxu0 %v1590
  %v1629 = vpop.f32.mrb[0].mxu0
  %v1630 = vadd.f32 0.0, %v1629
  %v1631 = vpop.f32.mrb[0].mxu0
  %v1632 = vpop.f32.mrb[0].mxu0
  %v1633 = vadd.f32 0.0, %v1632
  %v1634 = vpop.f32.mrb[0].mxu0
  %1635 = vmatprep.mubr.bf16.mxu0 0
  %1636 = vmatmul.mubr.bf16.gmra.mrb[0].mxu0 %v1593
  %v1637 = vpop.f32.mrb[0].mxu0
  %v1638 = vadd.f32 0.0, %v1637
  %v1639 = vpop.f32.mrb[0].mxu0
  %v1640 = vpop.f32.mrb[0].mxu0
  %v1641 = vadd.f32 0.0, %v1640
  %v1642 = vpop.f32.mrb[0].mxu0
  %1643 = vdwg.mxu0
  %v1644 = vmax.f32 %v1630, -1e+30
  %v1645 = vmax.f32 %v1633, -1e+30
  %v1646 = vmax.f32 %v1638, -1e+30
  %v1647 = vmax.f32 %v1641, -1e+30
  %v1648 = vsel %vm1567, 3e+38, %v1515
  %v1649 = vsel %vm1568, 3e+38, %v1516
  %v1650 = vsel %vm1569, 3e+38, %v1517
  %v1651 = vsel %vm1570, 3e+38, %v1518
  %v1652 = vsel %vm203, %v1648, inf
  %1653 = vmin.xlane.f32.xlu0 %v1652
  %v1654 = vpop.xlane.xlu0 %1653
  %v1655 = vsel %vm203, %v1649, inf
  %1656 = vmin.xlane.f32.xlu0 %v1655
  %v1657 = vpop.xlane.xlu0 %1656
  %v1658 = vsel %vm203, %v1650, inf
  %1659 = vmin.xlane.f32.xlu0 %v1658
  %v1660 = vpop.xlane.xlu0 %1659
  %v1661 = vsel %vm203, %v1651, inf
  %1662 = vmin.xlane.f32.xlu0 %v1661
  %v1663 = vpop.xlane.xlu0 %1662
  %v1668 = vand.u32 %v1654, 31
  %v1669 = vand.u32 %v1657, 31
  %v1670 = vand.u32 %v1660, 31
  %v1671 = vand.u32 %v1663, 31
  %v1672 = vand.u32 %v1654, 4294967264
  %v1673 = vand.u32 %v1657, 4294967264
  %v1674 = vand.u32 %v1660, 4294967264
  %v1675 = vand.u32 %v1663, 4294967264
  %v1680 = vsub.f32 %v1672, 1.0
  %v1681 = vsub.f32 %v1673, 1.0
  %v1682 = vsub.f32 %v1674, 1.0
  %v1683 = vsub.f32 %v1675, 1.0
  %v1684 = vmul.f32 %v1680, -10.0
  %v1685 = vmul.f32 %v1681, -10.0
  %v1686 = vmul.f32 %v1682, -10.0
  %v1687 = vmul.f32 %v1683, -10.0
  %v1688 = vmul.f32 %v1684, 1.442695
  %v1689 = vpow.pop %v1688
  %v1690 = vmul.f32 %v1685, 1.442695
  %v1691 = vpow.pop %v1690
  %v1692 = vmul.f32 %v1686, 1.442695
  %v1693 = vpow.pop %v1692
  %v1694 = vmul.f32 %v1687, 1.442695
  %v1695 = vpow.pop %v1694
  %vm1696 = vcmp.eq.s32.totalorder %v1502, %v1668
  %vm1697 = vcmp.eq.s32.totalorder %v1502, %v1669
  %vm1698 = vcmp.eq.s32.totalorder %v1502, %v1670
  %vm1699 = vcmp.eq.s32.totalorder %v1502, %v1671
  %v1700 = vsel %vm1696, %v1689, 0.0
  %v1701 = vsel %vm1697, %v1691, 0.0
  %v1702 = vsel %vm1698, %v1693, 0.0
  %v1703 = vsel %vm1699, %v1695, 0.0
  %v1704 = vadd.f32 %v1575, %v1700
  %v1705 = vadd.f32 %v1576, %v1701
  %v1706 = vadd.f32 %v1577, %v1702
  %v1707 = vadd.f32 %v1578, %v1703
  %v1708 = vpack.c.bf16 %v1701, %v1700
  %v1709 = vpack.c.bf16 %v1703, %v1702
  %v1711 = vsel %vm203, %v1708, 0
  %v1714 = vsel %vm203, %v1709, 0
  %1716 = vmatprep.subr.bf16.mxu0 0
  %1717 = vmatpush1.bf16.msra.mxu0 %v1584
  %1718 = vmatprep.subr.bf16.mxu0 0
  %1719 = vmatpush1.bf16.msra.mxu0 %v1586
  %1720 = vmatprep.subr.bf16.mxu0 0
  %1721 = vmatpush1.bf16.msra.mxu0 0
  %1722 = vmatprep.subr.bf16.mxu0 0
  %1723 = vmatpush1.bf16.msra.mxu0 0
  %1724 = vmatprep.subr.bf16.mxu0 0
  %1725 = vmatpush1.bf16.msra.mxu0 0
  %1726 = vmatprep.subr.bf16.mxu0 0
  %1727 = vmatpush1.bf16.msra.mxu0 0
  %1728 = vmatprep.subr.bf16.mxu0 0
  %1729 = vmatpush1.bf16.msra.mxu0 0
  %1730 = vmatprep.subr.bf16.mxu0 0
  %1731 = vmatpush1.bf16.msra.mxu0 0
  %1732 = vmatprep.subr.bf16.mxu0 0
  %1733 = vmatpush1.bf16.msra.mxu0 0
  %1734 = vmatprep.subr.bf16.mxu0 0
  %1735 = vmatpush1.bf16.msra.mxu0 0
  %1736 = vmatprep.subr.bf16.mxu0 0
  %1737 = vmatpush1.bf16.msra.mxu0 0
  %1738 = vmatprep.subr.bf16.mxu0 0
  %1739 = vmatpush1.bf16.msra.mxu0 0
  %1740 = vmatprep.subr.bf16.mxu0 0
  %1741 = vmatpush1.bf16.msra.mxu0 0
  %1742 = vmatprep.subr.bf16.mxu0 0
  %1743 = vmatpush1.bf16.msra.mxu0 0
  %1744 = vmatprep.subr.bf16.mxu0 0
  %1745 = vmatpush1.bf16.msra.mxu0 0
  %1746 = vmatprep.subr.bf16.mxu0 0
  %1747 = vmatpush1.bf16.msra.mxu0 0
  %1748 = vmatprep.mubr.bf16.mxu0 0
  %1749 = vmatmul.mubr.bf16.gmra.mrb[0].mxu0 %v1711
  %v1750 = vpop.f32.mrb[0].mxu0
  %v1751 = vadd.f32 0.0, %v1750
  %v1752 = vpop.f32.mrb[0].mxu0
  %v1753 = vpop.f32.mrb[0].mxu0
  %v1754 = vadd.f32 0.0, %v1753
  %v1755 = vpop.f32.mrb[0].mxu0
  %1756 = vmatprep.mubr.bf16.mxu0 0
  %1757 = vmatmul.mubr.bf16.gmra.mrb[0].mxu0 %v1714
  %v1758 = vpop.f32.mrb[0].mxu0
  %v1759 = vadd.f32 0.0, %v1758
  %v1760 = vpop.f32.mrb[0].mxu0
  %v1761 = vpop.f32.mrb[0].mxu0
  %v1762 = vadd.f32 0.0, %v1761
  %v1763 = vpop.f32.mrb[0].mxu0
  %1764 = vdwg.mxu0
  %v1765 = vmax.f32 %v1644, %v1751
  %v1766 = vmax.f32 %v1645, %v1754
  %v1767 = vmax.f32 %v1646, %v1759
  %v1768 = vmax.f32 %v1647, %v1762
  %v1769 = vsel %vm1696, 3e+38, %v1648
  %v1770 = vsel %vm1697, 3e+38, %v1649
  %v1771 = vsel %vm1698, 3e+38, %v1650
  %v1772 = vsel %vm1699, 3e+38, %v1651
  %v1773 = vsel %vm203, %v1769, inf
  %1774 = vmin.xlane.f32.xlu0 %v1773
  %v1775 = vpop.xlane.xlu0 %1774
  %v1776 = vsel %vm203, %v1770, inf
  %1777 = vmin.xlane.f32.xlu0 %v1776
  %v1778 = vpop.xlane.xlu0 %1777
  %v1779 = vsel %vm203, %v1771, inf
  %1780 = vmin.xlane.f32.xlu0 %v1779
  %v1781 = vpop.xlane.xlu0 %1780
  %v1782 = vsel %vm203, %v1772, inf
  %1783 = vmin.xlane.f32.xlu0 %v1782
  %v1784 = vpop.xlane.xlu0 %1783
  %v1789 = vand.u32 %v1775, 31
  %v1790 = vand.u32 %v1778, 31
  %v1791 = vand.u32 %v1781, 31
  %v1792 = vand.u32 %v1784, 31
  %v1793 = vand.u32 %v1775, 4294967264
  %v1794 = vand.u32 %v1778, 4294967264
  %v1795 = vand.u32 %v1781, 4294967264
  %v1796 = vand.u32 %v1784, 4294967264
  %v1801 = vsub.f32 %v1793, 1.0
  %v1802 = vsub.f32 %v1794, 1.0
  %v1803 = vsub.f32 %v1795, 1.0
  %v1804 = vsub.f32 %v1796, 1.0
  %v1805 = vmul.f32 %v1801, -10.0
  %v1806 = vmul.f32 %v1802, -10.0
  %v1807 = vmul.f32 %v1803, -10.0
  %v1808 = vmul.f32 %v1804, -10.0
  %v1809 = vmul.f32 %v1805, 1.442695
  %v1810 = vpow.pop %v1809
  %v1811 = vmul.f32 %v1806, 1.442695
  %v1812 = vpow.pop %v1811
  %v1813 = vmul.f32 %v1807, 1.442695
  %v1814 = vpow.pop %v1813
  %v1815 = vmul.f32 %v1808, 1.442695
  %v1816 = vpow.pop %v1815
  %vm1817 = vcmp.eq.s32.totalorder %v1502, %v1789
  %vm1818 = vcmp.eq.s32.totalorder %v1502, %v1790
  %vm1819 = vcmp.eq.s32.totalorder %v1502, %v1791
  %vm1820 = vcmp.eq.s32.totalorder %v1502, %v1792
  %v1821 = vsel %vm1817, %v1810, 0.0
  %v1822 = vsel %vm1818, %v1812, 0.0
  %v1823 = vsel %vm1819, %v1814, 0.0
  %v1824 = vsel %vm1820, %v1816, 0.0
  %v1825 = vadd.f32 %v1704, %v1821
  %v1826 = vadd.f32 %v1705, %v1822
  %v1827 = vadd.f32 %v1706, %v1823
  %v1828 = vadd.f32 %v1707, %v1824
  %v1829 = vpack.c.bf16 %v1822, %v1821
  %v1830 = vpack.c.bf16 %v1824, %v1823
  %v1832 = vsel %vm203, %v1829, 0
  %v1835 = vsel %vm203, %v1830, 0
  %1837 = vmatprep.subr.bf16.mxu0 0
  %1838 = vmatpush1.bf16.msra.mxu0 %v1584
  %1839 = vmatprep.subr.bf16.mxu0 0
  %1840 = vmatpush1.bf16.msra.mxu0 %v1586
  %1841 = vmatprep.subr.bf16.mxu0 0
  %1842 = vmatpush1.bf16.msra.mxu0 0
  %1843 = vmatprep.subr.bf16.mxu0 0
  %1844 = vmatpush1.bf16.msra.mxu0 0
  %1845 = vmatprep.subr.bf16.mxu0 0
  %1846 = vmatpush1.bf16.msra.mxu0 0
  %1847 = vmatprep.subr.bf16.mxu0 0
  %1848 = vmatpush1.bf16.msra.mxu0 0
  %1849 = vmatprep.subr.bf16.mxu0 0
  %1850 = vmatpush1.bf16.msra.mxu0 0
  %1851 = vmatprep.subr.bf16.mxu0 0
  %1852 = vmatpush1.bf16.msra.mxu0 0
  %1853 = vmatprep.subr.bf16.mxu0 0
  %1854 = vmatpush1.bf16.msra.mxu0 0
  %1855 = vmatprep.subr.bf16.mxu0 0
  %1856 = vmatpush1.bf16.msra.mxu0 0
  %1857 = vmatprep.subr.bf16.mxu0 0
  %1858 = vmatpush1.bf16.msra.mxu0 0
  %1859 = vmatprep.subr.bf16.mxu0 0
  %1860 = vmatpush1.bf16.msra.mxu0 0
  %1861 = vmatprep.subr.bf16.mxu0 0
  %1862 = vmatpush1.bf16.msra.mxu0 0
  %1863 = vmatprep.subr.bf16.mxu0 0
  %1864 = vmatpush1.bf16.msra.mxu0 0
  %1865 = vmatprep.subr.bf16.mxu0 0
  %1866 = vmatpush1.bf16.msra.mxu0 0
  %1867 = vmatprep.subr.bf16.mxu0 0
  %1868 = vmatpush1.bf16.msra.mxu0 0
  %1869 = vmatprep.mubr.bf16.mxu0 0
  %1870 = vmatmul.mubr.bf16.gmra.mrb[0].mxu0 %v1832
  %v1871 = vpop.f32.mrb[0].mxu0
  %v1872 = vadd.f32 0.0, %v1871
  %v1873 = vpop.f32.mrb[0].mxu0
  %v1874 = vpop.f32.mrb[0].mxu0
  %v1875 = vadd.f32 0.0, %v1874
  %v1876 = vpop.f32.mrb[0].mxu0
  %1877 = vmatprep.mubr.bf16.mxu0 0
  %1878 = vmatmul.mubr.bf16.gmra.mrb[0].mxu0 %v1835
  %v1879 = vpop.f32.mrb[0].mxu0
  %v1880 = vadd.f32 0.0, %v1879
  %v1881 = vpop.f32.mrb[0].mxu0
  %v1882 = vpop.f32.mrb[0].mxu0
  %v1883 = vadd.f32 0.0, %v1882
  %v1884 = vpop.f32.mrb[0].mxu0
  %1885 = vdwg.mxu0
  %v1886 = vmax.f32 %v1765, %v1872
  %v1887 = vmax.f32 %v1766, %v1875
  %v1888 = vmax.f32 %v1767, %v1880
  %v1889 = vmax.f32 %v1768, %v1883
  %v1890 = vsel %vm1817, 3e+38, %v1769
  %v1891 = vsel %vm1818, 3e+38, %v1770
  %v1892 = vsel %vm1819, 3e+38, %v1771
  %v1893 = vsel %vm1820, 3e+38, %v1772
  %v1894 = vsel %vm203, %v1890, inf
  %1895 = vmin.xlane.f32.xlu0 %v1894
  %v1896 = vpop.xlane.xlu0 %1895
  %v1897 = vsel %vm203, %v1891, inf
  %1898 = vmin.xlane.f32.xlu0 %v1897
  %v1899 = vpop.xlane.xlu0 %1898
  %v1900 = vsel %vm203, %v1892, inf
  %1901 = vmin.xlane.f32.xlu0 %v1900
  %v1902 = vpop.xlane.xlu0 %1901
  %v1903 = vsel %vm203, %v1893, inf
  %1904 = vmin.xlane.f32.xlu0 %v1903
  %v1905 = vpop.xlane.xlu0 %1904
  %v1910 = vand.u32 %v1896, 31
  %v1911 = vand.u32 %v1899, 31
  %v1912 = vand.u32 %v1902, 31
  %v1913 = vand.u32 %v1905, 31
  %v1914 = vand.u32 %v1896, 4294967264
  %v1915 = vand.u32 %v1899, 4294967264
  %v1916 = vand.u32 %v1902, 4294967264
  %v1917 = vand.u32 %v1905, 4294967264
  %v1922 = vsub.f32 %v1914, 1.0
  %v1923 = vsub.f32 %v1915, 1.0
  %v1924 = vsub.f32 %v1916, 1.0
  %v1925 = vsub.f32 %v1917, 1.0
  %v1926 = vmul.f32 %v1922, -10.0
  %v1927 = vmul.f32 %v1923, -10.0
  %v1928 = vmul.f32 %v1924, -10.0
  %v1929 = vmul.f32 %v1925, -10.0
  %v1930 = vmul.f32 %v1926, 1.442695
  %v1931 = vpow.pop %v1930
  %v1932 = vmul.f32 %v1927, 1.442695
  %v1933 = vpow.pop %v1932
  %v1934 = vmul.f32 %v1928, 1.442695
  %v1935 = vpow.pop %v1934
  %v1936 = vmul.f32 %v1929, 1.442695
  %v1937 = vpow.pop %v1936
  %vm1938 = vcmp.eq.s32.totalorder %v1502, %v1910
  %vm1939 = vcmp.eq.s32.totalorder %v1502, %v1911
  %vm1940 = vcmp.eq.s32.totalorder %v1502, %v1912
  %vm1941 = vcmp.eq.s32.totalorder %v1502, %v1913
  %v1942 = vsel %vm1938, %v1931, 0.0
  %v1943 = vsel %vm1939, %v1933, 0.0
  %v1944 = vsel %vm1940, %v1935, 0.0
  %v1945 = vsel %vm1941, %v1937, 0.0
  %v1946 = vadd.f32 %v1825, %v1942
  %v1947 = vadd.f32 %v1826, %v1943
  %v1948 = vadd.f32 %v1827, %v1944
  %v1949 = vadd.f32 %v1828, %v1945
  %v1950 = vpack.c.bf16 %v1943, %v1942
  %v1951 = vpack.c.bf16 %v1945, %v1944
  %v1953 = vsel %vm203, %v1950, 0
  %v1956 = vsel %vm203, %v1951, 0
  %1958 = vmatprep.subr.bf16.mxu0 0
  %1959 = vmatpush1.bf16.msra.mxu0 %v1584
  %1960 = vmatprep.subr.bf16.mxu0 0
  %1961 = vmatpush1.bf16.msra.mxu0 %v1586
  %1962 = vmatprep.subr.bf16.mxu0 0
  %1963 = vmatpush1.bf16.msra.mxu0 0
  %1964 = vmatprep.subr.bf16.mxu0 0
  %1965 = vmatpush1.bf16.msra.mxu0 0
  %1966 = vmatprep.subr.bf16.mxu0 0
  %1967 = vmatpush1.bf16.msra.mxu0 0
  %1968 = vmatprep.subr.bf16.mxu0 0
  %1969 = vmatpush1.bf16.msra.mxu0 0
  %1970 = vmatprep.subr.bf16.mxu0 0
  %1971 = vmatpush1.bf16.msra.mxu0 0
  %1972 = vmatprep.subr.bf16.mxu0 0
  %1973 = vmatpush1.bf16.msra.mxu0 0
  %1974 = vmatprep.subr.bf16.mxu0 0
  %1975 = vmatpush1.bf16.msra.mxu0 0
  %1976 = vmatprep.subr.bf16.mxu0 0
  %1977 = vmatpush1.bf16.msra.mxu0 0
  %1978 = vmatprep.subr.bf16.mxu0 0
  %1979 = vmatpush1.bf16.msra.mxu0 0
  %1980 = vmatprep.subr.bf16.mxu0 0
  %1981 = vmatpush1.bf16.msra.mxu0 0
  %1982 = vmatprep.subr.bf16.mxu0 0
  %1983 = vmatpush1.bf16.msra.mxu0 0
  %1984 = vmatprep.subr.bf16.mxu0 0
  %1985 = vmatpush1.bf16.msra.mxu0 0
  %1986 = vmatprep.subr.bf16.mxu0 0
  %1987 = vmatpush1.bf16.msra.mxu0 0
  %1988 = vmatprep.subr.bf16.mxu0 0
  %1989 = vmatpush1.bf16.msra.mxu0 0
  %1990 = vmatprep.mubr.bf16.mxu0 0
  %1991 = vmatmul.mubr.bf16.gmra.mrb[0].mxu0 %v1953
  %v1992 = vpop.f32.mrb[0].mxu0
  %v1993 = vadd.f32 0.0, %v1992
  %v1994 = vpop.f32.mrb[0].mxu0
  %v1995 = vpop.f32.mrb[0].mxu0
  %v1996 = vadd.f32 0.0, %v1995
  %v1997 = vpop.f32.mrb[0].mxu0
  %1998 = vmatprep.mubr.bf16.mxu0 0
  %1999 = vmatmul.mubr.bf16.gmra.mrb[0].mxu0 %v1956
  %v2000 = vpop.f32.mrb[0].mxu0
  %v2001 = vadd.f32 0.0, %v2000
  %v2002 = vpop.f32.mrb[0].mxu0
  %v2003 = vpop.f32.mrb[0].mxu0
  %v2004 = vadd.f32 0.0, %v2003
  %v2005 = vpop.f32.mrb[0].mxu0
  %2006 = vdwg.mxu0
  %v2007 = vmax.f32 %v1886, %v1993
  %v2008 = vmax.f32 %v1887, %v1996
  %v2009 = vmax.f32 %v1888, %v2001
  %v2010 = vmax.f32 %v1889, %v2004
  %v2011 = vpack.c.bf16 %v1947, %v1946
  %v2012 = vpack.c.bf16 %v1949, %v1948
  %v2014 = vsel %vm203, %v2011, 0
  %v2017 = vsel %vm203, %v2012, 0
  %2019 = vmatprep.subr.bf16.mxu0 0
  %2020 = vmatpush1.bf16.msra.mxu0 %v1584
  %2021 = vmatprep.subr.bf16.mxu0 0
  %2022 = vmatpush1.bf16.msra.mxu0 %v1586
  %2023 = vmatprep.subr.bf16.mxu0 0
  %2024 = vmatpush1.bf16.msra.mxu0 0
  %2025 = vmatprep.subr.bf16.mxu0 0
  %2026 = vmatpush1.bf16.msra.mxu0 0
  %2027 = vmatprep.subr.bf16.mxu0 0
  %2028 = vmatpush1.bf16.msra.mxu0 0
  %2029 = vmatprep.subr.bf16.mxu0 0
  %2030 = vmatpush1.bf16.msra.mxu0 0
  %2031 = vmatprep.subr.bf16.mxu0 0
  %2032 = vmatpush1.bf16.msra.mxu0 0
  %2033 = vmatprep.subr.bf16.mxu0 0
  %2034 = vmatpush1.bf16.msra.mxu0 0
  %2035 = vmatprep.subr.bf16.mxu0 0
  %2036 = vmatpush1.bf16.msra.mxu0 0
  %2037 = vmatprep.subr.bf16.mxu0 0
  %2038 = vmatpush1.bf16.msra.mxu0 0
  %2039 = vmatprep.subr.bf16.mxu0 0
  %2040 = vmatpush1.bf16.msra.mxu0 0
  %2041 = vmatprep.subr.bf16.mxu0 0
  %2042 = vmatpush1.bf16.msra.mxu0 0
  %2043 = vmatprep.subr.bf16.mxu0 0
  %2044 = vmatpush1.bf16.msra.mxu0 0
  %2045 = vmatprep.subr.bf16.mxu0 0
  %2046 = vmatpush1.bf16.msra.mxu0 0
  %2047 = vmatprep.subr.bf16.mxu0 0
  %2048 = vmatpush1.bf16.msra.mxu0 0
  %2049 = vmatprep.subr.bf16.mxu0 0
  %2050 = vmatpush1.bf16.msra.mxu0 0
  %2051 = vmatprep.mubr.bf16.mxu0 0
  %2052 = vmatmul.mubr.bf16.gmra.mrb[0].mxu0 %v2014
  %v2053 = vpop.f32.mrb[0].mxu0
  %v2054 = vadd.f32 0.0, %v2053
  %v2055 = vpop.f32.mrb[0].mxu0
  %v2056 = vpop.f32.mrb[0].mxu0
  %v2057 = vadd.f32 0.0, %v2056
  %v2058 = vpop.f32.mrb[0].mxu0
  %2059 = vmatprep.mubr.bf16.mxu0 0
  %2060 = vmatmul.mubr.bf16.gmra.mrb[0].mxu0 %v2017
  %v2061 = vpop.f32.mrb[0].mxu0
  %v2062 = vadd.f32 0.0, %v2061
  %v2063 = vpop.f32.mrb[0].mxu0
  %v2064 = vpop.f32.mrb[0].mxu0
  %v2065 = vadd.f32 0.0, %v2064
  %v2066 = vpop.f32.mrb[0].mxu0
  %2067 = vdwg.mxu0
  %v2068 = vmul.f32 %v2054, 0.25
  %v2069 = vmul.f32 %v2057, 0.25
  %v2070 = vmul.f32 %v2062, 0.25
  %v2071 = vmul.f32 %v2065, 0.25
  %v2072 = vpack.c.bf16 %v1151, %v1150
  %v2073 = vpack.c.bf16 %v1153, %v1152
  %v2074 = vpack.c.bf16 %v412, %v411
  %v2075 = vpack.c.bf16 %v414, %v413
  %v2076 = vpack.c.bf16 %v2069, %v2068
  %v2077 = vpack.c.bf16 %v2071, %v2070
  %v2078 = vpack.c.bf16 %v416, %v415
  %v2079 = vpack.c.bf16 %v418, %v417
  %v2081 = vsel %vm203, %v2076, 0
  %v2084 = vsel %vm203, %v2077, 0
  %2086 = vmatprep.subr.bf16.mxu0 0
  %2087 = vmatpush1.bf16.msra.mxu0 %v2078
  %2088 = vmatprep.subr.bf16.mxu0 0
  %2089 = vmatpush1.bf16.msra.mxu0 %v2079
  %2090 = vmatprep.subr.bf16.mxu0 0
  %2091 = vmatpush1.bf16.msra.mxu0 0
  %2092 = vmatprep.subr.bf16.mxu0 0
  %2093 = vmatpush1.bf16.msra.mxu0 0
  %2094 = vmatprep.subr.bf16.mxu0 0
  %2095 = vmatpush1.bf16.msra.mxu0 0
  %2096 = vmatprep.subr.bf16.mxu0 0
  %2097 = vmatpush1.bf16.msra.mxu0 0
  %2098 = vmatprep.subr.bf16.mxu0 0
  %2099 = vmatpush1.bf16.msra.mxu0 0
  %2100 = vmatprep.subr.bf16.mxu0 0
  %2101 = vmatpush1.bf16.msra.mxu0 0
  %2102 = vmatprep.subr.bf16.mxu0 0
  %2103 = vmatpush1.bf16.msra.mxu0 0
  %2104 = vmatprep.subr.bf16.mxu0 0
  %2105 = vmatpush1.bf16.msra.mxu0 0
  %2106 = vmatprep.subr.bf16.mxu0 0
  %2107 = vmatpush1.bf16.msra.mxu0 0
  %2108 = vmatprep.subr.bf16.mxu0 0
  %2109 = vmatpush1.bf16.msra.mxu0 0
  %2110 = vmatprep.subr.bf16.mxu0 0
  %2111 = vmatpush1.bf16.msra.mxu0 0
  %2112 = vmatprep.subr.bf16.mxu0 0
  %2113 = vmatpush1.bf16.msra.mxu0 0
  %2114 = vmatprep.subr.bf16.mxu0 0
  %2115 = vmatpush1.bf16.msra.mxu0 0
  %2116 = vmatprep.subr.bf16.mxu0 0
  %2117 = vmatpush1.bf16.msra.mxu0 0
  %2118 = vmatprep.mubr.bf16.mxu0 0
  %2119 = vmatmul.mubr.bf16.gmra.mrb[0].mxu0 %v2081
  %v2120 = vpop.f32.mrb[0].mxu0
  %v2121 = vadd.f32 0.0, %v2120
  %v2122 = vpop.f32.mrb[0].mxu0
  %v2123 = vpop.f32.mrb[0].mxu0
  %v2124 = vadd.f32 0.0, %v2123
  %v2125 = vpop.f32.mrb[0].mxu0
  %2126 = vmatprep.mubr.bf16.mxu0 0
  %2127 = vmatmul.mubr.bf16.gmra.mrb[0].mxu0 %v2084
  %v2128 = vpop.f32.mrb[0].mxu0
  %v2129 = vadd.f32 0.0, %v2128
  %v2130 = vpop.f32.mrb[0].mxu0
  %v2131 = vpop.f32.mrb[0].mxu0
  %v2132 = vadd.f32 0.0, %v2131
  %v2133 = vpop.f32.mrb[0].mxu0
  %2134 = vdwg.mxu0
  %v2136 = vsel %vm203, %v2072, 0
  %v2139 = vsel %vm203, %v2073, 0
  %2141 = vmatprep.subr.bf16.mxu0 0
  %2142 = vmatpush1.bf16.msra.mxu0 %v2074
  %2143 = vmatprep.subr.bf16.mxu0 0
  %2144 = vmatpush1.bf16.msra.mxu0 %v2075
  %2145 = vmatprep.subr.bf16.mxu0 0
  %2146 = vmatpush1.bf16.msra.mxu0 0
  %2147 = vmatprep.subr.bf16.mxu0 0
  %2148 = vmatpush1.bf16.msra.mxu0 0
  %2149 = vmatprep.subr.bf16.mxu0 0
  %2150 = vmatpush1.bf16.msra.mxu0 0
  %2151 = vmatprep.subr.bf16.mxu0 0
  %2152 = vmatpush1.bf16.msra.mxu0 0
  %2153 = vmatprep.subr.bf16.mxu0 0
  %2154 = vmatpush1.bf16.msra.mxu0 0
  %2155 = vmatprep.subr.bf16.mxu0 0
  %2156 = vmatpush1.bf16.msra.mxu0 0
  %2157 = vmatprep.subr.bf16.mxu0 0
  %2158 = vmatpush1.bf16.msra.mxu0 0
  %2159 = vmatprep.subr.bf16.mxu0 0
  %2160 = vmatpush1.bf16.msra.mxu0 0
  %2161 = vmatprep.subr.bf16.mxu0 0
  %2162 = vmatpush1.bf16.msra.mxu0 0
  %2163 = vmatprep.subr.bf16.mxu0 0
  %2164 = vmatpush1.bf16.msra.mxu0 0
  %2165 = vmatprep.subr.bf16.mxu0 0
  %2166 = vmatpush1.bf16.msra.mxu0 0
  %2167 = vmatprep.subr.bf16.mxu0 0
  %2168 = vmatpush1.bf16.msra.mxu0 0
  %2169 = vmatprep.subr.bf16.mxu0 0
  %2170 = vmatpush1.bf16.msra.mxu0 0
  %2171 = vmatprep.subr.bf16.mxu0 0
  %2172 = vmatpush1.bf16.msra.mxu0 0
  %2173 = vmatprep.mubr.bf16.mxu0 0
  %2174 = vmatmul.mubr.bf16.gmra.mrb[0].mxu0 %v2136
  %v2175 = vpop.f32.mrb[0].mxu0
  %v2176 = vadd.f32 %v2121, %v2175
  %v2177 = vpop.f32.mrb[0].mxu0
  %v2178 = vpop.f32.mrb[0].mxu0
  %v2179 = vadd.f32 %v2124, %v2178
  %v2180 = vpop.f32.mrb[0].mxu0
  %2181 = vmatprep.mubr.bf16.mxu0 0
  %2182 = vmatmul.mubr.bf16.gmra.mrb[0].mxu0 %v2139
  %v2183 = vpop.f32.mrb[0].mxu0
  %v2184 = vadd.f32 %v2129, %v2183
  %v2185 = vpop.f32.mrb[0].mxu0
  %v2186 = vpop.f32.mrb[0].mxu0
  %v2187 = vadd.f32 %v2132, %v2186
  %v2188 = vpop.f32.mrb[0].mxu0
  %2189 = vdwg.mxu0
  %v2190 = vpack.c.bf16 %v2008, %v2007
  %v2191 = vpack.c.bf16 %v2010, %v2009
  %v2192 = vpack.c.bf16 %v420, %v419
  %v2193 = vpack.c.bf16 %v422, %v421
  %v2195 = vsel %vm203, %v2190, 0
  %v2198 = vsel %vm203, %v2191, 0
  %2200 = vmatprep.subr.bf16.mxu0 0
  %2201 = vmatpush1.bf16.msra.mxu0 %v2192
  %2202 = vmatprep.subr.bf16.mxu0 0
  %2203 = vmatpush1.bf16.msra.mxu0 %v2193
  %2204 = vmatprep.subr.bf16.mxu0 0
  %2205 = vmatpush1.bf16.msra.mxu0 0
  %2206 = vmatprep.subr.bf16.mxu0 0
  %2207 = vmatpush1.bf16.msra.mxu0 0
  %2208 = vmatprep.subr.bf16.mxu0 0
  %2209 = vmatpush1.bf16.msra.mxu0 0
  %2210 = vmatprep.subr.bf16.mxu0 0
  %2211 = vmatpush1.bf16.msra.mxu0 0
  %2212 = vmatprep.subr.bf16.mxu0 0
  %2213 = vmatpush1.bf16.msra.mxu0 0
  %2214 = vmatprep.subr.bf16.mxu0 0
  %2215 = vmatpush1.bf16.msra.mxu0 0
  %2216 = vmatprep.subr.bf16.mxu0 0
  %2217 = vmatpush1.bf16.msra.mxu0 0
  %2218 = vmatprep.subr.bf16.mxu0 0
  %2219 = vmatpush1.bf16.msra.mxu0 0
  %2220 = vmatprep.subr.bf16.mxu0 0
  %2221 = vmatpush1.bf16.msra.mxu0 0
  %2222 = vmatprep.subr.bf16.mxu0 0
  %2223 = vmatpush1.bf16.msra.mxu0 0
  %2224 = vmatprep.subr.bf16.mxu0 0
  %2225 = vmatpush1.bf16.msra.mxu0 0
  %2226 = vmatprep.subr.bf16.mxu0 0
  %2227 = vmatpush1.bf16.msra.mxu0 0
  %2228 = vmatprep.subr.bf16.mxu0 0
  %2229 = vmatpush1.bf16.msra.mxu0 0
  %2230 = vmatprep.subr.bf16.mxu0 0
  %2231 = vmatpush1.bf16.msra.mxu0 0
  %2232 = vmatprep.mubr.bf16.mxu0 0
  %2233 = vmatmul.mubr.bf16.gmra.mrb[0].mxu0 %v2195
  %v2234 = vpop.f32.mrb[0].mxu0
  %v2235 = vadd.f32 0.0, %v2234
  %v2236 = vpop.f32.mrb[0].mxu0
  %v2237 = vpop.f32.mrb[0].mxu0
  %v2238 = vadd.f32 0.0, %v2237
  %v2239 = vpop.f32.mrb[0].mxu0
  %2240 = vmatprep.mubr.bf16.mxu0 0
  %2241 = vmatmul.mubr.bf16.gmra.mrb[0].mxu0 %v2198
  %v2242 = vpop.f32.mrb[0].mxu0
  %v2243 = vadd.f32 0.0, %v2242
  %v2244 = vpop.f32.mrb[0].mxu0
  %v2245 = vpop.f32.mrb[0].mxu0
  %v2246 = vadd.f32 0.0, %v2245
  %v2247 = vpop.f32.mrb[0].mxu0
  %2248 = vdwg.mxu0
  %v2249 = vadd.f32 %v2176, %v2235
  %v2250 = vadd.f32 %v2179, %v2238
  %v2251 = vadd.f32 %v2184, %v2243
  %v2252 = vadd.f32 %v2187, %v2246
  %v2254 = vlaneseq
  %v2255 = vshrl.u32 %v2254, 7
  %v2256 = vsub.s32 0, %v2255
  %v2257 = vrot.slane %v423, %v2256
  %v2259 = vadd.f32 %v2249, %v2257
  %v2260 = vadd.f32 %v2250, %v2257
  %v2261 = vadd.f32 %v2251, %v2257
  %v2262 = vadd.f32 %v2252, %v2257
  %2263 = vmatprep.subr.mxu0 0.0
  %2264 = vmatpush1.msra.mxu0 %v2259
  %2265 = vmatprep.subr.mxu0 0.0
  %2266 = vmatpush1.msra.mxu0 %v2260
  %2267 = vmatprep.subr.mxu0 0.0
  %2268 = vmatpush1.msra.mxu0 %v2261
  %2269 = vmatprep.subr.mxu0 0.0
  %2270 = vmatpush1.msra.mxu0 %v2262
  %2271 = vmatprep.subr.mxu0 0.0
  %2272 = vmatpush1.msra.mxu0 0.0
  %2273 = vmatprep.subr.mxu0 0.0
  %2274 = vmatpush1.msra.mxu0 0.0
  %2275 = vmatprep.subr.mxu0 0.0
  %2276 = vmatpush1.msra.mxu0 0.0
  %2277 = vmatprep.subr.mxu0 0.0
  %2278 = vmatpush1.msra.mxu0 0.0
  %2279 = vmatprep.subr.mxu0 0.0
  %2280 = vmatpush1.msra.mxu0 0.0
  %2281 = vmatprep.subr.mxu0 0.0
  %2282 = vmatpush1.msra.mxu0 0.0
  %2283 = vmatprep.subr.mxu0 0.0
  %2284 = vmatpush1.msra.mxu0 0.0
  %2285 = vmatprep.subr.mxu0 0.0
  %2286 = vmatpush1.msra.mxu0 0.0
  %2287 = vmatprep.subr.mxu0 0.0
  %2288 = vmatpush1.msra.mxu0 0.0
  %2289 = vmatprep.subr.mxu0 0.0
  %2290 = vmatpush1.msra.mxu0 0.0
  %2291 = vmatprep.subr.mxu0 0.0
  %2292 = vmatpush1.msra.mxu0 0.0
  %2293 = vmatprep.subr.mxu0 0.0
  %2294 = vmatpush1.msra.mxu0 0.0
  %2295 = vmatprep.subr.mxu0 0.0
  %2296 = vmatpush1.msra.mxu0 0.0
  %2297 = vmatprep.subr.mxu0 0.0
  %2298 = vmatpush1.msra.mxu0 0.0
  %2299 = vmatprep.subr.mxu0 0.0
  %2300 = vmatpush1.msra.mxu0 0.0
  %2301 = vmatprep.subr.mxu0 0.0
  %2302 = vmatpush1.msra.mxu0 0.0
  %2303 = vmatprep.subr.mxu0 0.0
  %2304 = vmatpush1.msra.mxu0 0.0
  %2305 = vmatprep.subr.mxu0 0.0
  %2306 = vmatpush1.msra.mxu0 0.0
  %2307 = vmatprep.subr.mxu0 0.0
  %2308 = vmatpush1.msra.mxu0 0.0
  %2309 = vmatprep.subr.mxu0 0.0
  %2310 = vmatpush1.msra.mxu0 0.0
  %2311 = vmatprep.subr.mxu0 0.0
  %2312 = vmatpush1.msra.mxu0 0.0
  %2313 = vmatprep.subr.mxu0 0.0
  %2314 = vmatpush1.msra.mxu0 0.0
  %2315 = vmatprep.subr.mxu0 0.0
  %2316 = vmatpush1.msra.mxu0 0.0
  %2317 = vmatprep.subr.mxu0 0.0
  %2318 = vmatpush1.msra.mxu0 0.0
  %2319 = vmatprep.subr.mxu0 0.0
  %2320 = vmatpush1.msra.mxu0 0.0
  %2321 = vmatprep.subr.mxu0 0.0
  %2322 = vmatpush1.msra.mxu0 0.0
  %2323 = vmatprep.subr.mxu0 0.0
  %2324 = vmatpush1.msra.mxu0 0.0
  %2325 = vmatprep.subr.mxu0 0.0
  %2326 = vmatpush1.msra.mxu0 0.0
  %2327 = vmatprep.mubr.f32.mxu0 0.0
  %2328 = vmatmul.mubr.f32.gmra.mrb[0].mxu0 %v205
  %v2329 = vpop.f32.mrb[0].mxu0
  %v2330 = vadd.f32 0.0, %v2329
  %v2331 = vpop.f32.mrb[0].mxu0
  %2332 = vdwg.mxu0
  %v2333 = vmul.f32 %v2330, 0.03125
  %v2334 = vlaneseq
  %v2335 = vshrl.u32 %v2334, 7
  %v2336 = vsub.s32 0, %v2335
  %v2337 = vrot.slane %v2333, %v2336
  %v2338 = vsub.f32 %v2259, %v2337
  %v2339 = vsub.f32 %v2260, %v2337
  %v2340 = vsub.f32 %v2261, %v2337
  %v2341 = vsub.f32 %v2262, %v2337
  %v2342 = vmul.f32 %v2338, %v2338
  %v2343 = vmul.f32 %v2339, %v2339
  %v2344 = vmul.f32 %v2340, %v2340
  %v2345 = vmul.f32 %v2341, %v2341
  %2346 = vmatprep.subr.mxu0 0.0
  %2347 = vmatpush1.msra.mxu0 %v2342
  %2348 = vmatprep.subr.mxu0 0.0
  %2349 = vmatpush1.msra.mxu0 %v2343
  %2350 = vmatprep.subr.mxu0 0.0
  %2351 = vmatpush1.msra.mxu0 %v2344
  %2352 = vmatprep.subr.mxu0 0.0
  %2353 = vmatpush1.msra.mxu0 %v2345
  %2354 = vmatprep.subr.mxu0 0.0
  %2355 = vmatpush1.msra.mxu0 0.0
  %2356 = vmatprep.subr.mxu0 0.0
  %2357 = vmatpush1.msra.mxu0 0.0
  %2358 = vmatprep.subr.mxu0 0.0
  %2359 = vmatpush1.msra.mxu0 0.0
  %2360 = vmatprep.subr.mxu0 0.0
  %2361 = vmatpush1.msra.mxu0 0.0
  %2362 = vmatprep.subr.mxu0 0.0
  %2363 = vmatpush1.msra.mxu0 0.0
  %2364 = vmatprep.subr.mxu0 0.0
  %2365 = vmatpush1.msra.mxu0 0.0
  %2366 = vmatprep.subr.mxu0 0.0
  %2367 = vmatpush1.msra.mxu0 0.0
  %2368 = vmatprep.subr.mxu0 0.0
  %2369 = vmatpush1.msra.mxu0 0.0
  %2370 = vmatprep.subr.mxu0 0.0
  %2371 = vmatpush1.msra.mxu0 0.0
  %2372 = vmatprep.subr.mxu0 0.0
  %2373 = vmatpush1.msra.mxu0 0.0
  %2374 = vmatprep.subr.mxu0 0.0
  %2375 = vmatpush1.msra.mxu0 0.0
  %2376 = vmatprep.subr.mxu0 0.0
  %2377 = vmatpush1.msra.mxu0 0.0
  %2378 = vmatprep.subr.mxu0 0.0
  %2379 = vmatpush1.msra.mxu0 0.0
  %2380 = vmatprep.subr.mxu0 0.0
  %2381 = vmatpush1.msra.mxu0 0.0
  %2382 = vmatprep.subr.mxu0 0.0
  %2383 = vmatpush1.msra.mxu0 0.0
  %2384 = vmatprep.subr.mxu0 0.0
  %2385 = vmatpush1.msra.mxu0 0.0
  %2386 = vmatprep.subr.mxu0 0.0
  %2387 = vmatpush1.msra.mxu0 0.0
  %2388 = vmatprep.subr.mxu0 0.0
  %2389 = vmatpush1.msra.mxu0 0.0
  %2390 = vmatprep.subr.mxu0 0.0
  %2391 = vmatpush1.msra.mxu0 0.0
  %2392 = vmatprep.subr.mxu0 0.0
  %2393 = vmatpush1.msra.mxu0 0.0
  %2394 = vmatprep.subr.mxu0 0.0
  %2395 = vmatpush1.msra.mxu0 0.0
  %2396 = vmatprep.subr.mxu0 0.0
  %2397 = vmatpush1.msra.mxu0 0.0
  %2398 = vmatprep.subr.mxu0 0.0
  %2399 = vmatpush1.msra.mxu0 0.0
  %2400 = vmatprep.subr.mxu0 0.0
  %2401 = vmatpush1.msra.mxu0 0.0
  %2402 = vmatprep.subr.mxu0 0.0
  %2403 = vmatpush1.msra.mxu0 0.0
  %2404 = vmatprep.subr.mxu0 0.0
  %2405 = vmatpush1.msra.mxu0 0.0
  %2406 = vmatprep.subr.mxu0 0.0
  %2407 = vmatpush1.msra.mxu0 0.0
  %2408 = vmatprep.subr.mxu0 0.0
  %2409 = vmatpush1.msra.mxu0 0.0
  %2410 = vmatprep.mubr.f32.mxu0 0.0
  %2411 = vmatmul.mubr.f32.gmra.mrb[0].mxu0 %v205
  %v2412 = vpop.f32.mrb[0].mxu0
  %v2413 = vadd.f32 0.0, %v2412
  %v2414 = vpop.f32.mrb[0].mxu0
  %2415 = vdwg.mxu0
  %v2416 = vmul.f32 %v2413, 0.03125
  %v2417 = vadd.f32 %v2416, 1e-05
  %v2418 = vrsqrt.pop %v2417
  %v2419 = vlaneseq
  %v2420 = vshrl.u32 %v2419, 7
  %v2421 = vsub.s32 0, %v2420
  %v2422 = vrot.slane %v2418, %v2421
  %v2423 = vmul.f32 %v2338, %v2422
  %v2424 = vmul.f32 %v2339, %v2422
  %v2425 = vmul.f32 %v2340, %v2422
  %v2426 = vmul.f32 %v2341, %v2422
  %v2428 = vlaneseq
  %v2429 = vshrl.u32 %v2428, 7
  %v2430 = vsub.s32 0, %v2429
  %v2431 = vrot.slane %v424, %v2430
  %v2433 = vmul.f32 %v2423, %v2431
  %v2434 = vmul.f32 %v2424, %v2431
  %v2435 = vmul.f32 %v2425, %v2431
  %v2436 = vmul.f32 %v2426, %v2431
  %v2438 = vlaneseq
  %v2439 = vshrl.u32 %v2438, 7
  %v2440 = vsub.s32 0, %v2439
  %v2441 = vrot.slane %v425, %v2440
  %v2443 = vadd.f32 %v2433, %v2441
  %v2444 = vadd.f32 %v2434, %v2441
  %v2445 = vadd.f32 %v2435, %v2441
  %v2446 = vadd.f32 %v2436, %v2441
  %v2447 = vpack.c.bf16 %v2444, %v2443
  %v2448 = vpack.c.bf16 %v2446, %v2445
  %v2449 = vpack.c.bf16 %v427, %v426
  %v2450 = vpack.c.bf16 %v429, %v428
  %v2451 = vpack.c.bf16 %v431, %v430
  %v2452 = vpack.c.bf16 %v433, %v432
  %v2454 = vlaneseq
  %v2455 = vshrl.u32 %v2454, 7
  %v2456 = vsub.s32 0, %v2455
  %v2457 = vrot.slane %v434, %v2456
  %vm2459 = vcmask 523264
  %v2461 = vsel %vm2459, %v2447, 0
  %v2464 = vsel %vm2459, %v2448, 0
  %2466 = vmatprep.subr.bf16.mxu0 0
  %2467 = vmatpush1.bf16.msra.mxu0 %v2449
  %2468 = vmatprep.subr.bf16.mxu0 0
  %2469 = vmatpush1.bf16.msra.mxu0 %v2450
  %2470 = vmatprep.subr.bf16.mxu0 0
  %2471 = vmatpush1.bf16.msra.mxu0 %v2451
  %2472 = vmatprep.subr.bf16.mxu0 0
  %2473 = vmatpush1.bf16.msra.mxu0 %v2452
  %2474 = vmatprep.subr.bf16.mxu0 0
  %2475 = vmatpush1.bf16.msra.mxu0 0
  %2476 = vmatprep.subr.bf16.mxu0 0
  %2477 = vmatpush1.bf16.msra.mxu0 0
  %2478 = vmatprep.subr.bf16.mxu0 0
  %2479 = vmatpush1.bf16.msra.mxu0 0
  %2480 = vmatprep.subr.bf16.mxu0 0
  %2481 = vmatpush1.bf16.msra.mxu0 0
  %2482 = vmatprep.subr.bf16.mxu0 0
  %2483 = vmatpush1.bf16.msra.mxu0 0
  %2484 = vmatprep.subr.bf16.mxu0 0
  %2485 = vmatpush1.bf16.msra.mxu0 0
  %2486 = vmatprep.subr.bf16.mxu0 0
  %2487 = vmatpush1.bf16.msra.mxu0 0
  %2488 = vmatprep.subr.bf16.mxu0 0
  %2489 = vmatpush1.bf16.msra.mxu0 0
  %2490 = vmatprep.subr.bf16.mxu0 0
  %2491 = vmatpush1.bf16.msra.mxu0 0
  %2492 = vmatprep.subr.bf16.mxu0 0
  %2493 = vmatpush1.bf16.msra.mxu0 0
  %2494 = vmatprep.subr.bf16.mxu0 0
  %2495 = vmatpush1.bf16.msra.mxu0 0
  %2496 = vmatprep.subr.bf16.mxu0 0
  %2497 = vmatpush1.bf16.msra.mxu0 0
  %2498 = vmatprep.mubr.bf16.mxu0 0
  %2499 = vmatmul.mubr.bf16.gmra.mrb[0].mxu0 %v2461
  %v2500 = vpop.f32.mrb[0].mxu0
  %v2501 = vadd.f32 %v2457, %v2500
  %v2502 = vpop.f32.mrb[0].mxu0
  %v2503 = vpop.f32.mrb[0].mxu0
  %v2504 = vadd.f32 %v2457, %v2503
  %v2505 = vpop.f32.mrb[0].mxu0
  %2506 = vmatprep.mubr.bf16.mxu0 0
  %2507 = vmatmul.mubr.bf16.gmra.mrb[0].mxu0 %v2464
  %v2508 = vpop.f32.mrb[0].mxu0
  %v2509 = vadd.f32 %v2457, %v2508
  %v2510 = vpop.f32.mrb[0].mxu0
  %v2511 = vpop.f32.mrb[0].mxu0
  %v2512 = vadd.f32 %v2457, %v2511
  %v2513 = vpop.f32.mrb[0].mxu0
  %2514 = vdwg.mxu0
  %vm2515 = vcmp.gt.f32.partialorder %v2501, 0.0
  %vm2516 = vcmp.gt.f32.partialorder %v2504, 0.0
  %vm2517 = vcmp.gt.f32.partialorder %v2509, 0.0
  %vm2518 = vcmp.gt.f32.partialorder %v2512, 0.0
  %v2519 = vmin.f32 %v2501, 0.0
  %v2520 = vmin.f32 %v2504, 0.0
  %v2521 = vmin.f32 %v2509, 0.0
  %v2522 = vmin.f32 %v2512, 0.0
  %v2523 = vmul.f32 %v2519, 1.442695
  %v2524 = vpow.pop %v2523
  %v2525 = vmul.f32 %v2520, 1.442695
  %v2526 = vpow.pop %v2525
  %v2527 = vmul.f32 %v2521, 1.442695
  %v2528 = vpow.pop %v2527
  %v2529 = vmul.f32 %v2522, 1.442695
  %v2530 = vpow.pop %v2529
  %v2531 = vsub.f32 %v2524, 1.0
  %v2532 = vsub.f32 %v2526, 1.0
  %v2533 = vsub.f32 %v2528, 1.0
  %v2534 = vsub.f32 %v2530, 1.0
  %v2535 = vsel %vm2515, %v2501, %v2531
  %v2536 = vsel %vm2516, %v2504, %v2532
  %v2537 = vsel %vm2517, %v2509, %v2533
  %v2538 = vsel %vm2518, %v2512, %v2534
  %v2539 = vld [vmem:[%s49] sm:$0xff]
  %v2540 = vld [vmem:[%s49 + $0x8] sm:$0xff]
  %v2541 = vld [vmem:[%s49 + $0x10] sm:$0xff]
  %v2542 = vld [vmem:[%s49 + $0x18] sm:$0xff]
  %v2543 = vld [vmem:[%s49 + $0x20] sm:$0xff]
  %v2544 = vld [vmem:[%s49 + $0x28] sm:$0xff]
  %v2545 = vld [vmem:[%s49 + $0x30] sm:$0xff]
  %v2546 = vld [vmem:[%s49 + $0x38] sm:$0xff]
  %v2547 = vld [vmem:[%s49 + $0x40] sm:$0xff]
  %v2548 = vld [vmem:[%s49 + $0x48] sm:$0xff]
  %v2549 = vld [vmem:[%s49 + $0x50] sm:$0xff]
  %v2550 = vld [vmem:[%s49 + $0x58] sm:$0xff]
  %v2551 = vld [vmem:[%s49 + $0x60] sm:$0xff]
  %v2552 = vld [vmem:[%s49 + $0x68] sm:$0xff]
  %v2553 = vld [vmem:[%s49 + $0x70] sm:$0xff]
  %v2554 = vld [vmem:[%s49 + $0x78] sm:$0xff]
  %v2555 = vld [vmem:[%s51] sm:$0x1]
  %v2556 = vld [vmem:[%s53] sm:$0xff]
  %v2557 = vld [vmem:[%s53 + $0x8] sm:$0xff]
  %v2558 = vld [vmem:[%s53 + $0x10] sm:$0xff]
  %v2559 = vld [vmem:[%s53 + $0x18] sm:$0xff]
  %v2560 = vld [vmem:[%s55] sm:$0x1]
  %v2561 = vld [vmem:[%s57] sm:$0x1]
  %v2562 = vld [vmem:[%s59] sm:$0x1]
  %v2563 = vld [vmem:[%s61] sm:$0xff]
  %v2564 = vld [vmem:[%s61 + $0x8] sm:$0xff]
  %v2565 = vld [vmem:[%s61 + $0x10] sm:$0xff]
  %v2566 = vld [vmem:[%s61 + $0x18] sm:$0xff]
  %v2567 = vld [vmem:[%s63] sm:$0x1]
  %v2568 = vld [vmem:[%s65] sm:$0xff]
  %v2569 = vld [vmem:[%s65 + $0x8] sm:$0xff]
  %v2570 = vld [vmem:[%s65 + $0x10] sm:$0xff]
  %v2571 = vld [vmem:[%s65 + $0x18] sm:$0xff]
  %v2572 = vld [vmem:[%s67] sm:$0x1]
  %v2573 = vld [vmem:[%s69] sm:$0xff]
  %v2574 = vld [vmem:[%s69 + $0x8] sm:$0xff]
  %v2575 = vld [vmem:[%s69 + $0x10] sm:$0xff]
  %v2576 = vld [vmem:[%s69 + $0x18] sm:$0xff]
  %v2577 = vld [vmem:[%s69 + $0x20] sm:$0xff]
  %v2578 = vld [vmem:[%s69 + $0x28] sm:$0xff]
  %v2579 = vld [vmem:[%s69 + $0x30] sm:$0xff]
  %v2580 = vld [vmem:[%s69 + $0x38] sm:$0xff]
  %v2581 = vld [vmem:[%s69 + $0x40] sm:$0xff]
  %v2582 = vld [vmem:[%s69 + $0x48] sm:$0xff]
  %v2583 = vld [vmem:[%s69 + $0x50] sm:$0xff]
  %v2584 = vld [vmem:[%s69 + $0x58] sm:$0xff]
  %v2585 = vld [vmem:[%s71] sm:$0x1]
  %v2586 = vld [vmem:[%s73] sm:$0x1]
  %v2587 = vld [vmem:[%s75] sm:$0x1]
  %v2588 = vld [vmem:[%s77] sm:$0xff]
  %v2589 = vld [vmem:[%s77 + $0x8] sm:$0xff]
  %v2590 = vld [vmem:[%s77 + $0x10] sm:$0xff]
  %v2591 = vld [vmem:[%s77 + $0x18] sm:$0xff]
  %v2592 = vld [vmem:[%s77 + $0x20] sm:$0xff]
  %v2593 = vld [vmem:[%s77 + $0x28] sm:$0xff]
  %v2594 = vld [vmem:[%s77 + $0x30] sm:$0xff]
  %v2595 = vld [vmem:[%s77 + $0x38] sm:$0xff]
  %v2596 = vld [vmem:[%s79] sm:$0x1]
  %2597 = vmatprep.subr.mxu0 0.0
  %2598 = vmatpush1.msra.mxu0 %v2443
  %2599 = vmatprep.subr.mxu0 0.0
  %2600 = vmatpush1.msra.mxu0 %v2444
  %2601 = vmatprep.subr.mxu0 0.0
  %2602 = vmatpush1.msra.mxu0 %v2445
  %2603 = vmatprep.subr.mxu0 0.0
  %2604 = vmatpush1.msra.mxu0 %v2446
  %2605 = vmatprep.subr.mxu0 0.0
  %2606 = vmatpush1.msra.mxu0 0.0
  %2607 = vmatprep.subr.mxu0 0.0
  %2608 = vmatpush1.msra.mxu0 0.0
  %2609 = vmatprep.subr.mxu0 0.0
  %2610 = vmatpush1.msra.mxu0 0.0
  %2611 = vmatprep.subr.mxu0 0.0
  %2612 = vmatpush1.msra.mxu0 0.0
  %2613 = vmatprep.subr.mxu0 0.0
  %2614 = vmatpush1.msra.mxu0 0.0
  %2615 = vmatprep.subr.mxu0 0.0
  %2616 = vmatpush1.msra.mxu0 0.0
  %2617 = vmatprep.subr.mxu0 0.0
  %2618 = vmatpush1.msra.mxu0 0.0
  %2619 = vmatprep.subr.mxu0 0.0
  %2620 = vmatpush1.msra.mxu0 0.0
  %2621 = vmatprep.subr.mxu0 0.0
  %2622 = vmatpush1.msra.mxu0 0.0
  %2623 = vmatprep.subr.mxu0 0.0
  %2624 = vmatpush1.msra.mxu0 0.0
  %2625 = vmatprep.subr.mxu0 0.0
  %2626 = vmatpush1.msra.mxu0 0.0
  %2627 = vmatprep.subr.mxu0 0.0
  %2628 = vmatpush1.msra.mxu0 0.0
  %2629 = vmatprep.subr.mxu0 0.0
  %2630 = vmatpush1.msra.mxu0 0.0
  %2631 = vmatprep.subr.mxu0 0.0
  %2632 = vmatpush1.msra.mxu0 0.0
  %2633 = vmatprep.subr.mxu0 0.0
  %2634 = vmatpush1.msra.mxu0 0.0
  %2635 = vmatprep.subr.mxu0 0.0
  %2636 = vmatpush1.msra.mxu0 0.0
  %2637 = vmatprep.subr.mxu0 0.0
  %2638 = vmatpush1.msra.mxu0 0.0
  %2639 = vmatprep.subr.mxu0 0.0
  %2640 = vmatpush1.msra.mxu0 0.0
  %2641 = vmatprep.subr.mxu0 0.0
  %2642 = vmatpush1.msra.mxu0 0.0
  %2643 = vmatprep.subr.mxu0 0.0
  %2644 = vmatpush1.msra.mxu0 0.0
  %2645 = vmatprep.subr.mxu0 0.0
  %2646 = vmatpush1.msra.mxu0 0.0
  %2647 = vmatprep.subr.mxu0 0.0
  %2648 = vmatpush1.msra.mxu0 0.0
  %2649 = vmatprep.subr.mxu0 0.0
  %2650 = vmatpush1.msra.mxu0 0.0
  %2651 = vmatprep.subr.mxu0 0.0
  %2652 = vmatpush1.msra.mxu0 0.0
  %2653 = vmatprep.subr.mxu0 0.0
  %2654 = vmatpush1.msra.mxu0 0.0
  %2655 = vmatprep.subr.mxu0 0.0
  %2656 = vmatpush1.msra.mxu0 0.0
  %2657 = vmatprep.subr.mxu0 0.0
  %2658 = vmatpush1.msra.mxu0 0.0
  %2659 = vmatprep.subr.mxu0 0.0
  %2660 = vmatpush1.msra.mxu0 0.0
  %2661 = vmatprep.mubr.f32.mxu0 0.0
  %2662 = vmatmul.mubr.f32.gmra.mrb[0].mxu0 %v436
  %v2663 = vpop.f32.mrb[0].mxu0
  %v2664 = vadd.f32 0.0, %v2663
  %v2665 = vpop.f32.mrb[0].mxu0
  %2666 = vdwg.mxu0
  %v2668 = vsel %vm521, %v2664, 0
  %2670 = vmatprep.subr.mxu0 0.0
  %2671 = vmatpush1.msra.mxu0 %v2668
  %2672 = vmatprep.subr.mxu0 0.0
  %2673 = vmatpush1.msra.mxu0 0.0
  %2674 = vmatprep.subr.mxu0 0.0
  %2675 = vmatpush1.msra.mxu0 0.0
  %2676 = vmatprep.subr.mxu0 0.0
  %2677 = vmatpush1.msra.mxu0 0.0
  %2678 = vmatprep.subr.mxu0 0.0
  %2679 = vmatpush1.msra.mxu0 0.0
  %2680 = vmatprep.subr.mxu0 0.0
  %2681 = vmatpush1.msra.mxu0 0.0
  %2682 = vmatprep.subr.mxu0 0.0
  %2683 = vmatpush1.msra.mxu0 0.0
  %2684 = vmatprep.subr.mxu0 0.0
  %2685 = vmatpush1.msra.mxu0 0.0
  %2686 = vmatprep.subr.mxu0 0.0
  %2687 = vmatpush1.msra.mxu0 0.0
  %2688 = vmatprep.subr.mxu0 0.0
  %2689 = vmatpush1.msra.mxu0 0.0
  %2690 = vmatprep.subr.mxu0 0.0
  %2691 = vmatpush1.msra.mxu0 0.0
  %2692 = vmatprep.subr.mxu0 0.0
  %2693 = vmatpush1.msra.mxu0 0.0
  %2694 = vmatprep.subr.mxu0 0.0
  %2695 = vmatpush1.msra.mxu0 0.0
  %2696 = vmatprep.subr.mxu0 0.0
  %2697 = vmatpush1.msra.mxu0 0.0
  %2698 = vmatprep.subr.mxu0 0.0
  %2699 = vmatpush1.msra.mxu0 0.0
  %2700 = vmatprep.subr.mxu0 0.0
  %2701 = vmatpush1.msra.mxu0 0.0
  %2702 = vmatprep.subr.mxu0 0.0
  %2703 = vmatpush1.msra.mxu0 0.0
  %2704 = vmatprep.subr.mxu0 0.0
  %2705 = vmatpush1.msra.mxu0 0.0
  %2706 = vmatprep.subr.mxu0 0.0
  %2707 = vmatpush1.msra.mxu0 0.0
  %2708 = vmatprep.subr.mxu0 0.0
  %2709 = vmatpush1.msra.mxu0 0.0
  %2710 = vmatprep.subr.mxu0 0.0
  %2711 = vmatpush1.msra.mxu0 0.0
  %2712 = vmatprep.subr.mxu0 0.0
  %2713 = vmatpush1.msra.mxu0 0.0
  %2714 = vmatprep.subr.mxu0 0.0
  %2715 = vmatpush1.msra.mxu0 0.0
  %2716 = vmatprep.subr.mxu0 0.0
  %2717 = vmatpush1.msra.mxu0 0.0
  %2718 = vmatprep.subr.mxu0 0.0
  %2719 = vmatpush1.msra.mxu0 0.0
  %2720 = vmatprep.subr.mxu0 0.0
  %2721 = vmatpush1.msra.mxu0 0.0
  %2722 = vmatprep.subr.mxu0 0.0
  %2723 = vmatpush1.msra.mxu0 0.0
  %2724 = vmatprep.subr.mxu0 0.0
  %2725 = vmatpush1.msra.mxu0 0.0
  %2726 = vmatprep.subr.mxu0 0.0
  %2727 = vmatpush1.msra.mxu0 0.0
  %2728 = vmatprep.subr.mxu0 0.0
  %2729 = vmatpush1.msra.mxu0 0.0
  %2730 = vmatprep.subr.mxu0 0.0
  %2731 = vmatpush1.msra.mxu0 0.0
  %2732 = vmatprep.subr.mxu0 0.0
  %2733 = vmatpush1.msra.mxu0 0.0
  %2734 = vmatprep.mubr.f32.mxu0 0.0
  %2735 = vmatmul.mubr.f32.gmra.mrb[0].mxu0 %v510
  %v2736 = vpop.f32.mrb[0].mxu0
  %v2737 = vadd.f32 0.0, %v2736
  %v2738 = vpop.f32.mrb[0].mxu0
  %2739 = vmatprep.mubr.f32.mxu0 0.0
  %2740 = vmatmul.mubr.f32.gmra.mrb[0].mxu0 %v513
  %v2741 = vpop.f32.mrb[0].mxu0
  %v2742 = vadd.f32 0.0, %v2741
  %v2743 = vpop.f32.mrb[0].mxu0
  %2744 = vmatprep.mubr.f32.mxu0 0.0
  %2745 = vmatmul.mubr.f32.gmra.mrb[0].mxu0 %v516
  %v2746 = vpop.f32.mrb[0].mxu0
  %v2747 = vadd.f32 0.0, %v2746
  %v2748 = vpop.f32.mrb[0].mxu0
  %2749 = vmatprep.mubr.f32.mxu0 0.0
  %2750 = vmatmul.mubr.f32.gmra.mrb[0].mxu0 %v519
  %v2751 = vpop.f32.mrb[0].mxu0
  %v2752 = vadd.f32 0.0, %v2751
  %v2753 = vpop.f32.mrb[0].mxu0
  %2754 = vdwg.mxu0
  %v2755 = vmul.f32 %v2737, %v613
  %v2756 = vmul.f32 %v2742, %v618
  %v2757 = vmul.f32 %v2747, %v623
  %v2758 = vmul.f32 %v2752, %v628
  %v2759 = vpack.c.bf16 %v2540, %v2539
  %v2760 = vpack.c.bf16 %v2542, %v2541
  %v2761 = vpack.c.bf16 %v2544, %v2543
  %v2762 = vpack.c.bf16 %v2546, %v2545
  %v2763 = vpack.c.bf16 %v2756, %v2755
  %v2764 = vpack.c.bf16 %v2758, %v2757
  %v2765 = vpack.c.bf16 %v2548, %v2547
  %v2766 = vpack.c.bf16 %v2550, %v2549
  %v2767 = vpack.c.bf16 %v2552, %v2551
  %v2768 = vpack.c.bf16 %v2554, %v2553
  %v2770 = vsel %vm2459, %v2763, 0
  %v2773 = vsel %vm2459, %v2764, 0
  %2775 = vmatprep.subr.bf16.mxu0 0
  %2776 = vmatpush1.bf16.msra.mxu0 %v2765
  %2777 = vmatprep.subr.bf16.mxu0 0
  %2778 = vmatpush1.bf16.msra.mxu0 %v2766
  %2779 = vmatprep.subr.bf16.mxu0 0
  %2780 = vmatpush1.bf16.msra.mxu0 %v2767
  %2781 = vmatprep.subr.bf16.mxu0 0
  %2782 = vmatpush1.bf16.msra.mxu0 %v2768
  %2783 = vmatprep.subr.bf16.mxu0 0
  %2784 = vmatpush1.bf16.msra.mxu0 0
  %2785 = vmatprep.subr.bf16.mxu0 0
  %2786 = vmatpush1.bf16.msra.mxu0 0
  %2787 = vmatprep.subr.bf16.mxu0 0
  %2788 = vmatpush1.bf16.msra.mxu0 0
  %2789 = vmatprep.subr.bf16.mxu0 0
  %2790 = vmatpush1.bf16.msra.mxu0 0
  %2791 = vmatprep.subr.bf16.mxu0 0
  %2792 = vmatpush1.bf16.msra.mxu0 0
  %2793 = vmatprep.subr.bf16.mxu0 0
  %2794 = vmatpush1.bf16.msra.mxu0 0
  %2795 = vmatprep.subr.bf16.mxu0 0
  %2796 = vmatpush1.bf16.msra.mxu0 0
  %2797 = vmatprep.subr.bf16.mxu0 0
  %2798 = vmatpush1.bf16.msra.mxu0 0
  %2799 = vmatprep.subr.bf16.mxu0 0
  %2800 = vmatpush1.bf16.msra.mxu0 0
  %2801 = vmatprep.subr.bf16.mxu0 0
  %2802 = vmatpush1.bf16.msra.mxu0 0
  %2803 = vmatprep.subr.bf16.mxu0 0
  %2804 = vmatpush1.bf16.msra.mxu0 0
  %2805 = vmatprep.subr.bf16.mxu0 0
  %2806 = vmatpush1.bf16.msra.mxu0 0
  %2807 = vmatprep.mubr.bf16.mxu0 0
  %2808 = vmatmul.mubr.bf16.gmra.mrb[0].mxu0 %v2770
  %v2809 = vpop.f32.mrb[0].mxu0
  %v2810 = vadd.f32 0.0, %v2809
  %v2811 = vpop.f32.mrb[0].mxu0
  %v2812 = vpop.f32.mrb[0].mxu0
  %v2813 = vadd.f32 0.0, %v2812
  %v2814 = vpop.f32.mrb[0].mxu0
  %2815 = vmatprep.mubr.bf16.mxu0 0
  %2816 = vmatmul.mubr.bf16.gmra.mrb[0].mxu0 %v2773
  %v2817 = vpop.f32.mrb[0].mxu0
  %v2818 = vadd.f32 0.0, %v2817
  %v2819 = vpop.f32.mrb[0].mxu0
  %v2820 = vpop.f32.mrb[0].mxu0
  %v2821 = vadd.f32 0.0, %v2820
  %v2822 = vpop.f32.mrb[0].mxu0
  %2823 = vdwg.mxu0
  %2824 = vmatprep.subr.bf16.mxu0 0
  %2825 = vmatpush1.bf16.msra.mxu0 %v2759
  %2826 = vmatprep.subr.bf16.mxu0 0
  %2827 = vmatpush1.bf16.msra.mxu0 %v2760
  %2828 = vmatprep.subr.bf16.mxu0 0
  %2829 = vmatpush1.bf16.msra.mxu0 %v2761
  %2830 = vmatprep.subr.bf16.mxu0 0
  %2831 = vmatpush1.bf16.msra.mxu0 %v2762
  %2832 = vmatprep.subr.bf16.mxu0 0
  %2833 = vmatpush1.bf16.msra.mxu0 0
  %2834 = vmatprep.subr.bf16.mxu0 0
  %2835 = vmatpush1.bf16.msra.mxu0 0
  %2836 = vmatprep.subr.bf16.mxu0 0
  %2837 = vmatpush1.bf16.msra.mxu0 0
  %2838 = vmatprep.subr.bf16.mxu0 0
  %2839 = vmatpush1.bf16.msra.mxu0 0
  %2840 = vmatprep.subr.bf16.mxu0 0
  %2841 = vmatpush1.bf16.msra.mxu0 0
  %2842 = vmatprep.subr.bf16.mxu0 0
  %2843 = vmatpush1.bf16.msra.mxu0 0
  %2844 = vmatprep.subr.bf16.mxu0 0
  %2845 = vmatpush1.bf16.msra.mxu0 0
  %2846 = vmatprep.subr.bf16.mxu0 0
  %2847 = vmatpush1.bf16.msra.mxu0 0
  %2848 = vmatprep.subr.bf16.mxu0 0
  %2849 = vmatpush1.bf16.msra.mxu0 0
  %2850 = vmatprep.subr.bf16.mxu0 0
  %2851 = vmatpush1.bf16.msra.mxu0 0
  %2852 = vmatprep.subr.bf16.mxu0 0
  %2853 = vmatpush1.bf16.msra.mxu0 0
  %2854 = vmatprep.subr.bf16.mxu0 0
  %2855 = vmatpush1.bf16.msra.mxu0 0
  %2856 = vmatprep.mubr.bf16.mxu0 0
  %2857 = vmatmul.mubr.bf16.gmra.mrb[0].mxu0 %v2461
  %v2858 = vpop.f32.mrb[0].mxu0
  %v2859 = vadd.f32 %v2810, %v2858
  %v2860 = vpop.f32.mrb[0].mxu0
  %v2861 = vpop.f32.mrb[0].mxu0
  %v2862 = vadd.f32 %v2813, %v2861
  %v2863 = vpop.f32.mrb[0].mxu0
  %2864 = vmatprep.mubr.bf16.mxu0 0
  %2865 = vmatmul.mubr.bf16.gmra.mrb[0].mxu0 %v2464
  %v2866 = vpop.f32.mrb[0].mxu0
  %v2867 = vadd.f32 %v2818, %v2866
  %v2868 = vpop.f32.mrb[0].mxu0
  %v2869 = vpop.f32.mrb[0].mxu0
  %v2870 = vadd.f32 %v2821, %v2869
  %v2871 = vpop.f32.mrb[0].mxu0
  %2872 = vdwg.mxu0
  %v2874 = vlaneseq
  %v2875 = vshrl.u32 %v2874, 7
  %v2876 = vsub.s32 0, %v2875
  %v2877 = vrot.slane %v2555, %v2876
  %v2879 = vadd.f32 %v2859, %v2877
  %v2880 = vadd.f32 %v2862, %v2877
  %v2881 = vadd.f32 %v2867, %v2877
  %v2882 = vadd.f32 %v2870, %v2877
  %vm2883 = vcmp.gt.f32.partialorder %v2879, 0.0
  %vm2884 = vcmp.gt.f32.partialorder %v2880, 0.0
  %vm2885 = vcmp.gt.f32.partialorder %v2881, 0.0
  %vm2886 = vcmp.gt.f32.partialorder %v2882, 0.0
  %v2887 = vmin.f32 %v2879, 0.0
  %v2888 = vmin.f32 %v2880, 0.0
  %v2889 = vmin.f32 %v2881, 0.0
  %v2890 = vmin.f32 %v2882, 0.0
  %v2891 = vmul.f32 %v2887, 1.442695
  %v2892 = vpow.pop %v2891
  %v2893 = vmul.f32 %v2888, 1.442695
  %v2894 = vpow.pop %v2893
  %v2895 = vmul.f32 %v2889, 1.442695
  %v2896 = vpow.pop %v2895
  %v2897 = vmul.f32 %v2890, 1.442695
  %v2898 = vpow.pop %v2897
  %v2899 = vsub.f32 %v2892, 1.0
  %v2900 = vsub.f32 %v2894, 1.0
  %v2901 = vsub.f32 %v2896, 1.0
  %v2902 = vsub.f32 %v2898, 1.0
  %v2903 = vsel %vm2883, %v2879, %v2899
  %v2904 = vsel %vm2884, %v2880, %v2900
  %v2905 = vsel %vm2885, %v2881, %v2901
  %v2906 = vsel %vm2886, %v2882, %v2902
  %v2907 = vpack.c.bf16 %v2904, %v2903
  %v2908 = vpack.c.bf16 %v2906, %v2905
  %v2909 = vpack.c.bf16 %v2557, %v2556
  %v2910 = vpack.c.bf16 %v2559, %v2558
  %v2912 = vlaneseq
  %v2913 = vshrl.u32 %v2912, 7
  %v2914 = vsub.s32 0, %v2913
  %v2915 = vrot.slane %v2560, %v2914
  %v2918 = vsel %vm203, %v2907, 0
  %v2921 = vsel %vm203, %v2908, 0
  %2923 = vmatprep.subr.bf16.mxu0 0
  %2924 = vmatpush1.bf16.msra.mxu0 %v2909
  %2925 = vmatprep.subr.bf16.mxu0 0
  %2926 = vmatpush1.bf16.msra.mxu0 %v2910
  %2927 = vmatprep.subr.bf16.mxu0 0
  %2928 = vmatpush1.bf16.msra.mxu0 0
  %2929 = vmatprep.subr.bf16.mxu0 0
  %2930 = vmatpush1.bf16.msra.mxu0 0
  %2931 = vmatprep.subr.bf16.mxu0 0
  %2932 = vmatpush1.bf16.msra.mxu0 0
  %2933 = vmatprep.subr.bf16.mxu0 0
  %2934 = vmatpush1.bf16.msra.mxu0 0
  %2935 = vmatprep.subr.bf16.mxu0 0
  %2936 = vmatpush1.bf16.msra.mxu0 0
  %2937 = vmatprep.subr.bf16.mxu0 0
  %2938 = vmatpush1.bf16.msra.mxu0 0
  %2939 = vmatprep.subr.bf16.mxu0 0
  %2940 = vmatpush1.bf16.msra.mxu0 0
  %2941 = vmatprep.subr.bf16.mxu0 0
  %2942 = vmatpush1.bf16.msra.mxu0 0
  %2943 = vmatprep.subr.bf16.mxu0 0
  %2944 = vmatpush1.bf16.msra.mxu0 0
  %2945 = vmatprep.subr.bf16.mxu0 0
  %2946 = vmatpush1.bf16.msra.mxu0 0
  %2947 = vmatprep.subr.bf16.mxu0 0
  %2948 = vmatpush1.bf16.msra.mxu0 0
  %2949 = vmatprep.subr.bf16.mxu0 0
  %2950 = vmatpush1.bf16.msra.mxu0 0
  %2951 = vmatprep.subr.bf16.mxu0 0
  %2952 = vmatpush1.bf16.msra.mxu0 0
  %2953 = vmatprep.subr.bf16.mxu0 0
  %2954 = vmatpush1.bf16.msra.mxu0 0
  %2955 = vmatprep.mubr.bf16.mxu0 0
  %2956 = vmatmul.mubr.bf16.gmra.mrb[0].mxu0 %v2918
  %v2957 = vpop.f32.mrb[0].mxu0
  %v2958 = vadd.f32 %v2915, %v2957
  %v2959 = vpop.f32.mrb[0].mxu0
  %v2960 = vpop.f32.mrb[0].mxu0
  %v2961 = vadd.f32 %v2915, %v2960
  %v2962 = vpop.f32.mrb[0].mxu0
  %2963 = vmatprep.mubr.bf16.mxu0 0
  %2964 = vmatmul.mubr.bf16.gmra.mrb[0].mxu0 %v2921
  %v2965 = vpop.f32.mrb[0].mxu0
  %v2966 = vadd.f32 %v2915, %v2965
  %v2967 = vpop.f32.mrb[0].mxu0
  %v2968 = vpop.f32.mrb[0].mxu0
  %v2969 = vadd.f32 %v2915, %v2968
  %v2970 = vpop.f32.mrb[0].mxu0
  %2971 = vdwg.mxu0
  %vm2972 = vcmp.gt.f32.partialorder %v2958, 0.0
  %vm2973 = vcmp.gt.f32.partialorder %v2961, 0.0
  %vm2974 = vcmp.gt.f32.partialorder %v2966, 0.0
  %vm2975 = vcmp.gt.f32.partialorder %v2969, 0.0
  %v2976 = vmin.f32 %v2958, 0.0
  %v2977 = vmin.f32 %v2961, 0.0
  %v2978 = vmin.f32 %v2966, 0.0
  %v2979 = vmin.f32 %v2969, 0.0
  %v2980 = vmul.f32 %v2976, 1.442695
  %v2981 = vpow.pop %v2980
  %v2982 = vmul.f32 %v2977, 1.442695
  %v2983 = vpow.pop %v2982
  %v2984 = vmul.f32 %v2978, 1.442695
  %v2985 = vpow.pop %v2984
  %v2986 = vmul.f32 %v2979, 1.442695
  %v2987 = vpow.pop %v2986
  %v2988 = vsub.f32 %v2981, 1.0
  %v2989 = vsub.f32 %v2983, 1.0
  %v2990 = vsub.f32 %v2985, 1.0
  %v2991 = vsub.f32 %v2987, 1.0
  %v2992 = vsel %vm2972, %v2958, %v2988
  %v2993 = vsel %vm2973, %v2961, %v2989
  %v2994 = vsel %vm2974, %v2966, %v2990
  %v2995 = vsel %vm2975, %v2969, %v2991
  %2996 = vmatprep.subr.mxu0 0.0
  %2997 = vmatpush1.msra.mxu0 %v2992
  %2998 = vmatprep.subr.mxu0 0.0
  %2999 = vmatpush1.msra.mxu0 %v2993
  %3000 = vmatprep.subr.mxu0 0.0
  %3001 = vmatpush1.msra.mxu0 %v2994
  %3002 = vmatprep.subr.mxu0 0.0
  %3003 = vmatpush1.msra.mxu0 %v2995
  %3004 = vmatprep.subr.mxu0 0.0
  %3005 = vmatpush1.msra.mxu0 0.0
  %3006 = vmatprep.subr.mxu0 0.0
  %3007 = vmatpush1.msra.mxu0 0.0
  %3008 = vmatprep.subr.mxu0 0.0
  %3009 = vmatpush1.msra.mxu0 0.0
  %3010 = vmatprep.subr.mxu0 0.0
  %3011 = vmatpush1.msra.mxu0 0.0
  %3012 = vmatprep.subr.mxu0 0.0
  %3013 = vmatpush1.msra.mxu0 0.0
  %3014 = vmatprep.subr.mxu0 0.0
  %3015 = vmatpush1.msra.mxu0 0.0
  %3016 = vmatprep.subr.mxu0 0.0
  %3017 = vmatpush1.msra.mxu0 0.0
  %3018 = vmatprep.subr.mxu0 0.0
  %3019 = vmatpush1.msra.mxu0 0.0
  %3020 = vmatprep.subr.mxu0 0.0
  %3021 = vmatpush1.msra.mxu0 0.0
  %3022 = vmatprep.subr.mxu0 0.0
  %3023 = vmatpush1.msra.mxu0 0.0
  %3024 = vmatprep.subr.mxu0 0.0
  %3025 = vmatpush1.msra.mxu0 0.0
  %3026 = vmatprep.subr.mxu0 0.0
  %3027 = vmatpush1.msra.mxu0 0.0
  %3028 = vmatprep.subr.mxu0 0.0
  %3029 = vmatpush1.msra.mxu0 0.0
  %3030 = vmatprep.subr.mxu0 0.0
  %3031 = vmatpush1.msra.mxu0 0.0
  %3032 = vmatprep.subr.mxu0 0.0
  %3033 = vmatpush1.msra.mxu0 0.0
  %3034 = vmatprep.subr.mxu0 0.0
  %3035 = vmatpush1.msra.mxu0 0.0
  %3036 = vmatprep.subr.mxu0 0.0
  %3037 = vmatpush1.msra.mxu0 0.0
  %3038 = vmatprep.subr.mxu0 0.0
  %3039 = vmatpush1.msra.mxu0 0.0
  %3040 = vmatprep.subr.mxu0 0.0
  %3041 = vmatpush1.msra.mxu0 0.0
  %3042 = vmatprep.subr.mxu0 0.0
  %3043 = vmatpush1.msra.mxu0 0.0
  %3044 = vmatprep.subr.mxu0 0.0
  %3045 = vmatpush1.msra.mxu0 0.0
  %3046 = vmatprep.subr.mxu0 0.0
  %3047 = vmatpush1.msra.mxu0 0.0
  %3048 = vmatprep.subr.mxu0 0.0
  %3049 = vmatpush1.msra.mxu0 0.0
  %3050 = vmatprep.subr.mxu0 0.0
  %3051 = vmatpush1.msra.mxu0 0.0
  %3052 = vmatprep.subr.mxu0 0.0
  %3053 = vmatpush1.msra.mxu0 0.0
  %3054 = vmatprep.subr.mxu0 0.0
  %3055 = vmatpush1.msra.mxu0 0.0
  %3056 = vmatprep.subr.mxu0 0.0
  %3057 = vmatpush1.msra.mxu0 0.0
  %3058 = vmatprep.subr.mxu0 0.0
  %3059 = vmatpush1.msra.mxu0 0.0
  %3060 = vmatprep.mubr.f32.mxu0 0.0
  %3061 = vmatmul.mubr.f32.gmra.mrb[0].mxu0 %v205
  %v3062 = vpop.f32.mrb[0].mxu0
  %v3063 = vadd.f32 0.0, %v3062
  %v3064 = vpop.f32.mrb[0].mxu0
  %3065 = vdwg.mxu0
  %v3066 = vmul.f32 %v3063, 0.03125
  %v3067 = vlaneseq
  %v3068 = vshrl.u32 %v3067, 7
  %v3069 = vsub.s32 0, %v3068
  %v3070 = vrot.slane %v3066, %v3069
  %v3071 = vsub.f32 %v2992, %v3070
  %v3072 = vsub.f32 %v2993, %v3070
  %v3073 = vsub.f32 %v2994, %v3070
  %v3074 = vsub.f32 %v2995, %v3070
  %v3075 = vmul.f32 %v3071, %v3071
  %v3076 = vmul.f32 %v3072, %v3072
  %v3077 = vmul.f32 %v3073, %v3073
  %v3078 = vmul.f32 %v3074, %v3074
  %3079 = vmatprep.subr.mxu0 0.0
  %3080 = vmatpush1.msra.mxu0 %v3075
  %3081 = vmatprep.subr.mxu0 0.0
  %3082 = vmatpush1.msra.mxu0 %v3076
  %3083 = vmatprep.subr.mxu0 0.0
  %3084 = vmatpush1.msra.mxu0 %v3077
  %3085 = vmatprep.subr.mxu0 0.0
  %3086 = vmatpush1.msra.mxu0 %v3078
  %3087 = vmatprep.subr.mxu0 0.0
  %3088 = vmatpush1.msra.mxu0 0.0
  %3089 = vmatprep.subr.mxu0 0.0
  %3090 = vmatpush1.msra.mxu0 0.0
  %3091 = vmatprep.subr.mxu0 0.0
  %3092 = vmatpush1.msra.mxu0 0.0
  %3093 = vmatprep.subr.mxu0 0.0
  %3094 = vmatpush1.msra.mxu0 0.0
  %3095 = vmatprep.subr.mxu0 0.0
  %3096 = vmatpush1.msra.mxu0 0.0
  %3097 = vmatprep.subr.mxu0 0.0
  %3098 = vmatpush1.msra.mxu0 0.0
  %3099 = vmatprep.subr.mxu0 0.0
  %3100 = vmatpush1.msra.mxu0 0.0
  %3101 = vmatprep.subr.mxu0 0.0
  %3102 = vmatpush1.msra.mxu0 0.0
  %3103 = vmatprep.subr.mxu0 0.0
  %3104 = vmatpush1.msra.mxu0 0.0
  %3105 = vmatprep.subr.mxu0 0.0
  %3106 = vmatpush1.msra.mxu0 0.0
  %3107 = vmatprep.subr.mxu0 0.0
  %3108 = vmatpush1.msra.mxu0 0.0
  %3109 = vmatprep.subr.mxu0 0.0
  %3110 = vmatpush1.msra.mxu0 0.0
  %3111 = vmatprep.subr.mxu0 0.0
  %3112 = vmatpush1.msra.mxu0 0.0
  %3113 = vmatprep.subr.mxu0 0.0
  %3114 = vmatpush1.msra.mxu0 0.0
  %3115 = vmatprep.subr.mxu0 0.0
  %3116 = vmatpush1.msra.mxu0 0.0
  %3117 = vmatprep.subr.mxu0 0.0
  %3118 = vmatpush1.msra.mxu0 0.0
  %3119 = vmatprep.subr.mxu0 0.0
  %3120 = vmatpush1.msra.mxu0 0.0
  %3121 = vmatprep.subr.mxu0 0.0
  %3122 = vmatpush1.msra.mxu0 0.0
  %3123 = vmatprep.subr.mxu0 0.0
  %3124 = vmatpush1.msra.mxu0 0.0
  %3125 = vmatprep.subr.mxu0 0.0
  %3126 = vmatpush1.msra.mxu0 0.0
  %3127 = vmatprep.subr.mxu0 0.0
  %3128 = vmatpush1.msra.mxu0 0.0
  %3129 = vmatprep.subr.mxu0 0.0
  %3130 = vmatpush1.msra.mxu0 0.0
  %3131 = vmatprep.subr.mxu0 0.0
  %3132 = vmatpush1.msra.mxu0 0.0
  %3133 = vmatprep.subr.mxu0 0.0
  %3134 = vmatpush1.msra.mxu0 0.0
  %3135 = vmatprep.subr.mxu0 0.0
  %3136 = vmatpush1.msra.mxu0 0.0
  %3137 = vmatprep.subr.mxu0 0.0
  %3138 = vmatpush1.msra.mxu0 0.0
  %3139 = vmatprep.subr.mxu0 0.0
  %3140 = vmatpush1.msra.mxu0 0.0
  %3141 = vmatprep.subr.mxu0 0.0
  %3142 = vmatpush1.msra.mxu0 0.0
  %3143 = vmatprep.mubr.f32.mxu0 0.0
  %3144 = vmatmul.mubr.f32.gmra.mrb[0].mxu0 %v205
  %v3145 = vpop.f32.mrb[0].mxu0
  %v3146 = vadd.f32 0.0, %v3145
  %v3147 = vpop.f32.mrb[0].mxu0
  %3148 = vdwg.mxu0
  %v3149 = vmul.f32 %v3146, 0.03125
  %v3150 = vadd.f32 %v3149, 1e-05
  %v3151 = vrsqrt.pop %v3150
  %v3152 = vlaneseq
  %v3153 = vshrl.u32 %v3152, 7
  %v3154 = vsub.s32 0, %v3153
  %v3155 = vrot.slane %v3151, %v3154
  %v3156 = vmul.f32 %v3071, %v3155
  %v3157 = vmul.f32 %v3072, %v3155
  %v3158 = vmul.f32 %v3073, %v3155
  %v3159 = vmul.f32 %v3074, %v3155
  %v3161 = vlaneseq
  %v3162 = vshrl.u32 %v3161, 7
  %v3163 = vsub.s32 0, %v3162
  %v3164 = vrot.slane %v2561, %v3163
  %v3166 = vmul.f32 %v3156, %v3164
  %v3167 = vmul.f32 %v3157, %v3164
  %v3168 = vmul.f32 %v3158, %v3164
  %v3169 = vmul.f32 %v3159, %v3164
  %v3171 = vlaneseq
  %v3172 = vshrl.u32 %v3171, 7
  %v3173 = vsub.s32 0, %v3172
  %v3174 = vrot.slane %v2562, %v3173
  %v3176 = vadd.f32 %v3166, %v3174
  %v3177 = vadd.f32 %v3167, %v3174
  %v3178 = vadd.f32 %v3168, %v3174
  %v3179 = vadd.f32 %v3169, %v3174
  %v3180 = vpack.c.bf16 %v3177, %v3176
  %v3181 = vpack.c.bf16 %v3179, %v3178
  %v3182 = vpack.c.bf16 %v2564, %v2563
  %v3183 = vpack.c.bf16 %v2566, %v2565
  %v3185 = vlaneseq
  %v3186 = vshrl.u32 %v3185, 7
  %v3187 = vsub.s32 0, %v3186
  %v3188 = vrot.slane %v2567, %v3187
  %v3191 = vsel %vm203, %v3180, 0
  %v3194 = vsel %vm203, %v3181, 0
  %3196 = vmatprep.subr.bf16.mxu0 0
  %3197 = vmatpush1.bf16.msra.mxu0 %v3182
  %3198 = vmatprep.subr.bf16.mxu0 0
  %3199 = vmatpush1.bf16.msra.mxu0 %v3183
  %3200 = vmatprep.subr.bf16.mxu0 0
  %3201 = vmatpush1.bf16.msra.mxu0 0
  %3202 = vmatprep.subr.bf16.mxu0 0
  %3203 = vmatpush1.bf16.msra.mxu0 0
  %3204 = vmatprep.subr.bf16.mxu0 0
  %3205 = vmatpush1.bf16.msra.mxu0 0
  %3206 = vmatprep.subr.bf16.mxu0 0
  %3207 = vmatpush1.bf16.msra.mxu0 0
  %3208 = vmatprep.subr.bf16.mxu0 0
  %3209 = vmatpush1.bf16.msra.mxu0 0
  %3210 = vmatprep.subr.bf16.mxu0 0
  %3211 = vmatpush1.bf16.msra.mxu0 0
  %3212 = vmatprep.subr.bf16.mxu0 0
  %3213 = vmatpush1.bf16.msra.mxu0 0
  %3214 = vmatprep.subr.bf16.mxu0 0
  %3215 = vmatpush1.bf16.msra.mxu0 0
  %3216 = vmatprep.subr.bf16.mxu0 0
  %3217 = vmatpush1.bf16.msra.mxu0 0
  %3218 = vmatprep.subr.bf16.mxu0 0
  %3219 = vmatpush1.bf16.msra.mxu0 0
  %3220 = vmatprep.subr.bf16.mxu0 0
  %3221 = vmatpush1.bf16.msra.mxu0 0
  %3222 = vmatprep.subr.bf16.mxu0 0
  %3223 = vmatpush1.bf16.msra.mxu0 0
  %3224 = vmatprep.subr.bf16.mxu0 0
  %3225 = vmatpush1.bf16.msra.mxu0 0
  %3226 = vmatprep.subr.bf16.mxu0 0
  %3227 = vmatpush1.bf16.msra.mxu0 0
  %3228 = vmatprep.mubr.bf16.mxu0 0
  %3229 = vmatmul.mubr.bf16.gmra.mrb[0].mxu0 %v3191
  %v3230 = vpop.f32.mrb[0].mxu0
  %v3231 = vadd.f32 %v3188, %v3230
  %v3232 = vpop.f32.mrb[0].mxu0
  %v3233 = vpop.f32.mrb[0].mxu0
  %v3234 = vadd.f32 %v3188, %v3233
  %v3235 = vpop.f32.mrb[0].mxu0
  %3236 = vmatprep.mubr.bf16.mxu0 0
  %3237 = vmatmul.mubr.bf16.gmra.mrb[0].mxu0 %v3194
  %v3238 = vpop.f32.mrb[0].mxu0
  %v3239 = vadd.f32 %v3188, %v3238
  %v3240 = vpop.f32.mrb[0].mxu0
  %v3241 = vpop.f32.mrb[0].mxu0
  %v3242 = vadd.f32 %v3188, %v3241
  %v3243 = vpop.f32.mrb[0].mxu0
  %3244 = vdwg.mxu0
  %vm3245 = vcmp.gt.f32.partialorder %v3231, 0.0
  %vm3246 = vcmp.gt.f32.partialorder %v3234, 0.0
  %vm3247 = vcmp.gt.f32.partialorder %v3239, 0.0
  %vm3248 = vcmp.gt.f32.partialorder %v3242, 0.0
  %v3249 = vmin.f32 %v3231, 0.0
  %v3250 = vmin.f32 %v3234, 0.0
  %v3251 = vmin.f32 %v3239, 0.0
  %v3252 = vmin.f32 %v3242, 0.0
  %v3253 = vmul.f32 %v3249, 1.442695
  %v3254 = vpow.pop %v3253
  %v3255 = vmul.f32 %v3250, 1.442695
  %v3256 = vpow.pop %v3255
  %v3257 = vmul.f32 %v3251, 1.442695
  %v3258 = vpow.pop %v3257
  %v3259 = vmul.f32 %v3252, 1.442695
  %v3260 = vpow.pop %v3259
  %v3261 = vsub.f32 %v3254, 1.0
  %v3262 = vsub.f32 %v3256, 1.0
  %v3263 = vsub.f32 %v3258, 1.0
  %v3264 = vsub.f32 %v3260, 1.0
  %v3265 = vsel %vm3245, %v3231, %v3261
  %v3266 = vsel %vm3246, %v3234, %v3262
  %v3267 = vsel %vm3247, %v3239, %v3263
  %v3268 = vsel %vm3248, %v3242, %v3264
  %v3270 = vlaneseq
  %v3271 = vshrl.u32 %v3270, 7
  %v3272 = vsub.s32 0, %v3271
  %v3273 = vrot.slane %v2572, %v3272
  %v3276 = vsel %vm203, %v3265, 0
  %v3279 = vsel %vm203, %v3266, 0
  %v3282 = vsel %vm203, %v3267, 0
  %v3285 = vsel %vm203, %v3268, 0
  %3287 = vmatprep.subr.mxu0 0.0
  %3288 = vmatpush1.msra.mxu0 %v2568
  %3289 = vmatprep.subr.mxu0 0.0
  %3290 = vmatpush1.msra.mxu0 %v2569
  %3291 = vmatprep.subr.mxu0 0.0
  %3292 = vmatpush1.msra.mxu0 %v2570
  %3293 = vmatprep.subr.mxu0 0.0
  %3294 = vmatpush1.msra.mxu0 %v2571
  %3295 = vmatprep.subr.mxu0 0.0
  %3296 = vmatpush1.msra.mxu0 0.0
  %3297 = vmatprep.subr.mxu0 0.0
  %3298 = vmatpush1.msra.mxu0 0.0
  %3299 = vmatprep.subr.mxu0 0.0
  %3300 = vmatpush1.msra.mxu0 0.0
  %3301 = vmatprep.subr.mxu0 0.0
  %3302 = vmatpush1.msra.mxu0 0.0
  %3303 = vmatprep.subr.mxu0 0.0
  %3304 = vmatpush1.msra.mxu0 0.0
  %3305 = vmatprep.subr.mxu0 0.0
  %3306 = vmatpush1.msra.mxu0 0.0
  %3307 = vmatprep.subr.mxu0 0.0
  %3308 = vmatpush1.msra.mxu0 0.0
  %3309 = vmatprep.subr.mxu0 0.0
  %3310 = vmatpush1.msra.mxu0 0.0
  %3311 = vmatprep.subr.mxu0 0.0
  %3312 = vmatpush1.msra.mxu0 0.0
  %3313 = vmatprep.subr.mxu0 0.0
  %3314 = vmatpush1.msra.mxu0 0.0
  %3315 = vmatprep.subr.mxu0 0.0
  %3316 = vmatpush1.msra.mxu0 0.0
  %3317 = vmatprep.subr.mxu0 0.0
  %3318 = vmatpush1.msra.mxu0 0.0
  %3319 = vmatprep.subr.mxu0 0.0
  %3320 = vmatpush1.msra.mxu0 0.0
  %3321 = vmatprep.subr.mxu0 0.0
  %3322 = vmatpush1.msra.mxu0 0.0
  %3323 = vmatprep.subr.mxu0 0.0
  %3324 = vmatpush1.msra.mxu0 0.0
  %3325 = vmatprep.subr.mxu0 0.0
  %3326 = vmatpush1.msra.mxu0 0.0
  %3327 = vmatprep.subr.mxu0 0.0
  %3328 = vmatpush1.msra.mxu0 0.0
  %3329 = vmatprep.subr.mxu0 0.0
  %3330 = vmatpush1.msra.mxu0 0.0
  %3331 = vmatprep.subr.mxu0 0.0
  %3332 = vmatpush1.msra.mxu0 0.0
  %3333 = vmatprep.subr.mxu0 0.0
  %3334 = vmatpush1.msra.mxu0 0.0
  %3335 = vmatprep.subr.mxu0 0.0
  %3336 = vmatpush1.msra.mxu0 0.0
  %3337 = vmatprep.subr.mxu0 0.0
  %3338 = vmatpush1.msra.mxu0 0.0
  %3339 = vmatprep.subr.mxu0 0.0
  %3340 = vmatpush1.msra.mxu0 0.0
  %3341 = vmatprep.subr.mxu0 0.0
  %3342 = vmatpush1.msra.mxu0 0.0
  %3343 = vmatprep.subr.mxu0 0.0
  %3344 = vmatpush1.msra.mxu0 0.0
  %3345 = vmatprep.subr.mxu0 0.0
  %3346 = vmatpush1.msra.mxu0 0.0
  %3347 = vmatprep.subr.mxu0 0.0
  %3348 = vmatpush1.msra.mxu0 0.0
  %3349 = vmatprep.subr.mxu0 0.0
  %3350 = vmatpush1.msra.mxu0 0.0
  %3351 = vmatprep.mubr.f32.mxu0 0.0
  %3352 = vmatmul.mubr.f32.gmra.mrb[0].mxu0 %v3276
  %v3353 = vpop.f32.mrb[0].mxu0
  %v3354 = vadd.f32 %v3273, %v3353
  %v3355 = vpop.f32.mrb[0].mxu0
  %3356 = vmatprep.mubr.f32.mxu0 0.0
  %3357 = vmatmul.mubr.f32.gmra.mrb[0].mxu0 %v3279
  %v3358 = vpop.f32.mrb[0].mxu0
  %v3359 = vadd.f32 %v3273, %v3358
  %v3360 = vpop.f32.mrb[0].mxu0
  %3361 = vmatprep.mubr.f32.mxu0 0.0
  %3362 = vmatmul.mubr.f32.gmra.mrb[0].mxu0 %v3282
  %v3363 = vpop.f32.mrb[0].mxu0
  %v3364 = vadd.f32 %v3273, %v3363
  %v3365 = vpop.f32.mrb[0].mxu0
  %3366 = vmatprep.mubr.f32.mxu0 0.0
  %3367 = vmatmul.mubr.f32.gmra.mrb[0].mxu0 %v3285
  %v3368 = vpop.f32.mrb[0].mxu0
  %v3369 = vadd.f32 %v3273, %v3368
  %v3370 = vpop.f32.mrb[0].mxu0
  %3371 = vdwg.mxu0
  %v3372 = vpack.c.bf16 %v3359, %v3354
  %v3373 = vpack.c.bf16 %v3369, %v3364
  %v3374 = vmul.f32 %v3354, %v3354
  %v3375 = vmul.f32 %v3359, %v3359
  %v3376 = vmul.f32 %v3364, %v3364
  %v3377 = vmul.f32 %v3369, %v3369
  %v3378 = vsel %vm1263, %v3374, 0.0
  %3379 = vadd.xlane.f32.xlu0 %v3378
  %v3380 = vpop.xlane.xlu0 %3379
  %v3381 = vsel %vm1263, %v3375, 0.0
  %3382 = vadd.xlane.f32.xlu0 %v3381
  %v3383 = vpop.xlane.xlu0 %3382
  %v3384 = vsel %vm1263, %v3376, 0.0
  %3385 = vadd.xlane.f32.xlu0 %v3384
  %v3386 = vpop.xlane.xlu0 %3385
  %v3387 = vsel %vm1263, %v3377, 0.0
  %3388 = vadd.xlane.f32.xlu0 %v3387
  %v3389 = vpop.xlane.xlu0 %3388
  %v3391 = vsel %vm1263, %v3374, 0
  %v3394 = vsel %vm1263, %v3375, 0
  %v3397 = vsel %vm1263, %v3376, 0
  %v3400 = vsel %vm1263, %v3377, 0
  %3402 = vmatprep.subr.mxu0 0.0
  %3403 = vmatpush1.xpose.msra.mxu0 %v3391
  %3404 = vmatprep.subr.mxu0 0.0
  %3405 = vmatpush1.xpose.msra.mxu0 %v3394
  %3406 = vmatprep.subr.mxu0 0.0
  %3407 = vmatpush1.xpose.msra.mxu0 %v3397
  %3408 = vmatprep.subr.mxu0 0.0
  %3409 = vmatpush1.xpose.msra.mxu0 %v3400
  %3410 = vmatprep.subr.mxu0 0.0
  %3411 = vmatpush1.xpose.msra.mxu0 0.0
  %3412 = vmatprep.subr.mxu0 0.0
  %3413 = vmatpush1.xpose.msra.mxu0 0.0
  %3414 = vmatprep.subr.mxu0 0.0
  %3415 = vmatpush1.xpose.msra.mxu0 0.0
  %3416 = vmatprep.subr.mxu0 0.0
  %3417 = vmatpush1.xpose.msra.mxu0 0.0
  %3418 = vmatprep.subr.mxu0 0.0
  %3419 = vmatpush1.xpose.msra.mxu0 0.0
  %3420 = vmatprep.subr.mxu0 0.0
  %3421 = vmatpush1.xpose.msra.mxu0 0.0
  %3422 = vmatprep.subr.mxu0 0.0
  %3423 = vmatpush1.xpose.msra.mxu0 0.0
  %3424 = vmatprep.subr.mxu0 0.0
  %3425 = vmatpush1.xpose.msra.mxu0 0.0
  %3426 = vmatprep.subr.mxu0 0.0
  %3427 = vmatpush1.xpose.msra.mxu0 0.0
  %3428 = vmatprep.subr.mxu0 0.0
  %3429 = vmatpush1.xpose.msra.mxu0 0.0
  %3430 = vmatprep.subr.mxu0 0.0
  %3431 = vmatpush1.xpose.msra.mxu0 0.0
  %3432 = vmatprep.subr.mxu0 0.0
  %3433 = vmatpush1.xpose.msra.mxu0 0.0
  %3434 = vmatprep.subr.mxu0 0.0
  %3435 = vmatpush1.xpose.msra.mxu0 0.0
  %3436 = vmatprep.subr.mxu0 0.0
  %3437 = vmatpush1.xpose.msra.mxu0 0.0
  %3438 = vmatprep.subr.mxu0 0.0
  %3439 = vmatpush1.xpose.msra.mxu0 0.0
  %3440 = vmatprep.subr.mxu0 0.0
  %3441 = vmatpush1.xpose.msra.mxu0 0.0
  %3442 = vmatprep.subr.mxu0 0.0
  %3443 = vmatpush1.xpose.msra.mxu0 0.0
  %3444 = vmatprep.subr.mxu0 0.0
  %3445 = vmatpush1.xpose.msra.mxu0 0.0
  %3446 = vmatprep.subr.mxu0 0.0
  %3447 = vmatpush1.xpose.msra.mxu0 0.0
  %3448 = vmatprep.subr.mxu0 0.0
  %3449 = vmatpush1.xpose.msra.mxu0 0.0
  %3450 = vmatprep.subr.mxu0 0.0
  %3451 = vmatpush1.xpose.msra.mxu0 0.0
  %3452 = vmatprep.subr.mxu0 0.0
  %3453 = vmatpush1.xpose.msra.mxu0 0.0
  %3454 = vmatprep.subr.mxu0 0.0
  %3455 = vmatpush1.xpose.msra.mxu0 0.0
  %3456 = vmatprep.subr.mxu0 0.0
  %3457 = vmatpush1.xpose.msra.mxu0 0.0
  %3458 = vmatprep.subr.mxu0 0.0
  %3459 = vmatpush1.xpose.msra.mxu0 0.0
  %3460 = vmatprep.subr.mxu0 0.0
  %3461 = vmatpush1.xpose.msra.mxu0 0.0
  %3462 = vmatprep.subr.mxu0 0.0
  %3463 = vmatpush1.xpose.msra.mxu0 0.0
  %3464 = vmatprep.subr.mxu0 0.0
  %3465 = vmatpush1.xpose.msra.mxu0 0.0
  %3466 = vmatprep.mubr.f32.mxu0 0.0
  %3467 = vmatmul.mubr.f32.gmra.mrb[0].mxu0 %v1276
  %v3468 = vpop.f32.mrb[0].mxu0
  %v3469 = vadd.f32 0.0, %v3468
  %v3470 = vpop.f32.mrb[0].mxu0
  %3471 = vdwg.mxu0
  %v3473 = vsel %vm1263, %v3354, 0
  %v3476 = vsel %vm1263, %v3359, 0
  %v3479 = vsel %vm1263, %v3364, 0
  %v3482 = vsel %vm1263, %v3369, 0
  %3484 = vmatprep.subr.mxu0 0.0
  %3485 = vmatpush1.xpose.msra.mxu0 %v3473
  %3486 = vmatprep.subr.mxu0 0.0
  %3487 = vmatpush1.xpose.msra.mxu0 %v3476
  %3488 = vmatprep.subr.mxu0 0.0
  %3489 = vmatpush1.xpose.msra.mxu0 %v3479
  %3490 = vmatprep.subr.mxu0 0.0
  %3491 = vmatpush1.xpose.msra.mxu0 %v3482
  %3492 = vmatprep.subr.mxu0 0.0
  %3493 = vmatpush1.xpose.msra.mxu0 0.0
  %3494 = vmatprep.subr.mxu0 0.0
  %3495 = vmatpush1.xpose.msra.mxu0 0.0
  %3496 = vmatprep.subr.mxu0 0.0
  %3497 = vmatpush1.xpose.msra.mxu0 0.0
  %3498 = vmatprep.subr.mxu0 0.0
  %3499 = vmatpush1.xpose.msra.mxu0 0.0
  %3500 = vmatprep.subr.mxu0 0.0
  %3501 = vmatpush1.xpose.msra.mxu0 0.0
  %3502 = vmatprep.subr.mxu0 0.0
  %3503 = vmatpush1.xpose.msra.mxu0 0.0
  %3504 = vmatprep.subr.mxu0 0.0
  %3505 = vmatpush1.xpose.msra.mxu0 0.0
  %3506 = vmatprep.subr.mxu0 0.0
  %3507 = vmatpush1.xpose.msra.mxu0 0.0
  %3508 = vmatprep.subr.mxu0 0.0
  %3509 = vmatpush1.xpose.msra.mxu0 0.0
  %3510 = vmatprep.subr.mxu0 0.0
  %3511 = vmatpush1.xpose.msra.mxu0 0.0
  %3512 = vmatprep.subr.mxu0 0.0
  %3513 = vmatpush1.xpose.msra.mxu0 0.0
  %3514 = vmatprep.subr.mxu0 0.0
  %3515 = vmatpush1.xpose.msra.mxu0 0.0
  %3516 = vmatprep.subr.mxu0 0.0
  %3517 = vmatpush1.xpose.msra.mxu0 0.0
  %3518 = vmatprep.subr.mxu0 0.0
  %3519 = vmatpush1.xpose.msra.mxu0 0.0
  %3520 = vmatprep.subr.mxu0 0.0
  %3521 = vmatpush1.xpose.msra.mxu0 0.0
  %3522 = vmatprep.subr.mxu0 0.0
  %3523 = vmatpush1.xpose.msra.mxu0 0.0
  %3524 = vmatprep.subr.mxu0 0.0
  %3525 = vmatpush1.xpose.msra.mxu0 0.0
  %3526 = vmatprep.subr.mxu0 0.0
  %3527 = vmatpush1.xpose.msra.mxu0 0.0
  %3528 = vmatprep.subr.mxu0 0.0
  %3529 = vmatpush1.xpose.msra.mxu0 0.0
  %3530 = vmatprep.subr.mxu0 0.0
  %3531 = vmatpush1.xpose.msra.mxu0 0.0
  %3532 = vmatprep.subr.mxu0 0.0
  %3533 = vmatpush1.xpose.msra.mxu0 0.0
  %3534 = vmatprep.subr.mxu0 0.0
  %3535 = vmatpush1.xpose.msra.mxu0 0.0
  %3536 = vmatprep.subr.mxu0 0.0
  %3537 = vmatpush1.xpose.msra.mxu0 0.0
  %3538 = vmatprep.subr.mxu0 0.0
  %3539 = vmatpush1.xpose.msra.mxu0 0.0
  %3540 = vmatprep.subr.mxu0 0.0
  %3541 = vmatpush1.xpose.msra.mxu0 0.0
  %3542 = vmatprep.subr.mxu0 0.0
  %3543 = vmatpush1.xpose.msra.mxu0 0.0
  %3544 = vmatprep.subr.mxu0 0.0
  %3545 = vmatpush1.xpose.msra.mxu0 0.0
  %3546 = vmatprep.subr.mxu0 0.0
  %3547 = vmatpush1.xpose.msra.mxu0 0.0
  %3548 = vmatprep.mubr.f32.mxu0 0.0
  %3549 = vmatmul.mubr.f32.gmra.mrb[0].mxu0 %v3473
  %v3550 = vpop.f32.mrb[0].mxu0
  %v3551 = vadd.f32 0.0, %v3550
  %v3552 = vpop.f32.mrb[0].mxu0
  %3553 = vmatprep.mubr.f32.mxu0 0.0
  %3554 = vmatmul.mubr.f32.gmra.mrb[0].mxu0 %v3476
  %v3555 = vpop.f32.mrb[0].mxu0
  %v3556 = vadd.f32 0.0, %v3555
  %v3557 = vpop.f32.mrb[0].mxu0
  %3558 = vmatprep.mubr.f32.mxu0 0.0
  %3559 = vmatmul.mubr.f32.gmra.mrb[0].mxu0 %v3479
  %v3560 = vpop.f32.mrb[0].mxu0
  %v3561 = vadd.f32 0.0, %v3560
  %v3562 = vpop.f32.mrb[0].mxu0
  %3563 = vmatprep.mubr.f32.mxu0 0.0
  %3564 = vmatmul.mubr.f32.gmra.mrb[0].mxu0 %v3482
  %v3565 = vpop.f32.mrb[0].mxu0
  %v3566 = vadd.f32 0.0, %v3565
  %v3567 = vpop.f32.mrb[0].mxu0
  %3568 = vdwg.mxu0
  %v3569 = vlaneseq
  %v3570 = vshrl.u32 %v3569, 7
  %v3571 = vsub.s32 0, %v3570
  %v3572 = vrot.slane %v3469, %v3571
  %v3573 = vadd.f32 %v3380, %v3572
  %v3574 = vadd.f32 %v3383, %v3572
  %v3575 = vadd.f32 %v3386, %v3572
  %v3576 = vadd.f32 %v3389, %v3572
  %v3577 = vmul.f32 %v3551, 2.0
  %v3578 = vmul.f32 %v3556, 2.0
  %v3579 = vmul.f32 %v3561, 2.0
  %v3580 = vmul.f32 %v3566, 2.0
  %v3581 = vsub.f32 %v3573, %v3577
  %v3582 = vsub.f32 %v3574, %v3578
  %v3583 = vsub.f32 %v3575, %v3579
  %v3584 = vsub.f32 %v3576, %v3580
  %v3585 = vmax.f32 %v3581, 0.0
  %v3586 = vmax.f32 %v3582, 0.0
  %v3587 = vmax.f32 %v3583, 0.0
  %v3588 = vmax.f32 %v3584, 0.0
  %v3589 = vsel %vm1493, %v3585, 1e+30
  %v3590 = vsel %vm1494, %v3586, 1e+30
  %v3591 = vsel %vm1495, %v3587, 1e+30
  %v3592 = vsel %vm1496, %v3588, 1e+30
  %v3593 = vadd.f32 %v3589, 1.0
  %v3594 = vadd.f32 %v3590, 1.0
  %v3595 = vadd.f32 %v3591, 1.0
  %v3596 = vadd.f32 %v3592, 1.0
  %v3601 = vand.u32 %v3593, 4294967264
  %v3602 = vand.u32 %v3594, 4294967264
  %v3603 = vand.u32 %v3595, 4294967264
  %v3604 = vand.u32 %v3596, 4294967264
  %v3605 = vor.u32 %v3601, %v1502
  %v3606 = vor.u32 %v3602, %v1502
  %v3607 = vor.u32 %v3603, %v1502
  %v3608 = vor.u32 %v3604, %v1502
  %v3613 = vsel %vm203, %v3605, inf
  %3614 = vmin.xlane.f32.xlu0 %v3613
  %v3615 = vpop.xlane.xlu0 %3614
  %v3616 = vsel %vm203, %v3606, inf
  %3617 = vmin.xlane.f32.xlu0 %v3616
  %v3618 = vpop.xlane.xlu0 %3617
  %v3619 = vsel %vm203, %v3607, inf
  %3620 = vmin.xlane.f32.xlu0 %v3619
  %v3621 = vpop.xlane.xlu0 %3620
  %v3622 = vsel %vm203, %v3608, inf
  %3623 = vmin.xlane.f32.xlu0 %v3622
  %v3624 = vpop.xlane.xlu0 %3623
  %v3629 = vand.u32 %v3615, 31
  %v3630 = vand.u32 %v3618, 31
  %v3631 = vand.u32 %v3621, 31
  %v3632 = vand.u32 %v3624, 31
  %v3633 = vand.u32 %v3615, 4294967264
  %v3634 = vand.u32 %v3618, 4294967264
  %v3635 = vand.u32 %v3621, 4294967264
  %v3636 = vand.u32 %v3624, 4294967264
  %v3641 = vsub.f32 %v3633, 1.0
  %v3642 = vsub.f32 %v3634, 1.0
  %v3643 = vsub.f32 %v3635, 1.0
  %v3644 = vsub.f32 %v3636, 1.0
  %v3645 = vmul.f32 %v3641, -10.0
  %v3646 = vmul.f32 %v3642, -10.0
  %v3647 = vmul.f32 %v3643, -10.0
  %v3648 = vmul.f32 %v3644, -10.0
  %v3649 = vmul.f32 %v3645, 1.442695
  %v3650 = vpow.pop %v3649
  %v3651 = vmul.f32 %v3646, 1.442695
  %v3652 = vpow.pop %v3651
  %v3653 = vmul.f32 %v3647, 1.442695
  %v3654 = vpow.pop %v3653
  %v3655 = vmul.f32 %v3648, 1.442695
  %v3656 = vpow.pop %v3655
  %vm3657 = vcmp.eq.s32.totalorder %v1502, %v3629
  %vm3658 = vcmp.eq.s32.totalorder %v1502, %v3630
  %vm3659 = vcmp.eq.s32.totalorder %v1502, %v3631
  %vm3660 = vcmp.eq.s32.totalorder %v1502, %v3632
  %v3661 = vsel %vm3657, %v3650, 0.0
  %v3662 = vsel %vm3658, %v3652, 0.0
  %v3663 = vsel %vm3659, %v3654, 0.0
  %v3664 = vsel %vm3660, %v3656, 0.0
  %v3665 = vadd.f32 %v3661, 0.0
  %v3666 = vadd.f32 %v3662, 0.0
  %v3667 = vadd.f32 %v3663, 0.0
  %v3668 = vadd.f32 %v3664, 0.0
  %v3669 = vpack.c.bf16 %v3662, %v3661
  %v3670 = vpack.c.bf16 %v3664, %v3663
  %3673 = vrot.lane.b32.xlu0 %v3372, 124
  %v3674 = vpop.permute.xlu0 %3673
  %3675 = vrot.lane.b32.xlu0 %v3373, 124
  %v3676 = vpop.permute.xlu0 %3675
  %v3680 = vsel %vm203, %v3669, 0
  %v3683 = vsel %vm203, %v3670, 0
  %3685 = vmatprep.subr.bf16.mxu0 0
  %3686 = vmatpush1.bf16.msra.mxu0 %v3674
  %3687 = vmatprep.subr.bf16.mxu0 0
  %3688 = vmatpush1.bf16.msra.mxu0 %v3676
  %3689 = vmatprep.subr.bf16.mxu0 0
  %3690 = vmatpush1.bf16.msra.mxu0 0
  %3691 = vmatprep.subr.bf16.mxu0 0
  %3692 = vmatpush1.bf16.msra.mxu0 0
  %3693 = vmatprep.subr.bf16.mxu0 0
  %3694 = vmatpush1.bf16.msra.mxu0 0
  %3695 = vmatprep.subr.bf16.mxu0 0
  %3696 = vmatpush1.bf16.msra.mxu0 0
  %3697 = vmatprep.subr.bf16.mxu0 0
  %3698 = vmatpush1.bf16.msra.mxu0 0
  %3699 = vmatprep.subr.bf16.mxu0 0
  %3700 = vmatpush1.bf16.msra.mxu0 0
  %3701 = vmatprep.subr.bf16.mxu0 0
  %3702 = vmatpush1.bf16.msra.mxu0 0
  %3703 = vmatprep.subr.bf16.mxu0 0
  %3704 = vmatpush1.bf16.msra.mxu0 0
  %3705 = vmatprep.subr.bf16.mxu0 0
  %3706 = vmatpush1.bf16.msra.mxu0 0
  %3707 = vmatprep.subr.bf16.mxu0 0
  %3708 = vmatpush1.bf16.msra.mxu0 0
  %3709 = vmatprep.subr.bf16.mxu0 0
  %3710 = vmatpush1.bf16.msra.mxu0 0
  %3711 = vmatprep.subr.bf16.mxu0 0
  %3712 = vmatpush1.bf16.msra.mxu0 0
  %3713 = vmatprep.subr.bf16.mxu0 0
  %3714 = vmatpush1.bf16.msra.mxu0 0
  %3715 = vmatprep.subr.bf16.mxu0 0
  %3716 = vmatpush1.bf16.msra.mxu0 0
  %3717 = vmatprep.mubr.bf16.mxu0 0
  %3718 = vmatmul.mubr.bf16.gmra.mrb[0].mxu0 %v3680
  %v3719 = vpop.f32.mrb[0].mxu0
  %v3720 = vadd.f32 0.0, %v3719
  %v3721 = vpop.f32.mrb[0].mxu0
  %v3722 = vpop.f32.mrb[0].mxu0
  %v3723 = vadd.f32 0.0, %v3722
  %v3724 = vpop.f32.mrb[0].mxu0
  %3725 = vmatprep.mubr.bf16.mxu0 0
  %3726 = vmatmul.mubr.bf16.gmra.mrb[0].mxu0 %v3683
  %v3727 = vpop.f32.mrb[0].mxu0
  %v3728 = vadd.f32 0.0, %v3727
  %v3729 = vpop.f32.mrb[0].mxu0
  %v3730 = vpop.f32.mrb[0].mxu0
  %v3731 = vadd.f32 0.0, %v3730
  %v3732 = vpop.f32.mrb[0].mxu0
  %3733 = vdwg.mxu0
  %v3734 = vmax.f32 %v3720, -1e+30
  %v3735 = vmax.f32 %v3723, -1e+30
  %v3736 = vmax.f32 %v3728, -1e+30
  %v3737 = vmax.f32 %v3731, -1e+30
  %v3738 = vsel %vm3657, 3e+38, %v3605
  %v3739 = vsel %vm3658, 3e+38, %v3606
  %v3740 = vsel %vm3659, 3e+38, %v3607
  %v3741 = vsel %vm3660, 3e+38, %v3608
  %v3742 = vsel %vm203, %v3738, inf
  %3743 = vmin.xlane.f32.xlu0 %v3742
  %v3744 = vpop.xlane.xlu0 %3743
  %v3745 = vsel %vm203, %v3739, inf
  %3746 = vmin.xlane.f32.xlu0 %v3745
  %v3747 = vpop.xlane.xlu0 %3746
  %v3748 = vsel %vm203, %v3740, inf
  %3749 = vmin.xlane.f32.xlu0 %v3748
  %v3750 = vpop.xlane.xlu0 %3749
  %v3751 = vsel %vm203, %v3741, inf
  %3752 = vmin.xlane.f32.xlu0 %v3751
  %v3753 = vpop.xlane.xlu0 %3752
  %v3758 = vand.u32 %v3744, 31
  %v3759 = vand.u32 %v3747, 31
  %v3760 = vand.u32 %v3750, 31
  %v3761 = vand.u32 %v3753, 31
  %v3762 = vand.u32 %v3744, 4294967264
  %v3763 = vand.u32 %v3747, 4294967264
  %v3764 = vand.u32 %v3750, 4294967264
  %v3765 = vand.u32 %v3753, 4294967264
  %v3770 = vsub.f32 %v3762, 1.0
  %v3771 = vsub.f32 %v3763, 1.0
  %v3772 = vsub.f32 %v3764, 1.0
  %v3773 = vsub.f32 %v3765, 1.0
  %v3774 = vmul.f32 %v3770, -10.0
  %v3775 = vmul.f32 %v3771, -10.0
  %v3776 = vmul.f32 %v3772, -10.0
  %v3777 = vmul.f32 %v3773, -10.0
  %v3778 = vmul.f32 %v3774, 1.442695
  %v3779 = vpow.pop %v3778
  %v3780 = vmul.f32 %v3775, 1.442695
  %v3781 = vpow.pop %v3780
  %v3782 = vmul.f32 %v3776, 1.442695
  %v3783 = vpow.pop %v3782
  %v3784 = vmul.f32 %v3777, 1.442695
  %v3785 = vpow.pop %v3784
  %vm3786 = vcmp.eq.s32.totalorder %v1502, %v3758
  %vm3787 = vcmp.eq.s32.totalorder %v1502, %v3759
  %vm3788 = vcmp.eq.s32.totalorder %v1502, %v3760
  %vm3789 = vcmp.eq.s32.totalorder %v1502, %v3761
  %v3790 = vsel %vm3786, %v3779, 0.0
  %v3791 = vsel %vm3787, %v3781, 0.0
  %v3792 = vsel %vm3788, %v3783, 0.0
  %v3793 = vsel %vm3789, %v3785, 0.0
  %v3794 = vadd.f32 %v3665, %v3790
  %v3795 = vadd.f32 %v3666, %v3791
  %v3796 = vadd.f32 %v3667, %v3792
  %v3797 = vadd.f32 %v3668, %v3793
  %v3798 = vpack.c.bf16 %v3791, %v3790
  %v3799 = vpack.c.bf16 %v3793, %v3792
  %v3801 = vsel %vm203, %v3798, 0
  %v3804 = vsel %vm203, %v3799, 0
  %3806 = vmatprep.subr.bf16.mxu0 0
  %3807 = vmatpush1.bf16.msra.mxu0 %v3674
  %3808 = vmatprep.subr.bf16.mxu0 0
  %3809 = vmatpush1.bf16.msra.mxu0 %v3676
  %3810 = vmatprep.subr.bf16.mxu0 0
  %3811 = vmatpush1.bf16.msra.mxu0 0
  %3812 = vmatprep.subr.bf16.mxu0 0
  %3813 = vmatpush1.bf16.msra.mxu0 0
  %3814 = vmatprep.subr.bf16.mxu0 0
  %3815 = vmatpush1.bf16.msra.mxu0 0
  %3816 = vmatprep.subr.bf16.mxu0 0
  %3817 = vmatpush1.bf16.msra.mxu0 0
  %3818 = vmatprep.subr.bf16.mxu0 0
  %3819 = vmatpush1.bf16.msra.mxu0 0
  %3820 = vmatprep.subr.bf16.mxu0 0
  %3821 = vmatpush1.bf16.msra.mxu0 0
  %3822 = vmatprep.subr.bf16.mxu0 0
  %3823 = vmatpush1.bf16.msra.mxu0 0
  %3824 = vmatprep.subr.bf16.mxu0 0
  %3825 = vmatpush1.bf16.msra.mxu0 0
  %3826 = vmatprep.subr.bf16.mxu0 0
  %3827 = vmatpush1.bf16.msra.mxu0 0
  %3828 = vmatprep.subr.bf16.mxu0 0
  %3829 = vmatpush1.bf16.msra.mxu0 0
  %3830 = vmatprep.subr.bf16.mxu0 0
  %3831 = vmatpush1.bf16.msra.mxu0 0
  %3832 = vmatprep.subr.bf16.mxu0 0
  %3833 = vmatpush1.bf16.msra.mxu0 0
  %3834 = vmatprep.subr.bf16.mxu0 0
  %3835 = vmatpush1.bf16.msra.mxu0 0
  %3836 = vmatprep.subr.bf16.mxu0 0
  %3837 = vmatpush1.bf16.msra.mxu0 0
  %3838 = vmatprep.mubr.bf16.mxu0 0
  %3839 = vmatmul.mubr.bf16.gmra.mrb[0].mxu0 %v3801
  %v3840 = vpop.f32.mrb[0].mxu0
  %v3841 = vadd.f32 0.0, %v3840
  %v3842 = vpop.f32.mrb[0].mxu0
  %v3843 = vpop.f32.mrb[0].mxu0
  %v3844 = vadd.f32 0.0, %v3843
  %v3845 = vpop.f32.mrb[0].mxu0
  %3846 = vmatprep.mubr.bf16.mxu0 0
  %3847 = vmatmul.mubr.bf16.gmra.mrb[0].mxu0 %v3804
  %v3848 = vpop.f32.mrb[0].mxu0
  %v3849 = vadd.f32 0.0, %v3848
  %v3850 = vpop.f32.mrb[0].mxu0
  %v3851 = vpop.f32.mrb[0].mxu0
  %v3852 = vadd.f32 0.0, %v3851
  %v3853 = vpop.f32.mrb[0].mxu0
  %3854 = vdwg.mxu0
  %v3855 = vmax.f32 %v3734, %v3841
  %v3856 = vmax.f32 %v3735, %v3844
  %v3857 = vmax.f32 %v3736, %v3849
  %v3858 = vmax.f32 %v3737, %v3852
  %v3859 = vsel %vm3786, 3e+38, %v3738
  %v3860 = vsel %vm3787, 3e+38, %v3739
  %v3861 = vsel %vm3788, 3e+38, %v3740
  %v3862 = vsel %vm3789, 3e+38, %v3741
  %v3863 = vsel %vm203, %v3859, inf
  %3864 = vmin.xlane.f32.xlu0 %v3863
  %v3865 = vpop.xlane.xlu0 %3864
  %v3866 = vsel %vm203, %v3860, inf
  %3867 = vmin.xlane.f32.xlu0 %v3866
  %v3868 = vpop.xlane.xlu0 %3867
  %v3869 = vsel %vm203, %v3861, inf
  %3870 = vmin.xlane.f32.xlu0 %v3869
  %v3871 = vpop.xlane.xlu0 %3870
  %v3872 = vsel %vm203, %v3862, inf
  %3873 = vmin.xlane.f32.xlu0 %v3872
  %v3874 = vpop.xlane.xlu0 %3873
  %v3879 = vand.u32 %v3865, 31
  %v3880 = vand.u32 %v3868, 31
  %v3881 = vand.u32 %v3871, 31
  %v3882 = vand.u32 %v3874, 31
  %v3883 = vand.u32 %v3865, 4294967264
  %v3884 = vand.u32 %v3868, 4294967264
  %v3885 = vand.u32 %v3871, 4294967264
  %v3886 = vand.u32 %v3874, 4294967264
  %v3891 = vsub.f32 %v3883, 1.0
  %v3892 = vsub.f32 %v3884, 1.0
  %v3893 = vsub.f32 %v3885, 1.0
  %v3894 = vsub.f32 %v3886, 1.0
  %v3895 = vmul.f32 %v3891, -10.0
  %v3896 = vmul.f32 %v3892, -10.0
  %v3897 = vmul.f32 %v3893, -10.0
  %v3898 = vmul.f32 %v3894, -10.0
  %v3899 = vmul.f32 %v3895, 1.442695
  %v3900 = vpow.pop %v3899
  %v3901 = vmul.f32 %v3896, 1.442695
  %v3902 = vpow.pop %v3901
  %v3903 = vmul.f32 %v3897, 1.442695
  %v3904 = vpow.pop %v3903
  %v3905 = vmul.f32 %v3898, 1.442695
  %v3906 = vpow.pop %v3905
  %vm3907 = vcmp.eq.s32.totalorder %v1502, %v3879
  %vm3908 = vcmp.eq.s32.totalorder %v1502, %v3880
  %vm3909 = vcmp.eq.s32.totalorder %v1502, %v3881
  %vm3910 = vcmp.eq.s32.totalorder %v1502, %v3882
  %v3911 = vsel %vm3907, %v3900, 0.0
  %v3912 = vsel %vm3908, %v3902, 0.0
  %v3913 = vsel %vm3909, %v3904, 0.0
  %v3914 = vsel %vm3910, %v3906, 0.0
  %v3915 = vadd.f32 %v3794, %v3911
  %v3916 = vadd.f32 %v3795, %v3912
  %v3917 = vadd.f32 %v3796, %v3913
  %v3918 = vadd.f32 %v3797, %v3914
  %v3919 = vpack.c.bf16 %v3912, %v3911
  %v3920 = vpack.c.bf16 %v3914, %v3913
  %v3922 = vsel %vm203, %v3919, 0
  %v3925 = vsel %vm203, %v3920, 0
  %3927 = vmatprep.subr.bf16.mxu0 0
  %3928 = vmatpush1.bf16.msra.mxu0 %v3674
  %3929 = vmatprep.subr.bf16.mxu0 0
  %3930 = vmatpush1.bf16.msra.mxu0 %v3676
  %3931 = vmatprep.subr.bf16.mxu0 0
  %3932 = vmatpush1.bf16.msra.mxu0 0
  %3933 = vmatprep.subr.bf16.mxu0 0
  %3934 = vmatpush1.bf16.msra.mxu0 0
  %3935 = vmatprep.subr.bf16.mxu0 0
  %3936 = vmatpush1.bf16.msra.mxu0 0
  %3937 = vmatprep.subr.bf16.mxu0 0
  %3938 = vmatpush1.bf16.msra.mxu0 0
  %3939 = vmatprep.subr.bf16.mxu0 0
  %3940 = vmatpush1.bf16.msra.mxu0 0
  %3941 = vmatprep.subr.bf16.mxu0 0
  %3942 = vmatpush1.bf16.msra.mxu0 0
  %3943 = vmatprep.subr.bf16.mxu0 0
  %3944 = vmatpush1.bf16.msra.mxu0 0
  %3945 = vmatprep.subr.bf16.mxu0 0
  %3946 = vmatpush1.bf16.msra.mxu0 0
  %3947 = vmatprep.subr.bf16.mxu0 0
  %3948 = vmatpush1.bf16.msra.mxu0 0
  %3949 = vmatprep.subr.bf16.mxu0 0
  %3950 = vmatpush1.bf16.msra.mxu0 0
  %3951 = vmatprep.subr.bf16.mxu0 0
  %3952 = vmatpush1.bf16.msra.mxu0 0
  %3953 = vmatprep.subr.bf16.mxu0 0
  %3954 = vmatpush1.bf16.msra.mxu0 0
  %3955 = vmatprep.subr.bf16.mxu0 0
  %3956 = vmatpush1.bf16.msra.mxu0 0
  %3957 = vmatprep.subr.bf16.mxu0 0
  %3958 = vmatpush1.bf16.msra.mxu0 0
  %3959 = vmatprep.mubr.bf16.mxu0 0
  %3960 = vmatmul.mubr.bf16.gmra.mrb[0].mxu0 %v3922
  %v3961 = vpop.f32.mrb[0].mxu0
  %v3962 = vadd.f32 0.0, %v3961
  %v3963 = vpop.f32.mrb[0].mxu0
  %v3964 = vpop.f32.mrb[0].mxu0
  %v3965 = vadd.f32 0.0, %v3964
  %v3966 = vpop.f32.mrb[0].mxu0
  %3967 = vmatprep.mubr.bf16.mxu0 0
  %3968 = vmatmul.mubr.bf16.gmra.mrb[0].mxu0 %v3925
  %v3969 = vpop.f32.mrb[0].mxu0
  %v3970 = vadd.f32 0.0, %v3969
  %v3971 = vpop.f32.mrb[0].mxu0
  %v3972 = vpop.f32.mrb[0].mxu0
  %v3973 = vadd.f32 0.0, %v3972
  %v3974 = vpop.f32.mrb[0].mxu0
  %3975 = vdwg.mxu0
  %v3976 = vmax.f32 %v3855, %v3962
  %v3977 = vmax.f32 %v3856, %v3965
  %v3978 = vmax.f32 %v3857, %v3970
  %v3979 = vmax.f32 %v3858, %v3973
  %v3980 = vsel %vm3907, 3e+38, %v3859
  %v3981 = vsel %vm3908, 3e+38, %v3860
  %v3982 = vsel %vm3909, 3e+38, %v3861
  %v3983 = vsel %vm3910, 3e+38, %v3862
  %v3984 = vsel %vm203, %v3980, inf
  %3985 = vmin.xlane.f32.xlu0 %v3984
  %v3986 = vpop.xlane.xlu0 %3985
  %v3987 = vsel %vm203, %v3981, inf
  %3988 = vmin.xlane.f32.xlu0 %v3987
  %v3989 = vpop.xlane.xlu0 %3988
  %v3990 = vsel %vm203, %v3982, inf
  %3991 = vmin.xlane.f32.xlu0 %v3990
  %v3992 = vpop.xlane.xlu0 %3991
  %v3993 = vsel %vm203, %v3983, inf
  %3994 = vmin.xlane.f32.xlu0 %v3993
  %v3995 = vpop.xlane.xlu0 %3994
  %v4000 = vand.u32 %v3986, 31
  %v4001 = vand.u32 %v3989, 31
  %v4002 = vand.u32 %v3992, 31
  %v4003 = vand.u32 %v3995, 31
  %v4004 = vand.u32 %v3986, 4294967264
  %v4005 = vand.u32 %v3989, 4294967264
  %v4006 = vand.u32 %v3992, 4294967264
  %v4007 = vand.u32 %v3995, 4294967264
  %v4012 = vsub.f32 %v4004, 1.0
  %v4013 = vsub.f32 %v4005, 1.0
  %v4014 = vsub.f32 %v4006, 1.0
  %v4015 = vsub.f32 %v4007, 1.0
  %v4016 = vmul.f32 %v4012, -10.0
  %v4017 = vmul.f32 %v4013, -10.0
  %v4018 = vmul.f32 %v4014, -10.0
  %v4019 = vmul.f32 %v4015, -10.0
  %v4020 = vmul.f32 %v4016, 1.442695
  %v4021 = vpow.pop %v4020
  %v4022 = vmul.f32 %v4017, 1.442695
  %v4023 = vpow.pop %v4022
  %v4024 = vmul.f32 %v4018, 1.442695
  %v4025 = vpow.pop %v4024
  %v4026 = vmul.f32 %v4019, 1.442695
  %v4027 = vpow.pop %v4026
  %vm4028 = vcmp.eq.s32.totalorder %v1502, %v4000
  %vm4029 = vcmp.eq.s32.totalorder %v1502, %v4001
  %vm4030 = vcmp.eq.s32.totalorder %v1502, %v4002
  %vm4031 = vcmp.eq.s32.totalorder %v1502, %v4003
  %v4032 = vsel %vm4028, %v4021, 0.0
  %v4033 = vsel %vm4029, %v4023, 0.0
  %v4034 = vsel %vm4030, %v4025, 0.0
  %v4035 = vsel %vm4031, %v4027, 0.0
  %v4036 = vadd.f32 %v3915, %v4032
  %v4037 = vadd.f32 %v3916, %v4033
  %v4038 = vadd.f32 %v3917, %v4034
  %v4039 = vadd.f32 %v3918, %v4035
  %v4040 = vpack.c.bf16 %v4033, %v4032
  %v4041 = vpack.c.bf16 %v4035, %v4034
  %v4043 = vsel %vm203, %v4040, 0
  %v4046 = vsel %vm203, %v4041, 0
  %4048 = vmatprep.subr.bf16.mxu0 0
  %4049 = vmatpush1.bf16.msra.mxu0 %v3674
  %4050 = vmatprep.subr.bf16.mxu0 0
  %4051 = vmatpush1.bf16.msra.mxu0 %v3676
  %4052 = vmatprep.subr.bf16.mxu0 0
  %4053 = vmatpush1.bf16.msra.mxu0 0
  %4054 = vmatprep.subr.bf16.mxu0 0
  %4055 = vmatpush1.bf16.msra.mxu0 0
  %4056 = vmatprep.subr.bf16.mxu0 0
  %4057 = vmatpush1.bf16.msra.mxu0 0
  %4058 = vmatprep.subr.bf16.mxu0 0
  %4059 = vmatpush1.bf16.msra.mxu0 0
  %4060 = vmatprep.subr.bf16.mxu0 0
  %4061 = vmatpush1.bf16.msra.mxu0 0
  %4062 = vmatprep.subr.bf16.mxu0 0
  %4063 = vmatpush1.bf16.msra.mxu0 0
  %4064 = vmatprep.subr.bf16.mxu0 0
  %4065 = vmatpush1.bf16.msra.mxu0 0
  %4066 = vmatprep.subr.bf16.mxu0 0
  %4067 = vmatpush1.bf16.msra.mxu0 0
  %4068 = vmatprep.subr.bf16.mxu0 0
  %4069 = vmatpush1.bf16.msra.mxu0 0
  %4070 = vmatprep.subr.bf16.mxu0 0
  %4071 = vmatpush1.bf16.msra.mxu0 0
  %4072 = vmatprep.subr.bf16.mxu0 0
  %4073 = vmatpush1.bf16.msra.mxu0 0
  %4074 = vmatprep.subr.bf16.mxu0 0
  %4075 = vmatpush1.bf16.msra.mxu0 0
  %4076 = vmatprep.subr.bf16.mxu0 0
  %4077 = vmatpush1.bf16.msra.mxu0 0
  %4078 = vmatprep.subr.bf16.mxu0 0
  %4079 = vmatpush1.bf16.msra.mxu0 0
  %4080 = vmatprep.mubr.bf16.mxu0 0
  %4081 = vmatmul.mubr.bf16.gmra.mrb[0].mxu0 %v4043
  %v4082 = vpop.f32.mrb[0].mxu0
  %v4083 = vadd.f32 0.0, %v4082
  %v4084 = vpop.f32.mrb[0].mxu0
  %v4085 = vpop.f32.mrb[0].mxu0
  %v4086 = vadd.f32 0.0, %v4085
  %v4087 = vpop.f32.mrb[0].mxu0
  %4088 = vmatprep.mubr.bf16.mxu0 0
  %4089 = vmatmul.mubr.bf16.gmra.mrb[0].mxu0 %v4046
  %v4090 = vpop.f32.mrb[0].mxu0
  %v4091 = vadd.f32 0.0, %v4090
  %v4092 = vpop.f32.mrb[0].mxu0
  %v4093 = vpop.f32.mrb[0].mxu0
  %v4094 = vadd.f32 0.0, %v4093
  %v4095 = vpop.f32.mrb[0].mxu0
  %4096 = vdwg.mxu0
  %v4097 = vmax.f32 %v3976, %v4083
  %v4098 = vmax.f32 %v3977, %v4086
  %v4099 = vmax.f32 %v3978, %v4091
  %v4100 = vmax.f32 %v3979, %v4094
  %v4101 = vpack.c.bf16 %v4037, %v4036
  %v4102 = vpack.c.bf16 %v4039, %v4038
  %v4104 = vsel %vm203, %v4101, 0
  %v4107 = vsel %vm203, %v4102, 0
  %4109 = vmatprep.subr.bf16.mxu0 0
  %4110 = vmatpush1.bf16.msra.mxu0 %v3674
  %4111 = vmatprep.subr.bf16.mxu0 0
  %4112 = vmatpush1.bf16.msra.mxu0 %v3676
  %4113 = vmatprep.subr.bf16.mxu0 0
  %4114 = vmatpush1.bf16.msra.mxu0 0
  %4115 = vmatprep.subr.bf16.mxu0 0
  %4116 = vmatpush1.bf16.msra.mxu0 0
  %4117 = vmatprep.subr.bf16.mxu0 0
  %4118 = vmatpush1.bf16.msra.mxu0 0
  %4119 = vmatprep.subr.bf16.mxu0 0
  %4120 = vmatpush1.bf16.msra.mxu0 0
  %4121 = vmatprep.subr.bf16.mxu0 0
  %4122 = vmatpush1.bf16.msra.mxu0 0
  %4123 = vmatprep.subr.bf16.mxu0 0
  %4124 = vmatpush1.bf16.msra.mxu0 0
  %4125 = vmatprep.subr.bf16.mxu0 0
  %4126 = vmatpush1.bf16.msra.mxu0 0
  %4127 = vmatprep.subr.bf16.mxu0 0
  %4128 = vmatpush1.bf16.msra.mxu0 0
  %4129 = vmatprep.subr.bf16.mxu0 0
  %4130 = vmatpush1.bf16.msra.mxu0 0
  %4131 = vmatprep.subr.bf16.mxu0 0
  %4132 = vmatpush1.bf16.msra.mxu0 0
  %4133 = vmatprep.subr.bf16.mxu0 0
  %4134 = vmatpush1.bf16.msra.mxu0 0
  %4135 = vmatprep.subr.bf16.mxu0 0
  %4136 = vmatpush1.bf16.msra.mxu0 0
  %4137 = vmatprep.subr.bf16.mxu0 0
  %4138 = vmatpush1.bf16.msra.mxu0 0
  %4139 = vmatprep.subr.bf16.mxu0 0
  %4140 = vmatpush1.bf16.msra.mxu0 0
  %4141 = vmatprep.mubr.bf16.mxu0 0
  %4142 = vmatmul.mubr.bf16.gmra.mrb[0].mxu0 %v4104
  %v4143 = vpop.f32.mrb[0].mxu0
  %v4144 = vadd.f32 0.0, %v4143
  %v4145 = vpop.f32.mrb[0].mxu0
  %v4146 = vpop.f32.mrb[0].mxu0
  %v4147 = vadd.f32 0.0, %v4146
  %v4148 = vpop.f32.mrb[0].mxu0
  %4149 = vmatprep.mubr.bf16.mxu0 0
  %4150 = vmatmul.mubr.bf16.gmra.mrb[0].mxu0 %v4107
  %v4151 = vpop.f32.mrb[0].mxu0
  %v4152 = vadd.f32 0.0, %v4151
  %v4153 = vpop.f32.mrb[0].mxu0
  %v4154 = vpop.f32.mrb[0].mxu0
  %v4155 = vadd.f32 0.0, %v4154
  %v4156 = vpop.f32.mrb[0].mxu0
  %4157 = vdwg.mxu0
  %v4158 = vmul.f32 %v4144, 0.25
  %v4159 = vmul.f32 %v4147, 0.25
  %v4160 = vmul.f32 %v4152, 0.25
  %v4161 = vmul.f32 %v4155, 0.25
  %v4162 = vpack.c.bf16 %v3266, %v3265
  %v4163 = vpack.c.bf16 %v3268, %v3267
  %v4164 = vpack.c.bf16 %v2574, %v2573
  %v4165 = vpack.c.bf16 %v2576, %v2575
  %v4166 = vpack.c.bf16 %v4159, %v4158
  %v4167 = vpack.c.bf16 %v4161, %v4160
  %v4168 = vpack.c.bf16 %v2578, %v2577
  %v4169 = vpack.c.bf16 %v2580, %v2579
  %v4171 = vsel %vm203, %v4166, 0
  %v4174 = vsel %vm203, %v4167, 0
  %4176 = vmatprep.subr.bf16.mxu0 0
  %4177 = vmatpush1.bf16.msra.mxu0 %v4168
  %4178 = vmatprep.subr.bf16.mxu0 0
  %4179 = vmatpush1.bf16.msra.mxu0 %v4169
  %4180 = vmatprep.subr.bf16.mxu0 0
  %4181 = vmatpush1.bf16.msra.mxu0 0
  %4182 = vmatprep.subr.bf16.mxu0 0
  %4183 = vmatpush1.bf16.msra.mxu0 0
  %4184 = vmatprep.subr.bf16.mxu0 0
  %4185 = vmatpush1.bf16.msra.mxu0 0
  %4186 = vmatprep.subr.bf16.mxu0 0
  %4187 = vmatpush1.bf16.msra.mxu0 0
  %4188 = vmatprep.subr.bf16.mxu0 0
  %4189 = vmatpush1.bf16.msra.mxu0 0
  %4190 = vmatprep.subr.bf16.mxu0 0
  %4191 = vmatpush1.bf16.msra.mxu0 0
  %4192 = vmatprep.subr.bf16.mxu0 0
  %4193 = vmatpush1.bf16.msra.mxu0 0
  %4194 = vmatprep.subr.bf16.mxu0 0
  %4195 = vmatpush1.bf16.msra.mxu0 0
  %4196 = vmatprep.subr.bf16.mxu0 0
  %4197 = vmatpush1.bf16.msra.mxu0 0
  %4198 = vmatprep.subr.bf16.mxu0 0
  %4199 = vmatpush1.bf16.msra.mxu0 0
  %4200 = vmatprep.subr.bf16.mxu0 0
  %4201 = vmatpush1.bf16.msra.mxu0 0
  %4202 = vmatprep.subr.bf16.mxu0 0
  %4203 = vmatpush1.bf16.msra.mxu0 0
  %4204 = vmatprep.subr.bf16.mxu0 0
  %4205 = vmatpush1.bf16.msra.mxu0 0
  %4206 = vmatprep.subr.bf16.mxu0 0
  %4207 = vmatpush1.bf16.msra.mxu0 0
  %4208 = vmatprep.mubr.bf16.mxu0 0
  %4209 = vmatmul.mubr.bf16.gmra.mrb[0].mxu0 %v4171
  %v4210 = vpop.f32.mrb[0].mxu0
  %v4211 = vadd.f32 0.0, %v4210
  %v4212 = vpop.f32.mrb[0].mxu0
  %v4213 = vpop.f32.mrb[0].mxu0
  %v4214 = vadd.f32 0.0, %v4213
  %v4215 = vpop.f32.mrb[0].mxu0
  %4216 = vmatprep.mubr.bf16.mxu0 0
  %4217 = vmatmul.mubr.bf16.gmra.mrb[0].mxu0 %v4174
  %v4218 = vpop.f32.mrb[0].mxu0
  %v4219 = vadd.f32 0.0, %v4218
  %v4220 = vpop.f32.mrb[0].mxu0
  %v4221 = vpop.f32.mrb[0].mxu0
  %v4222 = vadd.f32 0.0, %v4221
  %v4223 = vpop.f32.mrb[0].mxu0
  %4224 = vdwg.mxu0
  %v4226 = vsel %vm203, %v4162, 0
  %v4229 = vsel %vm203, %v4163, 0
  %4231 = vmatprep.subr.bf16.mxu0 0
  %4232 = vmatpush1.bf16.msra.mxu0 %v4164
  %4233 = vmatprep.subr.bf16.mxu0 0
  %4234 = vmatpush1.bf16.msra.mxu0 %v4165
  %4235 = vmatprep.subr.bf16.mxu0 0
  %4236 = vmatpush1.bf16.msra.mxu0 0
  %4237 = vmatprep.subr.bf16.mxu0 0
  %4238 = vmatpush1.bf16.msra.mxu0 0
  %4239 = vmatprep.subr.bf16.mxu0 0
  %4240 = vmatpush1.bf16.msra.mxu0 0
  %4241 = vmatprep.subr.bf16.mxu0 0
  %4242 = vmatpush1.bf16.msra.mxu0 0
  %4243 = vmatprep.subr.bf16.mxu0 0
  %4244 = vmatpush1.bf16.msra.mxu0 0
  %4245 = vmatprep.subr.bf16.mxu0 0
  %4246 = vmatpush1.bf16.msra.mxu0 0
  %4247 = vmatprep.subr.bf16.mxu0 0
  %4248 = vmatpush1.bf16.msra.mxu0 0
  %4249 = vmatprep.subr.bf16.mxu0 0
  %4250 = vmatpush1.bf16.msra.mxu0 0
  %4251 = vmatprep.subr.bf16.mxu0 0
  %4252 = vmatpush1.bf16.msra.mxu0 0
  %4253 = vmatprep.subr.bf16.mxu0 0
  %4254 = vmatpush1.bf16.msra.mxu0 0
  %4255 = vmatprep.subr.bf16.mxu0 0
  %4256 = vmatpush1.bf16.msra.mxu0 0
  %4257 = vmatprep.subr.bf16.mxu0 0
  %4258 = vmatpush1.bf16.msra.mxu0 0
  %4259 = vmatprep.subr.bf16.mxu0 0
  %4260 = vmatpush1.bf16.msra.mxu0 0
  %4261 = vmatprep.subr.bf16.mxu0 0
  %4262 = vmatpush1.bf16.msra.mxu0 0
  %4263 = vmatprep.mubr.bf16.mxu0 0
  %4264 = vmatmul.mubr.bf16.gmra.mrb[0].mxu0 %v4226
  %v4265 = vpop.f32.mrb[0].mxu0
  %v4266 = vadd.f32 %v4211, %v4265
  %v4267 = vpop.f32.mrb[0].mxu0
  %v4268 = vpop.f32.mrb[0].mxu0
  %v4269 = vadd.f32 %v4214, %v4268
  %v4270 = vpop.f32.mrb[0].mxu0
  %4271 = vmatprep.mubr.bf16.mxu0 0
  %4272 = vmatmul.mubr.bf16.gmra.mrb[0].mxu0 %v4229
  %v4273 = vpop.f32.mrb[0].mxu0
  %v4274 = vadd.f32 %v4219, %v4273
  %v4275 = vpop.f32.mrb[0].mxu0
  %v4276 = vpop.f32.mrb[0].mxu0
  %v4277 = vadd.f32 %v4222, %v4276
  %v4278 = vpop.f32.mrb[0].mxu0
  %4279 = vdwg.mxu0
  %v4280 = vpack.c.bf16 %v4098, %v4097
  %v4281 = vpack.c.bf16 %v4100, %v4099
  %v4282 = vpack.c.bf16 %v2582, %v2581
  %v4283 = vpack.c.bf16 %v2584, %v2583
  %v4285 = vsel %vm203, %v4280, 0
  %v4288 = vsel %vm203, %v4281, 0
  %4290 = vmatprep.subr.bf16.mxu0 0
  %4291 = vmatpush1.bf16.msra.mxu0 %v4282
  %4292 = vmatprep.subr.bf16.mxu0 0
  %4293 = vmatpush1.bf16.msra.mxu0 %v4283
  %4294 = vmatprep.subr.bf16.mxu0 0
  %4295 = vmatpush1.bf16.msra.mxu0 0
  %4296 = vmatprep.subr.bf16.mxu0 0
  %4297 = vmatpush1.bf16.msra.mxu0 0
  %4298 = vmatprep.subr.bf16.mxu0 0
  %4299 = vmatpush1.bf16.msra.mxu0 0
  %4300 = vmatprep.subr.bf16.mxu0 0
  %4301 = vmatpush1.bf16.msra.mxu0 0
  %4302 = vmatprep.subr.bf16.mxu0 0
  %4303 = vmatpush1.bf16.msra.mxu0 0
  %4304 = vmatprep.subr.bf16.mxu0 0
  %4305 = vmatpush1.bf16.msra.mxu0 0
  %4306 = vmatprep.subr.bf16.mxu0 0
  %4307 = vmatpush1.bf16.msra.mxu0 0
  %4308 = vmatprep.subr.bf16.mxu0 0
  %4309 = vmatpush1.bf16.msra.mxu0 0
  %4310 = vmatprep.subr.bf16.mxu0 0
  %4311 = vmatpush1.bf16.msra.mxu0 0
  %4312 = vmatprep.subr.bf16.mxu0 0
  %4313 = vmatpush1.bf16.msra.mxu0 0
  %4314 = vmatprep.subr.bf16.mxu0 0
  %4315 = vmatpush1.bf16.msra.mxu0 0
  %4316 = vmatprep.subr.bf16.mxu0 0
  %4317 = vmatpush1.bf16.msra.mxu0 0
  %4318 = vmatprep.subr.bf16.mxu0 0
  %4319 = vmatpush1.bf16.msra.mxu0 0
  %4320 = vmatprep.subr.bf16.mxu0 0
  %4321 = vmatpush1.bf16.msra.mxu0 0
  %4322 = vmatprep.mubr.bf16.mxu0 0
  %4323 = vmatmul.mubr.bf16.gmra.mrb[0].mxu0 %v4285
  %v4324 = vpop.f32.mrb[0].mxu0
  %v4325 = vadd.f32 0.0, %v4324
  %v4326 = vpop.f32.mrb[0].mxu0
  %v4327 = vpop.f32.mrb[0].mxu0
  %v4328 = vadd.f32 0.0, %v4327
  %v4329 = vpop.f32.mrb[0].mxu0
  %4330 = vmatprep.mubr.bf16.mxu0 0
  %4331 = vmatmul.mubr.bf16.gmra.mrb[0].mxu0 %v4288
  %v4332 = vpop.f32.mrb[0].mxu0
  %v4333 = vadd.f32 0.0, %v4332
  %v4334 = vpop.f32.mrb[0].mxu0
  %v4335 = vpop.f32.mrb[0].mxu0
  %v4336 = vadd.f32 0.0, %v4335
  %v4337 = vpop.f32.mrb[0].mxu0
  %4338 = vdwg.mxu0
  %v4339 = vadd.f32 %v4266, %v4325
  %v4340 = vadd.f32 %v4269, %v4328
  %v4341 = vadd.f32 %v4274, %v4333
  %v4342 = vadd.f32 %v4277, %v4336
  %v4344 = vlaneseq
  %v4345 = vshrl.u32 %v4344, 7
  %v4346 = vsub.s32 0, %v4345
  %v4347 = vrot.slane %v2585, %v4346
  %v4349 = vadd.f32 %v4339, %v4347
  %v4350 = vadd.f32 %v4340, %v4347
  %v4351 = vadd.f32 %v4341, %v4347
  %v4352 = vadd.f32 %v4342, %v4347
  %4353 = vmatprep.subr.mxu0 0.0
  %4354 = vmatpush1.msra.mxu0 %v4349
  %4355 = vmatprep.subr.mxu0 0.0
  %4356 = vmatpush1.msra.mxu0 %v4350
  %4357 = vmatprep.subr.mxu0 0.0
  %4358 = vmatpush1.msra.mxu0 %v4351
  %4359 = vmatprep.subr.mxu0 0.0
  %4360 = vmatpush1.msra.mxu0 %v4352
  %4361 = vmatprep.subr.mxu0 0.0
  %4362 = vmatpush1.msra.mxu0 0.0
  %4363 = vmatprep.subr.mxu0 0.0
  %4364 = vmatpush1.msra.mxu0 0.0
  %4365 = vmatprep.subr.mxu0 0.0
  %4366 = vmatpush1.msra.mxu0 0.0
  %4367 = vmatprep.subr.mxu0 0.0
  %4368 = vmatpush1.msra.mxu0 0.0
  %4369 = vmatprep.subr.mxu0 0.0
  %4370 = vmatpush1.msra.mxu0 0.0
  %4371 = vmatprep.subr.mxu0 0.0
  %4372 = vmatpush1.msra.mxu0 0.0
  %4373 = vmatprep.subr.mxu0 0.0
  %4374 = vmatpush1.msra.mxu0 0.0
  %4375 = vmatprep.subr.mxu0 0.0
  %4376 = vmatpush1.msra.mxu0 0.0
  %4377 = vmatprep.subr.mxu0 0.0
  %4378 = vmatpush1.msra.mxu0 0.0
  %4379 = vmatprep.subr.mxu0 0.0
  %4380 = vmatpush1.msra.mxu0 0.0
  %4381 = vmatprep.subr.mxu0 0.0
  %4382 = vmatpush1.msra.mxu0 0.0
  %4383 = vmatprep.subr.mxu0 0.0
  %4384 = vmatpush1.msra.mxu0 0.0
  %4385 = vmatprep.subr.mxu0 0.0
  %4386 = vmatpush1.msra.mxu0 0.0
  %4387 = vmatprep.subr.mxu0 0.0
  %4388 = vmatpush1.msra.mxu0 0.0
  %4389 = vmatprep.subr.mxu0 0.0
  %4390 = vmatpush1.msra.mxu0 0.0
  %4391 = vmatprep.subr.mxu0 0.0
  %4392 = vmatpush1.msra.mxu0 0.0
  %4393 = vmatprep.subr.mxu0 0.0
  %4394 = vmatpush1.msra.mxu0 0.0
  %4395 = vmatprep.subr.mxu0 0.0
  %4396 = vmatpush1.msra.mxu0 0.0
  %4397 = vmatprep.subr.mxu0 0.0
  %4398 = vmatpush1.msra.mxu0 0.0
  %4399 = vmatprep.subr.mxu0 0.0
  %4400 = vmatpush1.msra.mxu0 0.0
  %4401 = vmatprep.subr.mxu0 0.0
  %4402 = vmatpush1.msra.mxu0 0.0
  %4403 = vmatprep.subr.mxu0 0.0
  %4404 = vmatpush1.msra.mxu0 0.0
  %4405 = vmatprep.subr.mxu0 0.0
  %4406 = vmatpush1.msra.mxu0 0.0
  %4407 = vmatprep.subr.mxu0 0.0
  %4408 = vmatpush1.msra.mxu0 0.0
  %4409 = vmatprep.subr.mxu0 0.0
  %4410 = vmatpush1.msra.mxu0 0.0
  %4411 = vmatprep.subr.mxu0 0.0
  %4412 = vmatpush1.msra.mxu0 0.0
  %4413 = vmatprep.subr.mxu0 0.0
  %4414 = vmatpush1.msra.mxu0 0.0
  %4415 = vmatprep.subr.mxu0 0.0
  %4416 = vmatpush1.msra.mxu0 0.0
  %4417 = vmatprep.mubr.f32.mxu0 0.0
  %4418 = vmatmul.mubr.f32.gmra.mrb[0].mxu0 %v205
  %v4419 = vpop.f32.mrb[0].mxu0
  %v4420 = vadd.f32 0.0, %v4419
  %v4421 = vpop.f32.mrb[0].mxu0
  %4422 = vdwg.mxu0
  %v4423 = vmul.f32 %v4420, 0.03125
  %v4424 = vlaneseq
  %v4425 = vshrl.u32 %v4424, 7
  %v4426 = vsub.s32 0, %v4425
  %v4427 = vrot.slane %v4423, %v4426
  %v4428 = vsub.f32 %v4349, %v4427
  %v4429 = vsub.f32 %v4350, %v4427
  %v4430 = vsub.f32 %v4351, %v4427
  %v4431 = vsub.f32 %v4352, %v4427
  %v4432 = vmul.f32 %v4428, %v4428
  %v4433 = vmul.f32 %v4429, %v4429
  %v4434 = vmul.f32 %v4430, %v4430
  %v4435 = vmul.f32 %v4431, %v4431
  %4436 = vmatprep.subr.mxu0 0.0
  %4437 = vmatpush1.msra.mxu0 %v4432
  %4438 = vmatprep.subr.mxu0 0.0
  %4439 = vmatpush1.msra.mxu0 %v4433
  %4440 = vmatprep.subr.mxu0 0.0
  %4441 = vmatpush1.msra.mxu0 %v4434
  %4442 = vmatprep.subr.mxu0 0.0
  %4443 = vmatpush1.msra.mxu0 %v4435
  %4444 = vmatprep.subr.mxu0 0.0
  %4445 = vmatpush1.msra.mxu0 0.0
  %4446 = vmatprep.subr.mxu0 0.0
  %4447 = vmatpush1.msra.mxu0 0.0
  %4448 = vmatprep.subr.mxu0 0.0
  %4449 = vmatpush1.msra.mxu0 0.0
  %4450 = vmatprep.subr.mxu0 0.0
  %4451 = vmatpush1.msra.mxu0 0.0
  %4452 = vmatprep.subr.mxu0 0.0
  %4453 = vmatpush1.msra.mxu0 0.0
  %4454 = vmatprep.subr.mxu0 0.0
  %4455 = vmatpush1.msra.mxu0 0.0
  %4456 = vmatprep.subr.mxu0 0.0
  %4457 = vmatpush1.msra.mxu0 0.0
  %4458 = vmatprep.subr.mxu0 0.0
  %4459 = vmatpush1.msra.mxu0 0.0
  %4460 = vmatprep.subr.mxu0 0.0
  %4461 = vmatpush1.msra.mxu0 0.0
  %4462 = vmatprep.subr.mxu0 0.0
  %4463 = vmatpush1.msra.mxu0 0.0
  %4464 = vmatprep.subr.mxu0 0.0
  %4465 = vmatpush1.msra.mxu0 0.0
  %4466 = vmatprep.subr.mxu0 0.0
  %4467 = vmatpush1.msra.mxu0 0.0
  %4468 = vmatprep.subr.mxu0 0.0
  %4469 = vmatpush1.msra.mxu0 0.0
  %4470 = vmatprep.subr.mxu0 0.0
  %4471 = vmatpush1.msra.mxu0 0.0
  %4472 = vmatprep.subr.mxu0 0.0
  %4473 = vmatpush1.msra.mxu0 0.0
  %4474 = vmatprep.subr.mxu0 0.0
  %4475 = vmatpush1.msra.mxu0 0.0
  %4476 = vmatprep.subr.mxu0 0.0
  %4477 = vmatpush1.msra.mxu0 0.0
  %4478 = vmatprep.subr.mxu0 0.0
  %4479 = vmatpush1.msra.mxu0 0.0
  %4480 = vmatprep.subr.mxu0 0.0
  %4481 = vmatpush1.msra.mxu0 0.0
  %4482 = vmatprep.subr.mxu0 0.0
  %4483 = vmatpush1.msra.mxu0 0.0
  %4484 = vmatprep.subr.mxu0 0.0
  %4485 = vmatpush1.msra.mxu0 0.0
  %4486 = vmatprep.subr.mxu0 0.0
  %4487 = vmatpush1.msra.mxu0 0.0
  %4488 = vmatprep.subr.mxu0 0.0
  %4489 = vmatpush1.msra.mxu0 0.0
  %4490 = vmatprep.subr.mxu0 0.0
  %4491 = vmatpush1.msra.mxu0 0.0
  %4492 = vmatprep.subr.mxu0 0.0
  %4493 = vmatpush1.msra.mxu0 0.0
  %4494 = vmatprep.subr.mxu0 0.0
  %4495 = vmatpush1.msra.mxu0 0.0
  %4496 = vmatprep.subr.mxu0 0.0
  %4497 = vmatpush1.msra.mxu0 0.0
  %4498 = vmatprep.subr.mxu0 0.0
  %4499 = vmatpush1.msra.mxu0 0.0
  %4500 = vmatprep.mubr.f32.mxu0 0.0
  %4501 = vmatmul.mubr.f32.gmra.mrb[0].mxu0 %v205
  %v4502 = vpop.f32.mrb[0].mxu0
  %v4503 = vadd.f32 0.0, %v4502
  %v4504 = vpop.f32.mrb[0].mxu0
  %4505 = vdwg.mxu0
  %v4506 = vmul.f32 %v4503, 0.03125
  %v4507 = vadd.f32 %v4506, 1e-05
  %v4508 = vrsqrt.pop %v4507
  %v4509 = vlaneseq
  %v4510 = vshrl.u32 %v4509, 7
  %v4511 = vsub.s32 0, %v4510
  %v4512 = vrot.slane %v4508, %v4511
  %v4513 = vmul.f32 %v4428, %v4512
  %v4514 = vmul.f32 %v4429, %v4512
  %v4515 = vmul.f32 %v4430, %v4512
  %v4516 = vmul.f32 %v4431, %v4512
  %v4518 = vlaneseq
  %v4519 = vshrl.u32 %v4518, 7
  %v4520 = vsub.s32 0, %v4519
  %v4521 = vrot.slane %v2586, %v4520
  %v4523 = vmul.f32 %v4513, %v4521
  %v4524 = vmul.f32 %v4514, %v4521
  %v4525 = vmul.f32 %v4515, %v4521
  %v4526 = vmul.f32 %v4516, %v4521
  %v4528 = vlaneseq
  %v4529 = vshrl.u32 %v4528, 7
  %v4530 = vsub.s32 0, %v4529
  %v4531 = vrot.slane %v2587, %v4530
  %v4533 = vadd.f32 %v4523, %v4531
  %v4534 = vadd.f32 %v4524, %v4531
  %v4535 = vadd.f32 %v4525, %v4531
  %v4536 = vadd.f32 %v4526, %v4531
  %v4537 = vpack.c.bf16 %v4534, %v4533
  %v4538 = vpack.c.bf16 %v4536, %v4535
  %v4539 = vpack.c.bf16 %v2589, %v2588
  %v4540 = vpack.c.bf16 %v2591, %v2590
  %v4541 = vpack.c.bf16 %v2593, %v2592
  %v4542 = vpack.c.bf16 %v2595, %v2594
  %v4544 = vlaneseq
  %v4545 = vshrl.u32 %v4544, 7
  %v4546 = vsub.s32 0, %v4545
  %v4547 = vrot.slane %v2596, %v4546
  %v4550 = vsel %vm2459, %v4537, 0
  %v4553 = vsel %vm2459, %v4538, 0
  %4555 = vmatprep.subr.bf16.mxu0 0
  %4556 = vmatpush1.bf16.msra.mxu0 %v4539
  %4557 = vmatprep.subr.bf16.mxu0 0
  %4558 = vmatpush1.bf16.msra.mxu0 %v4540
  %4559 = vmatprep.subr.bf16.mxu0 0
  %4560 = vmatpush1.bf16.msra.mxu0 %v4541
  %4561 = vmatprep.subr.bf16.mxu0 0
  %4562 = vmatpush1.bf16.msra.mxu0 %v4542
  %4563 = vmatprep.subr.bf16.mxu0 0
  %4564 = vmatpush1.bf16.msra.mxu0 0
  %4565 = vmatprep.subr.bf16.mxu0 0
  %4566 = vmatpush1.bf16.msra.mxu0 0
  %4567 = vmatprep.subr.bf16.mxu0 0
  %4568 = vmatpush1.bf16.msra.mxu0 0
  %4569 = vmatprep.subr.bf16.mxu0 0
  %4570 = vmatpush1.bf16.msra.mxu0 0
  %4571 = vmatprep.subr.bf16.mxu0 0
  %4572 = vmatpush1.bf16.msra.mxu0 0
  %4573 = vmatprep.subr.bf16.mxu0 0
  %4574 = vmatpush1.bf16.msra.mxu0 0
  %4575 = vmatprep.subr.bf16.mxu0 0
  %4576 = vmatpush1.bf16.msra.mxu0 0
  %4577 = vmatprep.subr.bf16.mxu0 0
  %4578 = vmatpush1.bf16.msra.mxu0 0
  %4579 = vmatprep.subr.bf16.mxu0 0
  %4580 = vmatpush1.bf16.msra.mxu0 0
  %4581 = vmatprep.subr.bf16.mxu0 0
  %4582 = vmatpush1.bf16.msra.mxu0 0
  %4583 = vmatprep.subr.bf16.mxu0 0
  %4584 = vmatpush1.bf16.msra.mxu0 0
  %4585 = vmatprep.subr.bf16.mxu0 0
  %4586 = vmatpush1.bf16.msra.mxu0 0
  %4587 = vmatprep.mubr.bf16.mxu0 0
  %4588 = vmatmul.mubr.bf16.gmra.mrb[0].mxu0 %v4550
  %v4589 = vpop.f32.mrb[0].mxu0
  %v4590 = vadd.f32 %v4547, %v4589
  %v4591 = vpop.f32.mrb[0].mxu0
  %v4592 = vpop.f32.mrb[0].mxu0
  %v4593 = vadd.f32 %v4547, %v4592
  %v4594 = vpop.f32.mrb[0].mxu0
  %4595 = vmatprep.mubr.bf16.mxu0 0
  %4596 = vmatmul.mubr.bf16.gmra.mrb[0].mxu0 %v4553
  %v4597 = vpop.f32.mrb[0].mxu0
  %v4598 = vadd.f32 %v4547, %v4597
  %v4599 = vpop.f32.mrb[0].mxu0
  %v4600 = vpop.f32.mrb[0].mxu0
  %v4601 = vadd.f32 %v4547, %v4600
  %v4602 = vpop.f32.mrb[0].mxu0
  %4603 = vdwg.mxu0
  %vm4604 = vcmp.gt.f32.partialorder %v4590, 0.0
  %vm4605 = vcmp.gt.f32.partialorder %v4593, 0.0
  %vm4606 = vcmp.gt.f32.partialorder %v4598, 0.0
  %vm4607 = vcmp.gt.f32.partialorder %v4601, 0.0
  %v4608 = vmin.f32 %v4590, 0.0
  %v4609 = vmin.f32 %v4593, 0.0
  %v4610 = vmin.f32 %v4598, 0.0
  %v4611 = vmin.f32 %v4601, 0.0
  %v4612 = vmul.f32 %v4608, 1.442695
  %v4613 = vpow.pop %v4612
  %v4614 = vmul.f32 %v4609, 1.442695
  %v4615 = vpow.pop %v4614
  %v4616 = vmul.f32 %v4610, 1.442695
  %v4617 = vpow.pop %v4616
  %v4618 = vmul.f32 %v4611, 1.442695
  %v4619 = vpow.pop %v4618
  %v4620 = vsub.f32 %v4613, 1.0
  %v4621 = vsub.f32 %v4615, 1.0
  %v4622 = vsub.f32 %v4617, 1.0
  %v4623 = vsub.f32 %v4619, 1.0
  %v4624 = vsel %vm4604, %v4590, %v4620
  %v4625 = vsel %vm4605, %v4593, %v4621
  %v4626 = vsel %vm4606, %v4598, %v4622
  %v4627 = vsel %vm4607, %v4601, %v4623
  %v4628 = vld [vmem:[%s81] sm:$0xff]
  %v4629 = vld [vmem:[%s81 + $0x8] sm:$0xff]
  %v4630 = vld [vmem:[%s81 + $0x10] sm:$0xff]
  %v4631 = vld [vmem:[%s81 + $0x18] sm:$0xff]
  %v4632 = vld [vmem:[%s83] sm:$0x1]
  %v4633 = vpack.c.bf16 %v2536, %v2535
  %v4634 = vpack.c.bf16 %v2538, %v2537
  %v4635 = vpack.c.bf16 %v4629, %v4628
  %vm4636 = vcmask 130048
  %v4638 = vsel %vm4636, %v4633, 0
  %v4641 = vsel %vm4636, %v4634, 0
  %4643 = vmatprep.subr.bf16.mxu0 0
  %4644 = vmatpush1.bf16.msra.mxu0 %v4635
  %4645 = vmatprep.subr.bf16.mxu0 0
  %4646 = vmatpush1.bf16.msra.mxu0 0
  %4647 = vmatprep.subr.bf16.mxu0 0
  %4648 = vmatpush1.bf16.msra.mxu0 0
  %4649 = vmatprep.subr.bf16.mxu0 0
  %4650 = vmatpush1.bf16.msra.mxu0 0
  %4651 = vmatprep.subr.bf16.mxu0 0
  %4652 = vmatpush1.bf16.msra.mxu0 0
  %4653 = vmatprep.subr.bf16.mxu0 0
  %4654 = vmatpush1.bf16.msra.mxu0 0
  %4655 = vmatprep.subr.bf16.mxu0 0
  %4656 = vmatpush1.bf16.msra.mxu0 0
  %4657 = vmatprep.subr.bf16.mxu0 0
  %4658 = vmatpush1.bf16.msra.mxu0 0
  %4659 = vmatprep.subr.bf16.mxu0 0
  %4660 = vmatpush1.bf16.msra.mxu0 0
  %4661 = vmatprep.subr.bf16.mxu0 0
  %4662 = vmatpush1.bf16.msra.mxu0 0
  %4663 = vmatprep.subr.bf16.mxu0 0
  %4664 = vmatpush1.bf16.msra.mxu0 0
  %4665 = vmatprep.subr.bf16.mxu0 0
  %4666 = vmatpush1.bf16.msra.mxu0 0
  %4667 = vmatprep.subr.bf16.mxu0 0
  %4668 = vmatpush1.bf16.msra.mxu0 0
  %4669 = vmatprep.subr.bf16.mxu0 0
  %4670 = vmatpush1.bf16.msra.mxu0 0
  %4671 = vmatprep.subr.bf16.mxu0 0
  %4672 = vmatpush1.bf16.msra.mxu0 0
  %4673 = vmatprep.subr.bf16.mxu0 0
  %4674 = vmatpush1.bf16.msra.mxu0 0
  %4675 = vmatprep.mubr.bf16.mxu0 0
  %4676 = vmatmul.mubr.bf16.gmra.mrb[0].mxu0 %v4638
  %v4677 = vpop.f32.mrb[0].mxu0
  %v4678 = vadd.f32 0.0, %v4677
  %v4679 = vpop.f32.mrb[0].mxu0
  %v4680 = vpop.f32.mrb[0].mxu0
  %v4681 = vadd.f32 0.0, %v4680
  %v4682 = vpop.f32.mrb[0].mxu0
  %4683 = vmatprep.mubr.bf16.mxu0 0
  %4684 = vmatmul.mubr.bf16.gmra.mrb[0].mxu0 %v4641
  %v4685 = vpop.f32.mrb[0].mxu0
  %v4686 = vadd.f32 0.0, %v4685
  %v4687 = vpop.f32.mrb[0].mxu0
  %v4688 = vpop.f32.mrb[0].mxu0
  %v4689 = vadd.f32 0.0, %v4688
  %v4690 = vpop.f32.mrb[0].mxu0
  %4691 = vdwg.mxu0
  %v4693 = vlaneseq
  %v4694 = vshrl.u32 %v4693, 7
  %v4695 = vsub.s32 0, %v4694
  %v4696 = vrot.slane %v4632, %v4695
  %v4698 = vadd.f32 %v4696, %v4678
  %v4699 = vadd.f32 %v4696, %v4681
  %v4700 = vadd.f32 %v4696, %v4686
  %v4701 = vadd.f32 %v4696, %v4689
  %v4702 = vpack.c.bf16 %v4625, %v4624
  %v4703 = vpack.c.bf16 %v4627, %v4626
  %v4704 = vpack.c.bf16 %v4631, %v4630
  %v4706 = vsel %vm4636, %v4702, 0
  %v4709 = vsel %vm4636, %v4703, 0
  %4711 = vmatprep.subr.bf16.mxu0 0
  %4712 = vmatpush1.bf16.msra.mxu0 %v4704
  %4713 = vmatprep.subr.bf16.mxu0 0
  %4714 = vmatpush1.bf16.msra.mxu0 0
  %4715 = vmatprep.subr.bf16.mxu0 0
  %4716 = vmatpush1.bf16.msra.mxu0 0
  %4717 = vmatprep.subr.bf16.mxu0 0
  %4718 = vmatpush1.bf16.msra.mxu0 0
  %4719 = vmatprep.subr.bf16.mxu0 0
  %4720 = vmatpush1.bf16.msra.mxu0 0
  %4721 = vmatprep.subr.bf16.mxu0 0
  %4722 = vmatpush1.bf16.msra.mxu0 0
  %4723 = vmatprep.subr.bf16.mxu0 0
  %4724 = vmatpush1.bf16.msra.mxu0 0
  %4725 = vmatprep.subr.bf16.mxu0 0
  %4726 = vmatpush1.bf16.msra.mxu0 0
  %4727 = vmatprep.subr.bf16.mxu0 0
  %4728 = vmatpush1.bf16.msra.mxu0 0
  %4729 = vmatprep.subr.bf16.mxu0 0
  %4730 = vmatpush1.bf16.msra.mxu0 0
  %4731 = vmatprep.subr.bf16.mxu0 0
  %4732 = vmatpush1.bf16.msra.mxu0 0
  %4733 = vmatprep.subr.bf16.mxu0 0
  %4734 = vmatpush1.bf16.msra.mxu0 0
  %4735 = vmatprep.subr.bf16.mxu0 0
  %4736 = vmatpush1.bf16.msra.mxu0 0
  %4737 = vmatprep.subr.bf16.mxu0 0
  %4738 = vmatpush1.bf16.msra.mxu0 0
  %4739 = vmatprep.subr.bf16.mxu0 0
  %4740 = vmatpush1.bf16.msra.mxu0 0
  %4741 = vmatprep.subr.bf16.mxu0 0
  %4742 = vmatpush1.bf16.msra.mxu0 0
  %4743 = vmatprep.mubr.bf16.mxu0 0
  %4744 = vmatmul.mubr.bf16.gmra.mrb[0].mxu0 %v4706
  %v4745 = vpop.f32.mrb[0].mxu0
  %v4746 = vadd.f32 0.0, %v4745
  %v4747 = vpop.f32.mrb[0].mxu0
  %v4748 = vpop.f32.mrb[0].mxu0
  %v4749 = vadd.f32 0.0, %v4748
  %v4750 = vpop.f32.mrb[0].mxu0
  %4751 = vmatprep.mubr.bf16.mxu0 0
  %4752 = vmatmul.mubr.bf16.gmra.mrb[0].mxu0 %v4709
  %v4753 = vpop.f32.mrb[0].mxu0
  %v4754 = vadd.f32 0.0, %v4753
  %v4755 = vpop.f32.mrb[0].mxu0
  %v4756 = vpop.f32.mrb[0].mxu0
  %v4757 = vadd.f32 0.0, %v4756
  %v4758 = vpop.f32.mrb[0].mxu0
  %4759 = vdwg.mxu0
  %v4760 = vadd.f32 %v4698, %v4746
  %v4761 = vadd.f32 %v4699, %v4749
  %v4762 = vadd.f32 %v4700, %v4754
  %v4763 = vadd.f32 %v4701, %v4757
  %vm4764 = vcmp.gt.f32.partialorder %v4760, 0.0
  %vm4765 = vcmp.gt.f32.partialorder %v4761, 0.0
  %vm4766 = vcmp.gt.f32.partialorder %v4762, 0.0
  %vm4767 = vcmp.gt.f32.partialorder %v4763, 0.0
  %v4768 = vmin.f32 %v4760, 0.0
  %v4769 = vmin.f32 %v4761, 0.0
  %v4770 = vmin.f32 %v4762, 0.0
  %v4771 = vmin.f32 %v4763, 0.0
  %v4772 = vmul.f32 %v4768, 1.442695
  %v4773 = vpow.pop %v4772
  %v4774 = vmul.f32 %v4769, 1.442695
  %v4775 = vpow.pop %v4774
  %v4776 = vmul.f32 %v4770, 1.442695
  %v4777 = vpow.pop %v4776
  %v4778 = vmul.f32 %v4771, 1.442695
  %v4779 = vpow.pop %v4778
  %v4780 = vsub.f32 %v4773, 1.0
  %v4781 = vsub.f32 %v4775, 1.0
  %v4782 = vsub.f32 %v4777, 1.0
  %v4783 = vsub.f32 %v4779, 1.0
  %v4784 = vsel %vm4764, %v4760, %v4780
  %v4785 = vsel %vm4765, %v4761, %v4781
  %v4786 = vsel %vm4766, %v4762, %v4782
  %v4787 = vsel %vm4767, %v4763, %v4783
  %v4788 = vld [vmem:[%s85] sm:$0xff]
  %v4789 = vld [vmem:[%s85 + $0x8] sm:$0xff]
  %v4790 = vld [vmem:[%s85 + $0x10] sm:$0xff]
  %v4791 = vld [vmem:[%s85 + $0x18] sm:$0xff]
  %v4792 = vpack.c.bf16 %v4785, %v4784
  %v4793 = vpack.c.bf16 %v4787, %v4786
  %v4794 = vpack.c.bf16 %v4789, %v4788
  %v4795 = vpack.c.bf16 %v4791, %v4790
  %v4796 = vld [vmem:[%s87] sm:$0x1]
  %v4798 = vlaneseq
  %v4799 = vshrl.u32 %v4798, 7
  %v4800 = vsub.s32 0, %v4799
  %v4801 = vrot.slane %v4796, %v4800
  %v4804 = vsel %vm203, %v4792, 0
  %v4807 = vsel %vm203, %v4793, 0
  %4809 = vmatprep.subr.bf16.mxu0 0
  %4810 = vmatpush1.bf16.msra.mxu0 %v4794
  %4811 = vmatprep.subr.bf16.mxu0 0
  %4812 = vmatpush1.bf16.msra.mxu0 %v4795
  %4813 = vmatprep.subr.bf16.mxu0 0
  %4814 = vmatpush1.bf16.msra.mxu0 0
  %4815 = vmatprep.subr.bf16.mxu0 0
  %4816 = vmatpush1.bf16.msra.mxu0 0
  %4817 = vmatprep.subr.bf16.mxu0 0
  %4818 = vmatpush1.bf16.msra.mxu0 0
  %4819 = vmatprep.subr.bf16.mxu0 0
  %4820 = vmatpush1.bf16.msra.mxu0 0
  %4821 = vmatprep.subr.bf16.mxu0 0
  %4822 = vmatpush1.bf16.msra.mxu0 0
  %4823 = vmatprep.subr.bf16.mxu0 0
  %4824 = vmatpush1.bf16.msra.mxu0 0
  %4825 = vmatprep.subr.bf16.mxu0 0
  %4826 = vmatpush1.bf16.msra.mxu0 0
  %4827 = vmatprep.subr.bf16.mxu0 0
  %4828 = vmatpush1.bf16.msra.mxu0 0
  %4829 = vmatprep.subr.bf16.mxu0 0
  %4830 = vmatpush1.bf16.msra.mxu0 0
  %4831 = vmatprep.subr.bf16.mxu0 0
  %4832 = vmatpush1.bf16.msra.mxu0 0
  %4833 = vmatprep.subr.bf16.mxu0 0
  %4834 = vmatpush1.bf16.msra.mxu0 0
  %4835 = vmatprep.subr.bf16.mxu0 0
  %4836 = vmatpush1.bf16.msra.mxu0 0
  %4837 = vmatprep.subr.bf16.mxu0 0
  %4838 = vmatpush1.bf16.msra.mxu0 0
  %4839 = vmatprep.subr.bf16.mxu0 0
  %4840 = vmatpush1.bf16.msra.mxu0 0
  %4841 = vmatprep.mubr.bf16.mxu0 0
  %4842 = vmatmul.mubr.bf16.gmra.mrb[0].mxu0 %v4804
  %v4843 = vpop.f32.mrb[0].mxu0
  %v4844 = vadd.f32 %v4801, %v4843
  %v4845 = vpop.f32.mrb[0].mxu0
  %v4846 = vpop.f32.mrb[0].mxu0
  %v4847 = vadd.f32 %v4801, %v4846
  %v4848 = vpop.f32.mrb[0].mxu0
  %4849 = vmatprep.mubr.bf16.mxu0 0
  %4850 = vmatmul.mubr.bf16.gmra.mrb[0].mxu0 %v4807
  %v4851 = vpop.f32.mrb[0].mxu0
  %v4852 = vadd.f32 %v4801, %v4851
  %v4853 = vpop.f32.mrb[0].mxu0
  %v4854 = vpop.f32.mrb[0].mxu0
  %v4855 = vadd.f32 %v4801, %v4854
  %v4856 = vpop.f32.mrb[0].mxu0
  %4857 = vdwg.mxu0
  %v4858 = vsub.f32 0.0, %v4844
  %v4859 = vsub.f32 0.0, %v4847
  %v4860 = vsub.f32 0.0, %v4852
  %v4861 = vsub.f32 0.0, %v4855
  %v4862 = vmul.f32 %v4858, 1.442695
  %v4863 = vpow.pop %v4862
  %v4864 = vmul.f32 %v4859, 1.442695
  %v4865 = vpow.pop %v4864
  %v4866 = vmul.f32 %v4860, 1.442695
  %v4867 = vpow.pop %v4866
  %v4868 = vmul.f32 %v4861, 1.442695
  %v4869 = vpow.pop %v4868
  %v4870 = vadd.f32 %v4863, 1.0
  %v4871 = vadd.f32 %v4865, 1.0
  %v4872 = vadd.f32 %v4867, 1.0
  %v4873 = vadd.f32 %v4869, 1.0
  %v4874 = vrcp.pop %v4870
  %v4875 = vmul.f32 1.0, %v4874
  %v4876 = vrcp.pop %v4871
  %v4877 = vmul.f32 1.0, %v4876
  %v4878 = vrcp.pop %v4872
  %v4879 = vmul.f32 1.0, %v4878
  %v4880 = vrcp.pop %v4873
  %v4881 = vmul.f32 1.0, %v4880
  %vm4882 = vcmp.eq.s32.totalorder %v1502, 0
  %vm4883 = vcmp.eq.s32.totalorder %v1502, 9
  %vm4884 = vmor %vm4882, %vm4883
  %v4885 = vsel %vm4884, %v4875, %v4844
  %v4886 = vsel %vm4884, %v4877, %v4847
  %v4887 = vsel %vm4884, %v4879, %v4852
  %v4888 = vsel %vm4884, %v4881, %v4855
  %4889 = vst [vmem:[%s89] sm:$0xff] %v4885
  %4890 = vst [vmem:[%s89 + $0x8] sm:$0xff] %v4886
  %4891 = vst [vmem:[%s89 + $0x10] sm:$0xff] %v4887
  %4892 = vst [vmem:[%s89 + $0x18] sm:$0xff] %v4888
  // Predicated region
  $region178: #{cdcnet_forward.1} parent=0 // pred_check
    _
  $region179: #{cdcnet_forward.1} parent=0 // pred_check_branch
    %4894 = sbr.rel (0) target = $region181
  $region180: #{cdcnet_forward.1} parent=0 // pred_region
    _
  $region181: #{cdcnet_forward.1} parent=0 // pred_fallthru
    _
  // Predicated region
  $region182: #{cdcnet_forward.1} parent=0 // pred_check
    _
  $region183: #{cdcnet_forward.1} parent=0 // pred_check_branch
    %4896 = sbr.rel (0) target = $region185
  $region184: #{cdcnet_forward.1} parent=0 // pred_region
    _
  $region185: #{cdcnet_forward.1} parent=0 // pred_fallthru
    _

</llo_original>
